<compile_context>
chip_gen: v7x
topology: tpu7x:2x2x1
jax: 0.10.0
libtpu: 0.0.40
codegen_flags: <defaults>
</compile_context>

<pallas_src>
import functools

import jax
import jax.numpy as jnp
from jax.experimental import pallas as pl
from jax.experimental.pallas import tpu as pltpu

EPS = 1e-5  # torch.nn.LayerNorm default


def _layernorm(x, gamma, beta):
    mu = jnp.mean(x, axis=-1, keepdims=True)
    var = jnp.mean((x - mu) ** 2, axis=-1, keepdims=True)
    return (x - mu) * jax.lax.rsqrt(var + EPS) * gamma + beta


# ---------------------------------------------------------------------------
# Fused per-batch kernel:
#   LN1 -> QKV (one matmul) -> per-head causal attention -> out-proj + residual
#   -> LN2 -> MLP -> residual
# ---------------------------------------------------------------------------
def block_kernel(x_ref, g1_ref, b1_ref, wqkv_ref, wp_ref, bp_ref,
                 g2_ref, b2_ref, w1_ref, fb1_ref, w2_ref, fb2_ref,
                 o_ref, *, n_head):
    x = x_ref[0]                                           # (T, C) f32
    T, C = x.shape
    hs = C // n_head

    # --- LN1 (computed once, not per head) ---
    xn = _layernorm(x, g1_ref[0], b1_ref[0])               # f32

    # --- fused QKV projection: one big MXU matmul, bf16 operands, f32 acc ---
    qkv = jnp.dot(xn.astype(jnp.bfloat16), wqkv_ref[...],
                  preferred_element_type=jnp.float32)      # (T, 3C)

    scale = hs ** -0.5
    row = jax.lax.broadcasted_iota(jnp.int32, (T, T), 0)
    col = jax.lax.broadcasted_iota(jnp.int32, (T, T), 1)
    causal = col <= row                                    # tril mask

    head_outs = []
    for h in range(n_head):                                # static unroll
        q = qkv[:, h * hs:(h + 1) * hs]                    # (T, hs)
        k = qkv[:, C + h * hs:C + (h + 1) * hs]
        v = qkv[:, 2 * C + h * hs:2 * C + (h + 1) * hs]

        # q @ k^T without an explicit transpose: contract last axes.
        s = jax.lax.dot_general(
            q.astype(jnp.bfloat16), k.astype(jnp.bfloat16),
            dimension_numbers=(((1,), (1,)), ((), ())),
            preferred_element_type=jnp.float32) * scale    # (T, T) f32

        # Causal mask (diagonal always unmasked -> no all -inf rows / NaNs).
        s = jnp.where(causal, s, -jnp.inf)
        s = s - jnp.max(s, axis=-1, keepdims=True)
        p = jnp.exp(s)
        inv = pl.reciprocal(jnp.sum(p, axis=-1, keepdims=True), approx=True)
        p = p * inv
        # attention-weight dropout is identity in eval mode

        head_outs.append(
            jnp.dot(p.astype(jnp.bfloat16), v.astype(jnp.bfloat16),
                    preferred_element_type=jnp.float32))   # (T, hs)

    attn = jnp.concatenate(head_outs, axis=-1)             # (T, C), lane-dense

    # --- multi-head output projection + residual ---
    sa = jnp.dot(attn.astype(jnp.bfloat16), wp_ref[...],
                 preferred_element_type=jnp.float32) + bp_ref[0]
    x1 = x + sa                                            # x = x + sa(ln1(x))

    # --- LN2 -> FeedForward -> residual ---
    xn2 = _layernorm(x1, g2_ref[0], b2_ref[0])
    hmid = jnp.dot(xn2.astype(jnp.bfloat16), w1_ref[...],
                   preferred_element_type=jnp.float32) + fb1_ref[0]
    hmid = jnp.maximum(hmid, 0.0)                          # ReLU
    ff = jnp.dot(hmid.astype(jnp.bfloat16), w2_ref[...],
                 preferred_element_type=jnp.float32) + fb2_ref[0]
    # FFN dropout is identity in eval mode

    o_ref[0] = x1 + ff                                     # x = x + ffwd(ln2(x))


# ---------------------------------------------------------------------------
# Wrapper
# ---------------------------------------------------------------------------
def block_forward(x, params):
    B, T, C = x.shape
    H, _, hs = params["wq"].shape
    assert H * hs == C

    # Pack per-head QKV weights into one (C, 3C) matrix [Q_all | K_all | V_all],
    # cast all matmul weights to bf16 (halves weight DMA; f32 accumulation in
    # the kernel keeps accuracy).
    wq_all = jnp.transpose(params["wq"], (1, 0, 2)).reshape(C, H * hs)
    wk_all = jnp.transpose(params["wk"], (1, 0, 2)).reshape(C, H * hs)
    wv_all = jnp.transpose(params["wv"], (1, 0, 2)).reshape(C, H * hs)
    wqkv = jnp.concatenate([wq_all, wk_all, wv_all], axis=1).astype(jnp.bfloat16)
    wp = params["wp"].astype(jnp.bfloat16)
    w1 = params["w1"].astype(jnp.bfloat16)
    w2 = params["w2"].astype(jnp.bfloat16)

    kernel = functools.partial(block_kernel, n_head=H)

    out = pl.pallas_call(
        kernel,
        out_shape=jax.ShapeDtypeStruct((B, T, C), jnp.float32),
        grid=(B,),
        in_specs=[
            pl.BlockSpec((1, T, C), lambda b: (b, 0, 0)),     # x
            pl.BlockSpec((1, C), lambda b: (0, 0)),           # g1
            pl.BlockSpec((1, C), lambda b: (0, 0)),           # b1
            pl.BlockSpec((C, 3 * C), lambda b: (0, 0)),       # wqkv (bf16)
            pl.BlockSpec((C, C), lambda b: (0, 0)),           # wp   (bf16)
            pl.BlockSpec((1, C), lambda b: (0, 0)),           # bp
            pl.BlockSpec((1, C), lambda b: (0, 0)),           # g2
            pl.BlockSpec((1, C), lambda b: (0, 0)),           # b2
            pl.BlockSpec((C, 4 * C), lambda b: (0, 0)),       # w1   (bf16)
            pl.BlockSpec((1, 4 * C), lambda b: (0, 0)),       # fb1
            pl.BlockSpec((4 * C, C), lambda b: (0, 0)),       # w2   (bf16)
            pl.BlockSpec((1, C), lambda b: (0, 0)),           # fb2
        ],
        out_specs=pl.BlockSpec((1, T, C), lambda b: (b, 0, 0)),
        compiler_params=pltpu.CompilerParams(
            dimension_semantics=("parallel",)),
    )(x, params["g1"], params["b1"], wqkv, wp, params["bp"],
      params["g2"], params["b2"], w1, params["fb1"], w2, params["fb2"])
    return out


# ---------------------------------------------------------------------------
# Plain-JAX f32 reference (for correctness check)
# ---------------------------------------------------------------------------
def block_reference(x, params):
    def ln(z, g, b):
        mu = z.mean(-1, keepdims=True)
        var = ((z - mu) ** 2).mean(-1, keepdims=True)
        return (z - mu) / jnp.sqrt(var + EPS) * g + b

    B, T, C = x.shape
    H, _, hs = params["wq"].shape
    xn = ln(x, params["g1"][0], params["b1"][0])
    outs = []
    mask = jnp.tril(jnp.ones((T, T), bool))
    for h in range(H):
        q = xn @ params["wq"][h]
        k = xn @ params["wk"][h]
        v = xn @ params["wv"][h]
        s = (q @ jnp.swapaxes(k, -1, -2)) * (hs ** -0.5)
        s = jnp.where(mask, s, -jnp.inf)
        p = jax.nn.softmax(s, axis=-1)
        outs.append(p @ v)
    cat = jnp.concatenate(outs, axis=-1)
    x1 = x + cat @ params["wp"] + params["bp"][0]
    xn2 = ln(x1, params["g2"][0], params["b2"][0])
    h1 = jax.nn.relu(xn2 @ params["w1"] + params["fb1"][0])
    return x1 + h1 @ params["w2"] + params["fb2"][0]


if __name__ == "__main__":
    # Small shapes consistent with the module (scaled-down n_embd / block_size).
    B, T = 2, 128
    n_embd, n_head = 128, 4
    C, hs = n_embd, n_embd // n_head

    key = jax.random.PRNGKey(0)
    ks = jax.random.split(key, 10)

    def init(k, shape, fan_in):
        bound = 1.0 / jnp.sqrt(fan_in)
        return jax.random.uniform(k, shape, jnp.float32, -bound, bound)

    params = {
        # LayerNorm params (PyTorch init: ones / zeros)
        "g1": jnp.ones((1, C), jnp.float32),
        "b1": jnp.zeros((1, C), jnp.float32),
        "g2": jnp.ones((1, C), jnp.float32),
        "b2": jnp.zeros((1, C), jnp.float32),
        # per-head QKV (no bias, as in Head)
        "wq": init(ks[0], (n_head, C, hs), C),
        "wk": init(ks[1], (n_head, C, hs), C),
        "wv": init(ks[2], (n_head, C, hs), C),
        # multi-head output projection
        "wp": init(ks[3], (C, C), C),
        "bp": init(ks[4], (1, C), C),
        # FeedForward: Linear(C, 4C) -> ReLU -> Linear(4C, C)
        "w1": init(ks[5], (C, 4 * C), C),
        "fb1": init(ks[6], (1, 4 * C), C),
        "w2": init(ks[7], (4 * C, C), 4 * C),
        "fb2": init(ks[8], (1, C), 4 * C),
    }

    x = jax.random.normal(ks[9], (B, T, C), jnp.float32)

    out = jax.block_until_ready(block_forward(x, params))
    ref = jax.block_until_ready(block_reference(x, params))

    assert out.shape == (B, T, C) and out.dtype == jnp.float32
    # Tolerance accounts for bf16 MXU operands (f32 accumulation) vs f32 ref.
    assert jnp.allclose(out, ref, atol=3e-2, rtol=3e-2), (
        float(jnp.max(jnp.abs(out - ref))))
    print("KERNEL_OK")
</pallas_src>

<mosaic_0001>
module attributes {stable_mosaic.version = 11 : i64} {
  func.func @block_kernel(%arg0: i32, %arg1: memref<1x128x128xf32, #tpu.memory_space<vmem>>, %arg2: memref<1x128xf32, #tpu.memory_space<vmem>>, %arg3: memref<1x128xf32, #tpu.memory_space<vmem>>, %arg4: memref<128x384xbf16, #tpu.memory_space<vmem>>, %arg5: memref<128x128xbf16, #tpu.memory_space<vmem>>, %arg6: memref<1x128xf32, #tpu.memory_space<vmem>>, %arg7: memref<1x128xf32, #tpu.memory_space<vmem>>, %arg8: memref<1x128xf32, #tpu.memory_space<vmem>>, %arg9: memref<128x512xbf16, #tpu.memory_space<vmem>>, %arg10: memref<1x512xf32, #tpu.memory_space<vmem>>, %arg11: memref<512x128xbf16, #tpu.memory_space<vmem>>, %arg12: memref<1x128xf32, #tpu.memory_space<vmem>>, %arg13: memref<1x128x128xf32, #tpu.memory_space<vmem>>) attributes {dimension_semantics = [#tpu.dimension_semantics<parallel>], iteration_bounds = array<i64: 2>, scalar_prefetch = 0 : i64, scratch_operands = 0 : i64, tpu.core_type = #tpu.core_type<tc>, window_params = [{transform_indices = @transform_0, window_bounds = array<i64: 1, 128, 128>}, {pipeline_mode = #tpu.pipeline_mode<synchronous>, transform_indices = @transform_1, window_bounds = array<i64: 1, 128>}, {pipeline_mode = #tpu.pipeline_mode<synchronous>, transform_indices = @transform_2, window_bounds = array<i64: 1, 128>}, {pipeline_mode = #tpu.pipeline_mode<synchronous>, transform_indices = @transform_3, window_bounds = array<i64: 128, 384>}, {pipeline_mode = #tpu.pipeline_mode<synchronous>, transform_indices = @transform_4, window_bounds = array<i64: 128, 128>}, {pipeline_mode = #tpu.pipeline_mode<synchronous>, transform_indices = @transform_5, window_bounds = array<i64: 1, 128>}, {pipeline_mode = #tpu.pipeline_mode<synchronous>, transform_indices = @transform_6, window_bounds = array<i64: 1, 128>}, {pipeline_mode = #tpu.pipeline_mode<synchronous>, transform_indices = @transform_7, window_bounds = array<i64: 1, 128>}, {pipeline_mode = #tpu.pipeline_mode<synchronous>, transform_indices = @transform_8, window_bounds = array<i64: 128, 512>}, {pipeline_mode = #tpu.pipeline_mode<synchronous>, transform_indices = @transform_9, window_bounds = array<i64: 1, 512>}, {pipeline_mode = #tpu.pipeline_mode<synchronous>, transform_indices = @transform_10, window_bounds = array<i64: 512, 128>}, {pipeline_mode = #tpu.pipeline_mode<synchronous>, transform_indices = @transform_11, window_bounds = array<i64: 1, 128>}, {transform_indices = @transform_12, window_bounds = array<i64: 1, 128, 128>}]} {
    %c0 = arith.constant 0 : index
    %c0_0 = arith.constant 0 : index
    %c0_1 = arith.constant 0 : index
    %0 = vector.load %arg1[%c0, %c0_0, %c0_1] : memref<1x128x128xf32, #tpu.memory_space<vmem>>, vector<1x128x128xf32>
    %1 = vector.shape_cast %0 : vector<1x128x128xf32> to vector<128x128xf32>
    %c0_2 = arith.constant 0 : index
    %c0_3 = arith.constant 0 : index
    %2 = vector.load %arg2[%c0_2, %c0_3] : memref<1x128xf32, #tpu.memory_space<vmem>>, vector<1x128xf32>
    %3 = vector.shape_cast %2 : vector<1x128xf32> to vector<128xf32>
    %c0_4 = arith.constant 0 : index
    %c0_5 = arith.constant 0 : index
    %4 = vector.load %arg3[%c0_4, %c0_5] : memref<1x128xf32, #tpu.memory_space<vmem>>, vector<1x128xf32>
    %5 = vector.shape_cast %4 : vector<1x128xf32> to vector<128xf32>
    %cst = arith.constant dense<0.000000e+00> : vector<128xf32>
    %6 = vector.multi_reduction <add>, %1, %cst [1] : vector<128x128xf32> to vector<128xf32>
    %7 = vector.shape_cast %6 : vector<128xf32> to vector<128x1xf32>
    %cst_6 = arith.constant 1.280000e+02 : f32
    %8 = vector.broadcast %cst_6 : f32 to vector<128x1xf32>
    %9 = arith.divf %7, %8 : vector<128x1xf32>
    %10 = vector.broadcast %9 : vector<128x1xf32> to vector<128x128xf32>
    %11 = arith.subf %1, %10 : vector<128x128xf32>
    %12 = arith.mulf %11, %11 : vector<128x128xf32>
    %cst_7 = arith.constant dense<0.000000e+00> : vector<128xf32>
    %13 = vector.multi_reduction <add>, %12, %cst_7 [1] : vector<128x128xf32> to vector<128xf32>
    %14 = vector.shape_cast %13 : vector<128xf32> to vector<128x1xf32>
    %cst_8 = arith.constant 1.280000e+02 : f32
    %15 = vector.broadcast %cst_8 : f32 to vector<128x1xf32>
    %16 = arith.divf %14, %15 : vector<128x1xf32>
    %17 = vector.broadcast %9 : vector<128x1xf32> to vector<128x128xf32>
    %18 = arith.subf %1, %17 : vector<128x128xf32>
    %cst_9 = arith.constant 9.99999974E-6 : f32
    %19 = vector.broadcast %cst_9 : f32 to vector<128x1xf32>
    %20 = arith.addf %16, %19 : vector<128x1xf32>
    %21 = math.rsqrt %20 : vector<128x1xf32>
    %22 = vector.broadcast %21 : vector<128x1xf32> to vector<128x128xf32>
    %23 = arith.mulf %18, %22 : vector<128x128xf32>
    %24 = vector.shape_cast %3 : vector<128xf32> to vector<1x128xf32>
    %25 = vector.broadcast %24 : vector<1x128xf32> to vector<128x128xf32>
    %26 = arith.mulf %23, %25 : vector<128x128xf32>
    %27 = vector.shape_cast %5 : vector<128xf32> to vector<1x128xf32>
    %28 = vector.broadcast %27 : vector<1x128xf32> to vector<128x128xf32>
    %29 = arith.addf %26, %28 : vector<128x128xf32>
    %30 = arith.truncf %29 : vector<128x128xf32> to vector<128x128xbf16>
    %c0_10 = arith.constant 0 : index
    %c0_11 = arith.constant 0 : index
    %31 = vector.load %arg4[%c0_10, %c0_11] : memref<128x384xbf16, #tpu.memory_space<vmem>>, vector<128x384xbf16>
    %cst_12 = arith.constant dense<0.000000e+00> : vector<128x384xf32>
    %32 = tpu.matmul %30, %31, %cst_12 {dimension_numbers = #tpu.dot_dimension_numbers<[1], [0], [0], [1], [0, 0, 1, 1], [], []>} : vector<128x128xbf16>, vector<128x384xbf16>, vector<128x384xf32> -> vector<128x384xf32>
    %33 = tpu.iota {dimensions = array<i32: 0>} : vector<128x128xi32>
    %34 = tpu.iota {dimensions = array<i32: 1>} : vector<128x128xi32>
    %35 = arith.cmpi sle, %34, %33 : vector<128x128xi32>
    %36 = vector.extract_strided_slice %32 {offsets = [0, 0], sizes = [128, 32], strides = [1, 1]} : vector<128x384xf32> to vector<128x32xf32>
    %37 = vector.extract_strided_slice %32 {offsets = [0, 128], sizes = [128, 32], strides = [1, 1]} : vector<128x384xf32> to vector<128x32xf32>
    %38 = vector.extract_strided_slice %32 {offsets = [0, 256], sizes = [128, 32], strides = [1, 1]} : vector<128x384xf32> to vector<128x32xf32>
    %39 = arith.truncf %36 : vector<128x32xf32> to vector<128x32xbf16>
    %40 = arith.truncf %37 : vector<128x32xf32> to vector<128x32xbf16>
    %cst_13 = arith.constant dense<0.000000e+00> : vector<128x128xf32>
    %41 = tpu.matmul %39, %40, %cst_13 {dimension_numbers = #tpu.dot_dimension_numbers<[1], [1], [0], [0], [0, 0, 1, 0], [], []>} : vector<128x32xbf16>, vector<128x32xbf16>, vector<128x128xf32> -> vector<128x128xf32>
    %cst_14 = arith.constant 0.176776692 : f32
    %42 = vector.broadcast %cst_14 : f32 to vector<128x128xf32>
    %43 = arith.mulf %41, %42 : vector<128x128xf32>
    %cst_15 = arith.constant 0xFF800000 : f32
    %44 = vector.broadcast %cst_15 : f32 to vector<128x128xf32>
    %45 = arith.select %35, %43, %44 : vector<128x128xi1>, vector<128x128xf32>
    %cst_16 = arith.constant dense<0xFF800000> : vector<128xf32>
    %46 = vector.multi_reduction <maximumf>, %45, %cst_16 [1] : vector<128x128xf32> to vector<128xf32>
    %47 = vector.shape_cast %46 : vector<128xf32> to vector<128x1xf32>
    %48 = vector.broadcast %47 : vector<128x1xf32> to vector<128x128xf32>
    %49 = arith.subf %45, %48 : vector<128x128xf32>
    %50 = math.exp %49 : vector<128x128xf32>
    %cst_17 = arith.constant dense<0.000000e+00> : vector<128xf32>
    %51 = vector.multi_reduction <add>, %50, %cst_17 [1] : vector<128x128xf32> to vector<128xf32>
    %52 = vector.shape_cast %51 : vector<128xf32> to vector<128x1xf32>
    %53 = tpu.reciprocal %52 {approx = true} : vector<128x1xf32> -> vector<128x1xf32>
    %54 = vector.broadcast %53 : vector<128x1xf32> to vector<128x128xf32>
    %55 = arith.mulf %50, %54 : vector<128x128xf32>
    %56 = arith.truncf %55 : vector<128x128xf32> to vector<128x128xbf16>
    %57 = arith.truncf %38 : vector<128x32xf32> to vector<128x32xbf16>
    %cst_18 = arith.constant dense<0.000000e+00> : vector<128x32xf32>
    %58 = tpu.matmul %56, %57, %cst_18 {dimension_numbers = #tpu.dot_dimension_numbers<[1], [0], [0], [1], [0, 0, 1, 1], [], []>} : vector<128x128xbf16>, vector<128x32xbf16>, vector<128x32xf32> -> vector<128x32xf32>
    %59 = vector.extract_strided_slice %32 {offsets = [0, 32], sizes = [128, 32], strides = [1, 1]} : vector<128x384xf32> to vector<128x32xf32>
    %60 = vector.extract_strided_slice %32 {offsets = [0, 160], sizes = [128, 32], strides = [1, 1]} : vector<128x384xf32> to vector<128x32xf32>
    %61 = vector.extract_strided_slice %32 {offsets = [0, 288], sizes = [128, 32], strides = [1, 1]} : vector<128x384xf32> to vector<128x32xf32>
    %62 = arith.truncf %59 : vector<128x32xf32> to vector<128x32xbf16>
    %63 = arith.truncf %60 : vector<128x32xf32> to vector<128x32xbf16>
    %cst_19 = arith.constant dense<0.000000e+00> : vector<128x128xf32>
    %64 = tpu.matmul %62, %63, %cst_19 {dimension_numbers = #tpu.dot_dimension_numbers<[1], [1], [0], [0], [0, 0, 1, 0], [], []>} : vector<128x32xbf16>, vector<128x32xbf16>, vector<128x128xf32> -> vector<128x128xf32>
    %cst_20 = arith.constant 0.176776692 : f32
    %65 = vector.broadcast %cst_20 : f32 to vector<128x128xf32>
    %66 = arith.mulf %64, %65 : vector<128x128xf32>
    %cst_21 = arith.constant 0xFF800000 : f32
    %67 = vector.broadcast %cst_21 : f32 to vector<128x128xf32>
    %68 = arith.select %35, %66, %67 : vector<128x128xi1>, vector<128x128xf32>
    %cst_22 = arith.constant dense<0xFF800000> : vector<128xf32>
    %69 = vector.multi_reduction <maximumf>, %68, %cst_22 [1] : vector<128x128xf32> to vector<128xf32>
    %70 = vector.shape_cast %69 : vector<128xf32> to vector<128x1xf32>
    %71 = vector.broadcast %70 : vector<128x1xf32> to vector<128x128xf32>
    %72 = arith.subf %68, %71 : vector<128x128xf32>
    %73 = math.exp %72 : vector<128x128xf32>
    %cst_23 = arith.constant dense<0.000000e+00> : vector<128xf32>
    %74 = vector.multi_reduction <add>, %73, %cst_23 [1] : vector<128x128xf32> to vector<128xf32>
    %75 = vector.shape_cast %74 : vector<128xf32> to vector<128x1xf32>
    %76 = tpu.reciprocal %75 {approx = true} : vector<128x1xf32> -> vector<128x1xf32>
    %77 = vector.broadcast %76 : vector<128x1xf32> to vector<128x128xf32>
    %78 = arith.mulf %73, %77 : vector<128x128xf32>
    %79 = arith.truncf %78 : vector<128x128xf32> to vector<128x128xbf16>
    %80 = arith.truncf %61 : vector<128x32xf32> to vector<128x32xbf16>
    %cst_24 = arith.constant dense<0.000000e+00> : vector<128x32xf32>
    %81 = tpu.matmul %79, %80, %cst_24 {dimension_numbers = #tpu.dot_dimension_numbers<[1], [0], [0], [1], [0, 0, 1, 1], [], []>} : vector<128x128xbf16>, vector<128x32xbf16>, vector<128x32xf32> -> vector<128x32xf32>
    %82 = vector.extract_strided_slice %32 {offsets = [0, 64], sizes = [128, 32], strides = [1, 1]} : vector<128x384xf32> to vector<128x32xf32>
    %83 = vector.extract_strided_slice %32 {offsets = [0, 192], sizes = [128, 32], strides = [1, 1]} : vector<128x384xf32> to vector<128x32xf32>
    %84 = vector.extract_strided_slice %32 {offsets = [0, 320], sizes = [128, 32], strides = [1, 1]} : vector<128x384xf32> to vector<128x32xf32>
    %85 = arith.truncf %82 : vector<128x32xf32> to vector<128x32xbf16>
    %86 = arith.truncf %83 : vector<128x32xf32> to vector<128x32xbf16>
    %cst_25 = arith.constant dense<0.000000e+00> : vector<128x128xf32>
    %87 = tpu.matmul %85, %86, %cst_25 {dimension_numbers = #tpu.dot_dimension_numbers<[1], [1], [0], [0], [0, 0, 1, 0], [], []>} : vector<128x32xbf16>, vector<128x32xbf16>, vector<128x128xf32> -> vector<128x128xf32>
    %cst_26 = arith.constant 0.176776692 : f32
    %88 = vector.broadcast %cst_26 : f32 to vector<128x128xf32>
    %89 = arith.mulf %87, %88 : vector<128x128xf32>
    %cst_27 = arith.constant 0xFF800000 : f32
    %90 = vector.broadcast %cst_27 : f32 to vector<128x128xf32>
    %91 = arith.select %35, %89, %90 : vector<128x128xi1>, vector<128x128xf32>
    %cst_28 = arith.constant dense<0xFF800000> : vector<128xf32>
    %92 = vector.multi_reduction <maximumf>, %91, %cst_28 [1] : vector<128x128xf32> to vector<128xf32>
    %93 = vector.shape_cast %92 : vector<128xf32> to vector<128x1xf32>
    %94 = vector.broadcast %93 : vector<128x1xf32> to vector<128x128xf32>
    %95 = arith.subf %91, %94 : vector<128x128xf32>
    %96 = math.exp %95 : vector<128x128xf32>
    %cst_29 = arith.constant dense<0.000000e+00> : vector<128xf32>
    %97 = vector.multi_reduction <add>, %96, %cst_29 [1] : vector<128x128xf32> to vector<128xf32>
    %98 = vector.shape_cast %97 : vector<128xf32> to vector<128x1xf32>
    %99 = tpu.reciprocal %98 {approx = true} : vector<128x1xf32> -> vector<128x1xf32>
    %100 = vector.broadcast %99 : vector<128x1xf32> to vector<128x128xf32>
    %101 = arith.mulf %96, %100 : vector<128x128xf32>
    %102 = arith.truncf %101 : vector<128x128xf32> to vector<128x128xbf16>
    %103 = arith.truncf %84 : vector<128x32xf32> to vector<128x32xbf16>
    %cst_30 = arith.constant dense<0.000000e+00> : vector<128x32xf32>
    %104 = tpu.matmul %102, %103, %cst_30 {dimension_numbers = #tpu.dot_dimension_numbers<[1], [0], [0], [1], [0, 0, 1, 1], [], []>} : vector<128x128xbf16>, vector<128x32xbf16>, vector<128x32xf32> -> vector<128x32xf32>
    %105 = vector.extract_strided_slice %32 {offsets = [0, 96], sizes = [128, 32], strides = [1, 1]} : vector<128x384xf32> to vector<128x32xf32>
    %106 = vector.extract_strided_slice %32 {offsets = [0, 224], sizes = [128, 32], strides = [1, 1]} : vector<128x384xf32> to vector<128x32xf32>
    %107 = vector.extract_strided_slice %32 {offsets = [0, 352], sizes = [128, 32], strides = [1, 1]} : vector<128x384xf32> to vector<128x32xf32>
    %108 = arith.truncf %105 : vector<128x32xf32> to vector<128x32xbf16>
    %109 = arith.truncf %106 : vector<128x32xf32> to vector<128x32xbf16>
    %cst_31 = arith.constant dense<0.000000e+00> : vector<128x128xf32>
    %110 = tpu.matmul %108, %109, %cst_31 {dimension_numbers = #tpu.dot_dimension_numbers<[1], [1], [0], [0], [0, 0, 1, 0], [], []>} : vector<128x32xbf16>, vector<128x32xbf16>, vector<128x128xf32> -> vector<128x128xf32>
    %cst_32 = arith.constant 0.176776692 : f32
    %111 = vector.broadcast %cst_32 : f32 to vector<128x128xf32>
    %112 = arith.mulf %110, %111 : vector<128x128xf32>
    %cst_33 = arith.constant 0xFF800000 : f32
    %113 = vector.broadcast %cst_33 : f32 to vector<128x128xf32>
    %114 = arith.select %35, %112, %113 : vector<128x128xi1>, vector<128x128xf32>
    %cst_34 = arith.constant dense<0xFF800000> : vector<128xf32>
    %115 = vector.multi_reduction <maximumf>, %114, %cst_34 [1] : vector<128x128xf32> to vector<128xf32>
    %116 = vector.shape_cast %115 : vector<128xf32> to vector<128x1xf32>
    %117 = vector.broadcast %116 : vector<128x1xf32> to vector<128x128xf32>
    %118 = arith.subf %114, %117 : vector<128x128xf32>
    %119 = math.exp %118 : vector<128x128xf32>
    %cst_35 = arith.constant dense<0.000000e+00> : vector<128xf32>
    %120 = vector.multi_reduction <add>, %119, %cst_35 [1] : vector<128x128xf32> to vector<128xf32>
    %121 = vector.shape_cast %120 : vector<128xf32> to vector<128x1xf32>
    %122 = tpu.reciprocal %121 {approx = true} : vector<128x1xf32> -> vector<128x1xf32>
    %123 = vector.broadcast %122 : vector<128x1xf32> to vector<128x128xf32>
    %124 = arith.mulf %119, %123 : vector<128x128xf32>
    %125 = arith.truncf %124 : vector<128x128xf32> to vector<128x128xbf16>
    %126 = arith.truncf %107 : vector<128x32xf32> to vector<128x32xbf16>
    %cst_36 = arith.constant dense<0.000000e+00> : vector<128x32xf32>
    %127 = tpu.matmul %125, %126, %cst_36 {dimension_numbers = #tpu.dot_dimension_numbers<[1], [0], [0], [1], [0, 0, 1, 1], [], []>} : vector<128x128xbf16>, vector<128x32xbf16>, vector<128x32xf32> -> vector<128x32xf32>
    %128 = tpu.concatenate %58, %81, %104, %127 in 1 : vector<128x32xf32>, vector<128x32xf32>, vector<128x32xf32>, vector<128x32xf32> -> vector<128x128xf32>
    %129 = arith.truncf %128 : vector<128x128xf32> to vector<128x128xbf16>
    %c0_37 = arith.constant 0 : index
    %c0_38 = arith.constant 0 : index
    %130 = vector.load %arg5[%c0_37, %c0_38] : memref<128x128xbf16, #tpu.memory_space<vmem>>, vector<128x128xbf16>
    %cst_39 = arith.constant dense<0.000000e+00> : vector<128x128xf32>
    %131 = tpu.matmul %129, %130, %cst_39 {dimension_numbers = #tpu.dot_dimension_numbers<[1], [0], [0], [1], [0, 0, 1, 1], [], []>} : vector<128x128xbf16>, vector<128x128xbf16>, vector<128x128xf32> -> vector<128x128xf32>
    %c0_40 = arith.constant 0 : index
    %c0_41 = arith.constant 0 : index
    %132 = vector.load %arg6[%c0_40, %c0_41] : memref<1x128xf32, #tpu.memory_space<vmem>>, vector<1x128xf32>
    %133 = vector.shape_cast %132 : vector<1x128xf32> to vector<128xf32>
    %134 = vector.shape_cast %133 : vector<128xf32> to vector<1x128xf32>
    %135 = vector.broadcast %134 : vector<1x128xf32> to vector<128x128xf32>
    %136 = arith.addf %131, %135 : vector<128x128xf32>
    %137 = arith.addf %1, %136 : vector<128x128xf32>
    %c0_42 = arith.constant 0 : index
    %c0_43 = arith.constant 0 : index
    %138 = vector.load %arg7[%c0_42, %c0_43] : memref<1x128xf32, #tpu.memory_space<vmem>>, vector<1x128xf32>
    %139 = vector.shape_cast %138 : vector<1x128xf32> to vector<128xf32>
    %c0_44 = arith.constant 0 : index
    %c0_45 = arith.constant 0 : index
    %140 = vector.load %arg8[%c0_44, %c0_45] : memref<1x128xf32, #tpu.memory_space<vmem>>, vector<1x128xf32>
    %141 = vector.shape_cast %140 : vector<1x128xf32> to vector<128xf32>
    %cst_46 = arith.constant dense<0.000000e+00> : vector<128xf32>
    %142 = vector.multi_reduction <add>, %137, %cst_46 [1] : vector<128x128xf32> to vector<128xf32>
    %143 = vector.shape_cast %142 : vector<128xf32> to vector<128x1xf32>
    %cst_47 = arith.constant 1.280000e+02 : f32
    %144 = vector.broadcast %cst_47 : f32 to vector<128x1xf32>
    %145 = arith.divf %143, %144 : vector<128x1xf32>
    %146 = vector.broadcast %145 : vector<128x1xf32> to vector<128x128xf32>
    %147 = arith.subf %137, %146 : vector<128x128xf32>
    %148 = arith.mulf %147, %147 : vector<128x128xf32>
    %cst_48 = arith.constant dense<0.000000e+00> : vector<128xf32>
    %149 = vector.multi_reduction <add>, %148, %cst_48 [1] : vector<128x128xf32> to vector<128xf32>
    %150 = vector.shape_cast %149 : vector<128xf32> to vector<128x1xf32>
    %cst_49 = arith.constant 1.280000e+02 : f32
    %151 = vector.broadcast %cst_49 : f32 to vector<128x1xf32>
    %152 = arith.divf %150, %151 : vector<128x1xf32>
    %153 = vector.broadcast %145 : vector<128x1xf32> to vector<128x128xf32>
    %154 = arith.subf %137, %153 : vector<128x128xf32>
    %cst_50 = arith.constant 9.99999974E-6 : f32
    %155 = vector.broadcast %cst_50 : f32 to vector<128x1xf32>
    %156 = arith.addf %152, %155 : vector<128x1xf32>
    %157 = math.rsqrt %156 : vector<128x1xf32>
    %158 = vector.broadcast %157 : vector<128x1xf32> to vector<128x128xf32>
    %159 = arith.mulf %154, %158 : vector<128x128xf32>
    %160 = vector.shape_cast %139 : vector<128xf32> to vector<1x128xf32>
    %161 = vector.broadcast %160 : vector<1x128xf32> to vector<128x128xf32>
    %162 = arith.mulf %159, %161 : vector<128x128xf32>
    %163 = vector.shape_cast %141 : vector<128xf32> to vector<1x128xf32>
    %164 = vector.broadcast %163 : vector<1x128xf32> to vector<128x128xf32>
    %165 = arith.addf %162, %164 : vector<128x128xf32>
    %166 = arith.truncf %165 : vector<128x128xf32> to vector<128x128xbf16>
    %c0_51 = arith.constant 0 : index
    %c0_52 = arith.constant 0 : index
    %167 = vector.load %arg9[%c0_51, %c0_52] : memref<128x512xbf16, #tpu.memory_space<vmem>>, vector<128x512xbf16>
    %cst_53 = arith.constant dense<0.000000e+00> : vector<128x512xf32>
    %168 = tpu.matmul %166, %167, %cst_53 {dimension_numbers = #tpu.dot_dimension_numbers<[1], [0], [0], [1], [0, 0, 1, 1], [], []>} : vector<128x128xbf16>, vector<128x512xbf16>, vector<128x512xf32> -> vector<128x512xf32>
    %c0_54 = arith.constant 0 : index
    %c0_55 = arith.constant 0 : index
    %169 = vector.load %arg10[%c0_54, %c0_55] : memref<1x512xf32, #tpu.memory_space<vmem>>, vector<1x512xf32>
    %170 = vector.shape_cast %169 : vector<1x512xf32> to vector<512xf32>
    %171 = vector.shape_cast %170 : vector<512xf32> to vector<1x512xf32>
    %172 = vector.broadcast %171 : vector<1x512xf32> to vector<128x512xf32>
    %173 = arith.addf %168, %172 : vector<128x512xf32>
    %cst_56 = arith.constant 0.000000e+00 : f32
    %174 = vector.broadcast %cst_56 : f32 to vector<128x512xf32>
    %175 = arith.maximumf %173, %174 : vector<128x512xf32>
    %176 = arith.truncf %175 : vector<128x512xf32> to vector<128x512xbf16>
    %c0_57 = arith.constant 0 : index
    %c0_58 = arith.constant 0 : index
    %177 = vector.load %arg11[%c0_57, %c0_58] : memref<512x128xbf16, #tpu.memory_space<vmem>>, vector<512x128xbf16>
    %cst_59 = arith.constant dense<0.000000e+00> : vector<128x128xf32>
    %178 = tpu.matmul %176, %177, %cst_59 {dimension_numbers = #tpu.dot_dimension_numbers<[1], [0], [0], [1], [0, 0, 1, 1], [], []>} : vector<128x512xbf16>, vector<512x128xbf16>, vector<128x128xf32> -> vector<128x128xf32>
    %c0_60 = arith.constant 0 : index
    %c0_61 = arith.constant 0 : index
    %179 = vector.load %arg12[%c0_60, %c0_61] : memref<1x128xf32, #tpu.memory_space<vmem>>, vector<1x128xf32>
    %180 = vector.shape_cast %179 : vector<1x128xf32> to vector<128xf32>
    %181 = vector.shape_cast %180 : vector<128xf32> to vector<1x128xf32>
    %182 = vector.broadcast %181 : vector<1x128xf32> to vector<128x128xf32>
    %183 = arith.addf %178, %182 : vector<128x128xf32>
    %184 = arith.addf %137, %183 : vector<128x128xf32>
    %c0_62 = arith.constant 0 : index
    %c0_63 = arith.constant 0 : index
    %c0_64 = arith.constant 0 : index
    %185 = vector.load %arg13[%c0_62, %c0_63, %c0_64] : memref<1x128x128xf32, #tpu.memory_space<vmem>>, vector<1x128x128xf32>
    %186 = vector.shape_cast %185 : vector<1x128x128xf32> to vector<128x128xf32>
    %187 = vector.shape_cast %184 : vector<128x128xf32> to vector<1x128x128xf32>
    tpu.vector_store %arg13[%c0_62, %c0_63, %c0_64], %187 {strides = array<i32>} : memref<1x128x128xf32, #tpu.memory_space<vmem>>, vector<1x128x128xf32>,
    return
  }
  func.func @transform_0(%arg0: i32) -> (i32, i32, i32) {
    %c0_i32 = arith.constant 0 : i32
    %c0_i32_0 = arith.constant 0 : i32
    %c0_i32_1 = arith.constant 0 : i32
    return %arg0, %c0_i32, %c0_i32_0 : i32, i32, i32
  }
  func.func @transform_1(%arg0: i32) -> (i32, i32) {
    %c0_i32 = arith.constant 0 : i32
    %c0_i32_0 = arith.constant 0 : i32
    %c0_i32_1 = arith.constant 0 : i32
    return %c0_i32, %c0_i32_0 : i32, i32
  }
  func.func @transform_2(%arg0: i32) -> (i32, i32) {
    %c0_i32 = arith.constant 0 : i32
    %c0_i32_0 = arith.constant 0 : i32
    %c0_i32_1 = arith.constant 0 : i32
    return %c0_i32, %c0_i32_0 : i32, i32
  }
  func.func @transform_3(%arg0: i32) -> (i32, i32) {
    %c0_i32 = arith.constant 0 : i32
    %c0_i32_0 = arith.constant 0 : i32
    %c0_i32_1 = arith.constant 0 : i32
    return %c0_i32, %c0_i32_0 : i32, i32
  }
  func.func @transform_4(%arg0: i32) -> (i32, i32) {
    %c0_i32 = arith.constant 0 : i32
    %c0_i32_0 = arith.constant 0 : i32
    %c0_i32_1 = arith.constant 0 : i32
    return %c0_i32, %c0_i32_0 : i32, i32
  }
  func.func @transform_5(%arg0: i32) -> (i32, i32) {
    %c0_i32 = arith.constant 0 : i32
    %c0_i32_0 = arith.constant 0 : i32
    %c0_i32_1 = arith.constant 0 : i32
    return %c0_i32, %c0_i32_0 : i32, i32
  }
  func.func @transform_6(%arg0: i32) -> (i32, i32) {
    %c0_i32 = arith.constant 0 : i32
    %c0_i32_0 = arith.constant 0 : i32
    %c0_i32_1 = arith.constant 0 : i32
    return %c0_i32, %c0_i32_0 : i32, i32
  }
  func.func @transform_7(%arg0: i32) -> (i32, i32) {
    %c0_i32 = arith.constant 0 : i32
    %c0_i32_0 = arith.constant 0 : i32
    %c0_i32_1 = arith.constant 0 : i32
    return %c0_i32, %c0_i32_0 : i32, i32
  }
  func.func @transform_8(%arg0: i32) -> (i32, i32) {
    %c0_i32 = arith.constant 0 : i32
    %c0_i32_0 = arith.constant 0 : i32
    %c0_i32_1 = arith.constant 0 : i32
    return %c0_i32, %c0_i32_0 : i32, i32
  }
  func.func @transform_9(%arg0: i32) -> (i32, i32) {
    %c0_i32 = arith.constant 0 : i32
    %c0_i32_0 = arith.constant 0 : i32
    %c0_i32_1 = arith.constant 0 : i32
    return %c0_i32, %c0_i32_0 : i32, i32
  }
  func.func @transform_10(%arg0: i32) -> (i32, i32) {
    %c0_i32 = arith.constant 0 : i32
    %c0_i32_0 = arith.constant 0 : i32
    %c0_i32_1 = arith.constant 0 : i32
    return %c0_i32, %c0_i32_0 : i32, i32
  }
  func.func @transform_11(%arg0: i32) -> (i32, i32) {
    %c0_i32 = arith.constant 0 : i32
    %c0_i32_0 = arith.constant 0 : i32
    %c0_i32_1 = arith.constant 0 : i32
    return %c0_i32, %c0_i32_0 : i32, i32
  }
  func.func @transform_12(%arg0: i32) -> (i32, i32, i32) {
    %c0_i32 = arith.constant 0 : i32
    %c0_i32_0 = arith.constant 0 : i32
    %c0_i32_1 = arith.constant 0 : i32
    return %arg0, %c0_i32, %c0_i32_0 : i32, i32, i32
  }
}

</mosaic_0001>

<llo_original>
// kernel: tpu_custom_call.1
$region0: #{tpu_custom_call.1}
  #allocation0 [shape = 'u32[]', space=smem, size = 0x4, offset = 0x4, fixed_abs, tag = 'smem constant byte address 0x4 - core index']
  #allocation1 [shape = 'u32[144,128]{1,0:T(1,128)}', space=vmem, size = 0x12000, scoped, tag = 'internal scratch']
  %s0 = inlined_call_operand.hbm [shape: f32[2,128,128], index: 0, kind: input, shape index: {}]
  %s1 = inlined_call_operand.vmem [shape: f32[1,128], index: 1, kind: input, shape index: {}]
  %s2 = inlined_call_operand.vmem [shape: f32[1,128], index: 2, kind: input, shape index: {}]
  %s3 = inlined_call_operand.hbm [shape: bf16[128,384], index: 3, kind: input, shape index: {}]
  %s4 = inlined_call_operand.hbm [shape: bf16[128,128], index: 4, kind: input, shape index: {}]
  %s5 = inlined_call_operand.vmem [shape: f32[1,128], index: 5, kind: input, shape index: {}]
  %s6 = inlined_call_operand.vmem [shape: f32[1,128], index: 6, kind: input, shape index: {}]
  %s7 = inlined_call_operand.vmem [shape: f32[1,128], index: 7, kind: input, shape index: {}]
  %s8 = inlined_call_operand.hbm [shape: bf16[128,512], index: 8, kind: input, shape index: {}]
  %s9 = inlined_call_operand.vmem [shape: f32[1,512], index: 9, kind: input, shape index: {}]
  %s10 = inlined_call_operand.hbm [shape: bf16[512,128], index: 10, kind: input, shape index: {}]
  %s11 = inlined_call_operand.vmem [shape: f32[1,128], index: 11, kind: input, shape index: {}]
  %s12 = inlined_call_operand.hbm [shape: f32[2,128,128], index: 12, kind: output, shape index: {}]
  %s13 = sld [smem:[#allocation0]]
  $region101: #{tpu_custom_call.1} parent=0
    _
  %s15 = ssub.s32 1, %s13
  %s16 = scalar_select 0, %s15, %s13
  $region1: #{tpu_custom_call.1} parent=0
    #allocation2 [shape = 'u8[131072]{0}', space=vmem, size = 0x20000, scoped, tag = 'input window, operand 0']
    #allocation3 [shape = 's32[2]{0}', space=sflag, size = 0x8, scoped, tag = 'scoped memory for tpu_custom_call.1']
    #allocation4 [shape = 's32[2]{0}', space=sflag, size = 0x8, scoped, tag = 'scoped memory for tpu_custom_call.1']
    #allocation5 [shape = 'u8[98304]{0}', space=vmem, size = 0x18000, scoped, tag = 'input window, operand 3, single buffered']
    #allocation6 [shape = 's32[1]{0}', space=sflag, size = 0x4, scoped, tag = 'scoped memory for tpu_custom_call.1']
    #allocation7 [shape = 'u8[32768]{0}', space=vmem, size = 0x8000, scoped, tag = 'input window, operand 4, single buffered']
    #allocation8 [shape = 'u8[131072]{0}', space=vmem, size = 0x20000, scoped, tag = 'input window, operand 8, single buffered']
    #allocation9 [shape = 's32[1]{0}', space=sflag, size = 0x4, scoped, tag = 'scoped memory for tpu_custom_call.1']
    #allocation10 [shape = 'u8[131072]{0}', space=vmem, size = 0x20000, scoped, tag = 'input window, operand 10, single buffered']
    #allocation11 [shape = 'u8[131072]{0}', space=vmem, size = 0x20000, scoped, tag = 'output window, operand 0']
    %17 = vsyncpa [#allocation3], 0
    %s18 = scalar_lea.sflag [#allocation3], 1
    %19 = vsyncpa %s18, 0
    %20 = vsyncpa [#allocation6], 0
    %21 = vsyncpa [#allocation9], 0
    %22 = vsyncpa [#allocation4], 0
    %s23 = scalar_lea.sflag [#allocation4], 1
    %24 = vsyncpa %s23, 0
    loop: start=0, step=1, limit=4
    $region2: #{tpu_custom_call.1} parent=1 // loop_pre_header
      _
    $region3: #{tpu_custom_call.1} parent=1 // loop_header
      %s26 = sphi 0, %s30
      %p27 = scmp.ge.s32.totalorder %s26, 4
      %s36 = sphi 0, %s38
      %s39 = sphi 0, %s36
      %s40 = sphi 0, %s39
      %s56 = sphi 0, %s40
      %s60 = sphi 0, %s60
      %s62 = sphi 0, %s60
      %s63 = sphi 0, %s62
      %s77 = sphi 0, %s63
      %s81 = sphi 0, %s81
      %s83 = sphi 0, %s81
      %s84 = sphi 0, %s83
      %s98 = sphi 0, %s84
      %s102 = sphi 0, %s102
      %s104 = sphi 0, %s102
      %s105 = sphi 0, %s104
      %s119 = sphi 0, %s105
      %s123 = sphi 0, %s123
      %s125 = sphi 0, %s123
      %s126 = sphi 0, %s125
      %s140 = sphi 0, %s126
      %s144 = sphi 0, %s144
      %s146 = sphi 0, %s144
      %s147 = sphi 0, %s146
      %s161 = sphi 0, %s147
      %s165 = sphi 0, %s165
      %s167 = sphi 0, %s165
      %s168 = sphi 0, %s167
      %s182 = sphi 0, %s168
      %s186 = sphi 0, %s186
      %s188 = sphi 0, %s186
      %s189 = sphi 0, %s188
      %s203 = sphi 0, %s189
      %s207 = sphi 0, %s207
      %s209 = sphi 0, %s207
      %s210 = sphi 0, %s209
      %s224 = sphi 0, %s210
      %s228 = sphi 0, %s228
      %s230 = sphi 0, %s228
      %s231 = sphi 0, %s230
      %s245 = sphi 0, %s231
      %s249 = sphi 0, %s249
      %s251 = sphi 0, %s249
      %s252 = sphi 0, %s251
      %s266 = sphi 0, %s252
      %s270 = sphi 0, %s270
      %s272 = sphi 0, %s270
      %s273 = sphi 0, %s272
      %s287 = sphi 0, %s273
      %s293 = sphi 0, %s295
      %s296 = sphi 0, %s293
      %s297 = sphi 0, %s296
      %s313 = sphi 0, %s297
    $region4: #{tpu_custom_call.1} parent=1 // loop_header_branch
      %29 = sbr.rel (%p27) target = $region8
    $region5: #{tpu_custom_call.1} parent=1 // loop_body
      %s31 = ssub.s32 %s26, 1
      %s32 = ssub.s32 %s26, 2
      %s33 = sadd.s32 %s26, 1
      %s34 = ssub.s32 %s26, %s33
      %p35 = scmp.eq.s32.totalorder %s34, 0
      %s37 = sadd.s32 %s36, 1
      %s38 = scalar_select %p35, %s36, %s37
      %p41 = pneg %p35
      %p42 = scmp.eq.s32.totalorder %s26, 1
      %p43 = por %p41, %p42
      %p44 = scmp.ne.s32.totalorder %s36, %s39
      %p45 = scmp.eq.s32.totalorder %s26, 0
      %p46 = por %p44, %p45
      %p47 = scmp.ne.s32.totalorder %s36, %s39
      %p48 = scmp.eq.s32.totalorder %s31, 1
      %p49 = por %p47, %p48
      %p50 = scmp.ne.s32.totalorder %s39, %s40
      %p51 = scmp.eq.s32.totalorder %s31, 0
      %p52 = por %p50, %p51
      %p53 = scmp.ne.s32.totalorder %s39, %s40
      %p54 = scmp.eq.s32.totalorder %s32, 1
      %p55 = por %p53, %p54
      %p57 = scmp.ne.s32.totalorder %s40, %s56
      %p58 = scmp.eq.s32.totalorder %s32, 0
      %p59 = por %p57, %p58
      %s61 = sadd.s32 %s60, 1
      %p64 = scmp.eq.s32.totalorder %s26, 1
      %p65 = scmp.ne.s32.totalorder %s60, %s62
      %p66 = scmp.eq.s32.totalorder %s26, 0
      %p67 = por %p65, %p66
      %p68 = scmp.ne.s32.totalorder %s60, %s62
      %p69 = scmp.eq.s32.totalorder %s31, 1
      %p70 = por %p68, %p69
      %p71 = scmp.ne.s32.totalorder %s62, %s63
      %p72 = scmp.eq.s32.totalorder %s31, 0
      %p73 = por %p71, %p72
      %p74 = scmp.ne.s32.totalorder %s62, %s63
      %p75 = scmp.eq.s32.totalorder %s32, 1
      %p76 = por %p74, %p75
      %p78 = scmp.ne.s32.totalorder %s63, %s77
      %p79 = scmp.eq.s32.totalorder %s32, 0
      %p80 = por %p78, %p79
      %s82 = sadd.s32 %s81, 1
      %p85 = scmp.eq.s32.totalorder %s26, 1
      %p86 = scmp.ne.s32.totalorder %s81, %s83
      %p87 = scmp.eq.s32.totalorder %s26, 0
      %p88 = por %p86, %p87
      %p89 = scmp.ne.s32.totalorder %s81, %s83
      %p90 = scmp.eq.s32.totalorder %s31, 1
      %p91 = por %p89, %p90
      %p92 = scmp.ne.s32.totalorder %s83, %s84
      %p93 = scmp.eq.s32.totalorder %s31, 0
      %p94 = por %p92, %p93
      %p95 = scmp.ne.s32.totalorder %s83, %s84
      %p96 = scmp.eq.s32.totalorder %s32, 1
      %p97 = por %p95, %p96
      %p99 = scmp.ne.s32.totalorder %s84, %s98
      %p100 = scmp.eq.s32.totalorder %s32, 0
      %p101 = por %p99, %p100
      %s103 = sadd.s32 %s102, 1
      %p106 = scmp.eq.s32.totalorder %s26, 1
      %p107 = scmp.ne.s32.totalorder %s102, %s104
      %p108 = scmp.eq.s32.totalorder %s26, 0
      %p109 = por %p107, %p108
      %p110 = scmp.ne.s32.totalorder %s102, %s104
      %p111 = scmp.eq.s32.totalorder %s31, 1
      %p112 = por %p110, %p111
      %p113 = scmp.ne.s32.totalorder %s104, %s105
      %p114 = scmp.eq.s32.totalorder %s31, 0
      %p115 = por %p113, %p114
      %p116 = scmp.ne.s32.totalorder %s104, %s105
      %p117 = scmp.eq.s32.totalorder %s32, 1
      %p118 = por %p116, %p117
      %p120 = scmp.ne.s32.totalorder %s105, %s119
      %p121 = scmp.eq.s32.totalorder %s32, 0
      %p122 = por %p120, %p121
      %s124 = sadd.s32 %s123, 1
      %p127 = scmp.eq.s32.totalorder %s26, 1
      %p128 = scmp.ne.s32.totalorder %s123, %s125
      %p129 = scmp.eq.s32.totalorder %s26, 0
      %p130 = por %p128, %p129
      %p131 = scmp.ne.s32.totalorder %s123, %s125
      %p132 = scmp.eq.s32.totalorder %s31, 1
      %p133 = por %p131, %p132
      %p134 = scmp.ne.s32.totalorder %s125, %s126
      %p135 = scmp.eq.s32.totalorder %s31, 0
      %p136 = por %p134, %p135
      %p137 = scmp.ne.s32.totalorder %s125, %s126
      %p138 = scmp.eq.s32.totalorder %s32, 1
      %p139 = por %p137, %p138
      %p141 = scmp.ne.s32.totalorder %s126, %s140
      %p142 = scmp.eq.s32.totalorder %s32, 0
      %p143 = por %p141, %p142
      %s145 = sadd.s32 %s144, 1
      %p148 = scmp.eq.s32.totalorder %s26, 1
      %p149 = scmp.ne.s32.totalorder %s144, %s146
      %p150 = scmp.eq.s32.totalorder %s26, 0
      %p151 = por %p149, %p150
      %p152 = scmp.ne.s32.totalorder %s144, %s146
      %p153 = scmp.eq.s32.totalorder %s31, 1
      %p154 = por %p152, %p153
      %p155 = scmp.ne.s32.totalorder %s146, %s147
      %p156 = scmp.eq.s32.totalorder %s31, 0
      %p157 = por %p155, %p156
      %p158 = scmp.ne.s32.totalorder %s146, %s147
      %p159 = scmp.eq.s32.totalorder %s32, 1
      %p160 = por %p158, %p159
      %p162 = scmp.ne.s32.totalorder %s147, %s161
      %p163 = scmp.eq.s32.totalorder %s32, 0
      %p164 = por %p162, %p163
      %s166 = sadd.s32 %s165, 1
      %p169 = scmp.eq.s32.totalorder %s26, 1
      %p170 = scmp.ne.s32.totalorder %s165, %s167
      %p171 = scmp.eq.s32.totalorder %s26, 0
      %p172 = por %p170, %p171
      %p173 = scmp.ne.s32.totalorder %s165, %s167
      %p174 = scmp.eq.s32.totalorder %s31, 1
      %p175 = por %p173, %p174
      %p176 = scmp.ne.s32.totalorder %s167, %s168
      %p177 = scmp.eq.s32.totalorder %s31, 0
      %p178 = por %p176, %p177
      %p179 = scmp.ne.s32.totalorder %s167, %s168
      %p180 = scmp.eq.s32.totalorder %s32, 1
      %p181 = por %p179, %p180
      %p183 = scmp.ne.s32.totalorder %s168, %s182
      %p184 = scmp.eq.s32.totalorder %s32, 0
      %p185 = por %p183, %p184
      %s187 = sadd.s32 %s186, 1
      %p190 = scmp.eq.s32.totalorder %s26, 1
      %p191 = scmp.ne.s32.totalorder %s186, %s188
      %p192 = scmp.eq.s32.totalorder %s26, 0
      %p193 = por %p191, %p192
      %p194 = scmp.ne.s32.totalorder %s186, %s188
      %p195 = scmp.eq.s32.totalorder %s31, 1
      %p196 = por %p194, %p195
      %p197 = scmp.ne.s32.totalorder %s188, %s189
      %p198 = scmp.eq.s32.totalorder %s31, 0
      %p199 = por %p197, %p198
      %p200 = scmp.ne.s32.totalorder %s188, %s189
      %p201 = scmp.eq.s32.totalorder %s32, 1
      %p202 = por %p200, %p201
      %p204 = scmp.ne.s32.totalorder %s189, %s203
      %p205 = scmp.eq.s32.totalorder %s32, 0
      %p206 = por %p204, %p205
      %s208 = sadd.s32 %s207, 1
      %p211 = scmp.eq.s32.totalorder %s26, 1
      %p212 = scmp.ne.s32.totalorder %s207, %s209
      %p213 = scmp.eq.s32.totalorder %s26, 0
      %p214 = por %p212, %p213
      %p215 = scmp.ne.s32.totalorder %s207, %s209
      %p216 = scmp.eq.s32.totalorder %s31, 1
      %p217 = por %p215, %p216
      %p218 = scmp.ne.s32.totalorder %s209, %s210
      %p219 = scmp.eq.s32.totalorder %s31, 0
      %p220 = por %p218, %p219
      %p221 = scmp.ne.s32.totalorder %s209, %s210
      %p222 = scmp.eq.s32.totalorder %s32, 1
      %p223 = por %p221, %p222
      %p225 = scmp.ne.s32.totalorder %s210, %s224
      %p226 = scmp.eq.s32.totalorder %s32, 0
      %p227 = por %p225, %p226
      %s229 = sadd.s32 %s228, 1
      %p232 = scmp.eq.s32.totalorder %s26, 1
      %p233 = scmp.ne.s32.totalorder %s228, %s230
      %p234 = scmp.eq.s32.totalorder %s26, 0
      %p235 = por %p233, %p234
      %p236 = scmp.ne.s32.totalorder %s228, %s230
      %p237 = scmp.eq.s32.totalorder %s31, 1
      %p238 = por %p236, %p237
      %p239 = scmp.ne.s32.totalorder %s230, %s231
      %p240 = scmp.eq.s32.totalorder %s31, 0
      %p241 = por %p239, %p240
      %p242 = scmp.ne.s32.totalorder %s230, %s231
      %p243 = scmp.eq.s32.totalorder %s32, 1
      %p244 = por %p242, %p243
      %p246 = scmp.ne.s32.totalorder %s231, %s245
      %p247 = scmp.eq.s32.totalorder %s32, 0
      %p248 = por %p246, %p247
      %s250 = sadd.s32 %s249, 1
      %p253 = scmp.eq.s32.totalorder %s26, 1
      %p254 = scmp.ne.s32.totalorder %s249, %s251
      %p255 = scmp.eq.s32.totalorder %s26, 0
      %p256 = por %p254, %p255
      %p257 = scmp.ne.s32.totalorder %s249, %s251
      %p258 = scmp.eq.s32.totalorder %s31, 1
      %p259 = por %p257, %p258
      %p260 = scmp.ne.s32.totalorder %s251, %s252
      %p261 = scmp.eq.s32.totalorder %s31, 0
      %p262 = por %p260, %p261
      %p263 = scmp.ne.s32.totalorder %s251, %s252
      %p264 = scmp.eq.s32.totalorder %s32, 1
      %p265 = por %p263, %p264
      %p267 = scmp.ne.s32.totalorder %s252, %s266
      %p268 = scmp.eq.s32.totalorder %s32, 0
      %p269 = por %p267, %p268
      %s271 = sadd.s32 %s270, 1
      %p274 = scmp.eq.s32.totalorder %s26, 1
      %p275 = scmp.ne.s32.totalorder %s270, %s272
      %p276 = scmp.eq.s32.totalorder %s26, 0
      %p277 = por %p275, %p276
      %p278 = scmp.ne.s32.totalorder %s270, %s272
      %p279 = scmp.eq.s32.totalorder %s31, 1
      %p280 = por %p278, %p279
      %p281 = scmp.ne.s32.totalorder %s272, %s273
      %p282 = scmp.eq.s32.totalorder %s31, 0
      %p283 = por %p281, %p282
      %p284 = scmp.ne.s32.totalorder %s272, %s273
      %p285 = scmp.eq.s32.totalorder %s32, 1
      %p286 = por %p284, %p285
      %p288 = scmp.ne.s32.totalorder %s273, %s287
      %p289 = scmp.eq.s32.totalorder %s32, 0
      %p290 = por %p288, %p289
      %s291 = ssub.s32 %s26, %s33
      %p292 = scmp.eq.s32.totalorder %s291, 0
      %s294 = sadd.s32 %s293, 1
      %s295 = scalar_select %p292, %s293, %s294
      %p298 = pneg %p292
      %p299 = scmp.eq.s32.totalorder %s26, 1
      %p300 = por %p298, %p299
      %p301 = scmp.ne.s32.totalorder %s293, %s296
      %p302 = scmp.eq.s32.totalorder %s26, 0
      %p303 = por %p301, %p302
      %p304 = scmp.ne.s32.totalorder %s293, %s296
      %p305 = scmp.eq.s32.totalorder %s31, 1
      %p306 = por %p304, %p305
      %p307 = scmp.ne.s32.totalorder %s296, %s297
      %p308 = scmp.eq.s32.totalorder %s31, 0
      %p309 = por %p307, %p308
      %p310 = scmp.ne.s32.totalorder %s296, %s297
      %p311 = scmp.eq.s32.totalorder %s32, 1
      %p312 = por %p310, %p311
      %p314 = scmp.ne.s32.totalorder %s297, %s313
      %p315 = scmp.eq.s32.totalorder %s32, 0
      %p316 = por %p314, %p315
      %p317 = scmp.le.s32.totalorder 1, %s26
      %p318 = scmp.lt.s32.totalorder %s26, 3
      %p319 = pnand %p317, %p318
      %p320 = pneg %p319
      // Predicated region
      $region9: #{tpu_custom_call.1} parent=5 // pred_check
        _
      $region10: #{tpu_custom_call.1} parent=5 // pred_check_branch
        %322 = sbr.rel (%p319) target = $region12
      $region11: #{tpu_custom_call.1} parent=5 // pred_region
        %s323 = ssub.s32 %s26, 1
        // Predicated region
        $region13: #{tpu_custom_call.1} parent=11 // pred_check
          %p324 = pneg %p73
        $region14: #{tpu_custom_call.1} parent=11 // pred_check_branch
          %326 = sbr.rel (%p324) target = $region16
        $region15: #{tpu_custom_call.1} parent=11 // pred_region
          _
        $region16: #{tpu_custom_call.1} parent=11 // pred_fallthru
          _
        // Predicated region
        $region17: #{tpu_custom_call.1} parent=11 // pred_check
          %p327 = pneg %p94
        $region18: #{tpu_custom_call.1} parent=11 // pred_check_branch
          %329 = sbr.rel (%p327) target = $region20
        $region19: #{tpu_custom_call.1} parent=11 // pred_region
          _
        $region20: #{tpu_custom_call.1} parent=11 // pred_fallthru
          _
        // Predicated region
        $region21: #{tpu_custom_call.1} parent=11 // pred_check
          %p330 = pneg %p115
        $region22: #{tpu_custom_call.1} parent=11 // pred_check_branch
          %332 = sbr.rel (%p330) target = $region24
        $region23: #{tpu_custom_call.1} parent=11 // pred_region
          %s334 = ssub.s32 3072, 3072
          %335 = vsyncadd [#allocation6], %s334
          %s336 = sshll.u32 [#allocation5], 4
          %s337 = int_to_ptr.vmem [resolvable:$true] %s336
          %342 = dma.hbm_to_vmem [thread:$0]  %s3, 3072, %s337, [#allocation6], 192, 192, 12
        $region24: #{tpu_custom_call.1} parent=11 // pred_fallthru
          _
        // Predicated region
        $region25: #{tpu_custom_call.1} parent=11 // pred_check
          %p343 = pneg %p136
        $region26: #{tpu_custom_call.1} parent=11 // pred_check_branch
          %345 = sbr.rel (%p343) target = $region28
        $region27: #{tpu_custom_call.1} parent=11 // pred_region
          %s347 = ssub.s32 1024, 1024
          %348 = vsyncadd [#allocation6], %s347
          %s349 = sshll.u32 [#allocation7], 4
          %s350 = int_to_ptr.vmem [resolvable:$true] %s349
          %355 = dma.hbm_to_vmem [thread:$0]  %s4, 1024, %s350, [#allocation6], 64, 64, 4
        $region28: #{tpu_custom_call.1} parent=11 // pred_fallthru
          _
        // Predicated region
        $region29: #{tpu_custom_call.1} parent=11 // pred_check
          %p356 = pneg %p157
        $region30: #{tpu_custom_call.1} parent=11 // pred_check_branch
          %358 = sbr.rel (%p356) target = $region32
        $region31: #{tpu_custom_call.1} parent=11 // pred_region
          _
        $region32: #{tpu_custom_call.1} parent=11 // pred_fallthru
          _
        // Predicated region
        $region33: #{tpu_custom_call.1} parent=11 // pred_check
          %p359 = pneg %p178
        $region34: #{tpu_custom_call.1} parent=11 // pred_check_branch
          %361 = sbr.rel (%p359) target = $region36
        $region35: #{tpu_custom_call.1} parent=11 // pred_region
          _
        $region36: #{tpu_custom_call.1} parent=11 // pred_fallthru
          _
        // Predicated region
        $region37: #{tpu_custom_call.1} parent=11 // pred_check
          %p362 = pneg %p199
        $region38: #{tpu_custom_call.1} parent=11 // pred_check_branch
          %364 = sbr.rel (%p362) target = $region40
        $region39: #{tpu_custom_call.1} parent=11 // pred_region
          _
        $region40: #{tpu_custom_call.1} parent=11 // pred_fallthru
          _
        // Predicated region
        $region41: #{tpu_custom_call.1} parent=11 // pred_check
          %p365 = pneg %p220
        $region42: #{tpu_custom_call.1} parent=11 // pred_check_branch
          %367 = sbr.rel (%p365) target = $region44
        $region43: #{tpu_custom_call.1} parent=11 // pred_region
          %s369 = ssub.s32 4096, 4096
          %370 = vsyncadd [#allocation9], %s369
          %s371 = sshll.u32 [#allocation8], 4
          %s372 = int_to_ptr.vmem [resolvable:$true] %s371
          %377 = dma.hbm_to_vmem [thread:$0]  %s8, 4096, %s372, [#allocation9], 256, 256, 16
        $region44: #{tpu_custom_call.1} parent=11 // pred_fallthru
          _
        // Predicated region
        $region45: #{tpu_custom_call.1} parent=11 // pred_check
          %p378 = pneg %p241
        $region46: #{tpu_custom_call.1} parent=11 // pred_check_branch
          %380 = sbr.rel (%p378) target = $region48
        $region47: #{tpu_custom_call.1} parent=11 // pred_region
          _
        $region48: #{tpu_custom_call.1} parent=11 // pred_fallthru
          _
        // Predicated region
        $region49: #{tpu_custom_call.1} parent=11 // pred_check
          %p381 = pneg %p262
        $region50: #{tpu_custom_call.1} parent=11 // pred_check_branch
          %383 = sbr.rel (%p381) target = $region52
        $region51: #{tpu_custom_call.1} parent=11 // pred_region
          %s385 = ssub.s32 4096, 4096
          %386 = vsyncadd [#allocation9], %s385
          %s387 = sshll.u32 [#allocation10], 4
          %s388 = int_to_ptr.vmem [resolvable:$true] %s387
          %393 = dma.hbm_to_vmem [thread:$0]  %s10, 4096, %s388, [#allocation9], 64, 64, 4
        $region52: #{tpu_custom_call.1} parent=11 // pred_fallthru
          _
        // Predicated region
        $region53: #{tpu_custom_call.1} parent=11 // pred_check
          %p394 = pneg %p283
        $region54: #{tpu_custom_call.1} parent=11 // pred_check_branch
          %396 = sbr.rel (%p394) target = $region56
        $region55: #{tpu_custom_call.1} parent=11 // pred_region
          _
        $region56: #{tpu_custom_call.1} parent=11 // pred_fallthru
          _
      $region12: #{tpu_custom_call.1} parent=5 // pred_fallthru
        _
      %p397 = scmp.lt.s32.totalorder %s26, 2
      // Predicated region
      $region57: #{tpu_custom_call.1} parent=5 // pred_check
        %p398 = pneg %p397
      $region58: #{tpu_custom_call.1} parent=5 // pred_check_branch
        %400 = sbr.rel (%p398) target = $region60
      $region59: #{tpu_custom_call.1} parent=5 // pred_region
        // Predicated region
        $region61: #{tpu_custom_call.1} parent=59 // pred_check
          %p401 = pneg %p46
        $region62: #{tpu_custom_call.1} parent=59 // pred_check_branch
          %403 = sbr.rel (%p401) target = $region64
        $region63: #{tpu_custom_call.1} parent=59 // pred_region
          %s404 = sand.u32 %s36, 1
          %s405 = scalar_lea.sflag [#allocation3], %s404
          %s406 = sand.u32 %s36, 1
          %s407 = smul.addr %s406, 128
          %s408 = scalar_lea.vmem [#allocation2], %s407
          %s410 = ssub.s32 2048, 2048
          %411 = vsyncadd %s405, %s410
          %s412 = smul.addr %s26, 16
          %s413 = smul.addr %s412, 128
          %s414 = scalar_lea.hbm %s0, %s413
          %s415 = sshll.u32 %s408, 4
          %s416 = int_to_ptr.vmem [resolvable:$true] %s415
          %421 = dma.hbm_to_vmem [thread:$0]  %s414, 2048, %s416, %s405, 128, 128, 8
        $region64: #{tpu_custom_call.1} parent=59 // pred_fallthru
          _
      $region60: #{tpu_custom_call.1} parent=5 // pred_fallthru
        _
      %p422 = scmp.le.s32.totalorder 1, %s26
      %p423 = scmp.lt.s32.totalorder %s26, 3
      %p424 = pnand %p422, %p423
      %p425 = pneg %p424
      // Predicated region
      $region65: #{tpu_custom_call.1} parent=5 // pred_check
        _
      $region66: #{tpu_custom_call.1} parent=5 // pred_check_branch
        %427 = sbr.rel (%p424) target = $region68
      $region67: #{tpu_custom_call.1} parent=5 // pred_region
        %s428 = ssub.s32 %s26, 1
        %s429 = sand.u32 %s39, 1
        %s430 = scalar_lea.sflag [#allocation3], %s429
        %s431 = sand.u32 %s39, 1
        %s432 = smul.addr %s431, 128
        %s433 = scalar_lea.vmem [#allocation2], %s432
        // Predicated region
        $region69: #{tpu_custom_call.1} parent=67 // pred_check
          %p434 = pneg %p52
        $region70: #{tpu_custom_call.1} parent=67 // pred_check_branch
          %436 = sbr.rel (%p434) target = $region72
        $region71: #{tpu_custom_call.1} parent=67 // pred_region
          %437 = dma.done %s430, 2048
        $region72: #{tpu_custom_call.1} parent=67 // pred_fallthru
          _
        // Predicated region
        $region73: #{tpu_custom_call.1} parent=67 // pred_check
          %p438 = pneg %p115
        $region74: #{tpu_custom_call.1} parent=67 // pred_check_branch
          %440 = sbr.rel (%p438) target = $region76
        $region75: #{tpu_custom_call.1} parent=67 // pred_region
          %441 = dma.done [#allocation6], 3072
        $region76: #{tpu_custom_call.1} parent=67 // pred_fallthru
          _
        // Predicated region
        $region77: #{tpu_custom_call.1} parent=67 // pred_check
          %p442 = pneg %p136
        $region78: #{tpu_custom_call.1} parent=67 // pred_check_branch
          %444 = sbr.rel (%p442) target = $region80
        $region79: #{tpu_custom_call.1} parent=67 // pred_region
          %445 = dma.done [#allocation6], 1024
        $region80: #{tpu_custom_call.1} parent=67 // pred_fallthru
          _
        // Predicated region
        $region81: #{tpu_custom_call.1} parent=67 // pred_check
          %p446 = pneg %p220
        $region82: #{tpu_custom_call.1} parent=67 // pred_check_branch
          %448 = sbr.rel (%p446) target = $region84
        $region83: #{tpu_custom_call.1} parent=67 // pred_region
          %449 = dma.done [#allocation9], 4096
        $region84: #{tpu_custom_call.1} parent=67 // pred_fallthru
          _
        // Predicated region
        $region85: #{tpu_custom_call.1} parent=67 // pred_check
          %p450 = pneg %p262
        $region86: #{tpu_custom_call.1} parent=67 // pred_check_branch
          %452 = sbr.rel (%p450) target = $region88
        $region87: #{tpu_custom_call.1} parent=67 // pred_region
          %453 = dma.done [#allocation9], 4096
        $region88: #{tpu_custom_call.1} parent=67 // pred_fallthru
          _
        %s454 = sand.u32 %s39, 1
        %s455 = scalar_lea.sflag [#allocation3], %s454
        %s456 = sand.u32 %s39, 1
        %s457 = smul.addr %s456, 128
        %s458 = scalar_lea.vmem [#allocation2], %s457
        %p459 = pneg %p52
        %p460 = pneg %p49
        %p461 = pneg %p73
        %p462 = pneg %p70
        %p463 = pneg %p94
        %p464 = pneg %p91
        %p465 = pneg %p115
        %p466 = pneg %p112
        %p467 = pneg %p136
        %p468 = pneg %p133
        %p469 = pneg %p157
        %p470 = pneg %p154
        %p471 = pneg %p178
        %p472 = pneg %p175
        %p473 = pneg %p199
        %p474 = pneg %p196
        %p475 = pneg %p220
        %p476 = pneg %p217
        %p477 = pneg %p241
        %p478 = pneg %p238
        %p479 = pneg %p262
        %p480 = pneg %p259
        %p481 = pneg %p283
        %p482 = pneg %p280
        %p483 = pneg %p309
        %p484 = pneg %p306
        %s485 = sand.u32 %s296, 1
        %s486 = scalar_lea.sflag [#allocation4], %s485
        %s487 = sand.u32 %s296, 1
        %s488 = smul.addr %s487, 128
        %s489 = scalar_lea.vmem [#allocation11], %s488
        %v491 = vld [vmem:[%s433] sm:$0xff]
        %v492 = vld [vmem:[%s433 + $0x8] sm:$0xff]
        %v493 = vld [vmem:[%s433 + $0x10] sm:$0xff]
        %v494 = vld [vmem:[%s433 + $0x18] sm:$0xff]
        %v495 = vld [vmem:[%s433 + $0x20] sm:$0xff]
        %v496 = vld [vmem:[%s433 + $0x28] sm:$0xff]
        %v497 = vld [vmem:[%s433 + $0x30] sm:$0xff]
        %v498 = vld [vmem:[%s433 + $0x38] sm:$0xff]
        %v499 = vld [vmem:[%s433 + $0x40] sm:$0xff]
        %v500 = vld [vmem:[%s433 + $0x48] sm:$0xff]
        %v501 = vld [vmem:[%s433 + $0x50] sm:$0xff]
        %v502 = vld [vmem:[%s433 + $0x58] sm:$0xff]
        %v503 = vld [vmem:[%s433 + $0x60] sm:$0xff]
        %v504 = vld [vmem:[%s433 + $0x68] sm:$0xff]
        %v505 = vld [vmem:[%s433 + $0x70] sm:$0xff]
        %v506 = vld [vmem:[%s433 + $0x78] sm:$0xff]
        %v507 = vld [vmem:[%s1] sm:$0x1]
        %v508 = vld [vmem:[%s2] sm:$0x1]
        %509 = vadd.xlane.f32.xlu0 %v491
        %v510 = vpop.xlane.xlu0 %509
        %511 = vadd.xlane.f32.xlu0 %v492
        %v512 = vpop.xlane.xlu0 %511
        %513 = vadd.xlane.f32.xlu0 %v493
        %v514 = vpop.xlane.xlu0 %513
        %515 = vadd.xlane.f32.xlu0 %v494
        %v516 = vpop.xlane.xlu0 %515
        %517 = vadd.xlane.f32.xlu0 %v495
        %v518 = vpop.xlane.xlu0 %517
        %519 = vadd.xlane.f32.xlu0 %v496
        %v520 = vpop.xlane.xlu0 %519
        %521 = vadd.xlane.f32.xlu0 %v497
        %v522 = vpop.xlane.xlu0 %521
        %523 = vadd.xlane.f32.xlu0 %v498
        %v524 = vpop.xlane.xlu0 %523
        %525 = vadd.xlane.f32.xlu0 %v499
        %v526 = vpop.xlane.xlu0 %525
        %527 = vadd.xlane.f32.xlu0 %v500
        %v528 = vpop.xlane.xlu0 %527
        %529 = vadd.xlane.f32.xlu0 %v501
        %v530 = vpop.xlane.xlu0 %529
        %531 = vadd.xlane.f32.xlu0 %v502
        %v532 = vpop.xlane.xlu0 %531
        %533 = vadd.xlane.f32.xlu0 %v503
        %v534 = vpop.xlane.xlu0 %533
        %535 = vadd.xlane.f32.xlu0 %v504
        %v536 = vpop.xlane.xlu0 %535
        %537 = vadd.xlane.f32.xlu0 %v505
        %v538 = vpop.xlane.xlu0 %537
        %539 = vadd.xlane.f32.xlu0 %v506
        %v540 = vpop.xlane.xlu0 %539
        %v541 = vrcp.pop 128.0
        %v542 = vmul.f32 %v510, %v541
        %v543 = vmul.f32 %v512, %v541
        %v544 = vmul.f32 %v514, %v541
        %v545 = vmul.f32 %v516, %v541
        %v546 = vmul.f32 %v518, %v541
        %v547 = vmul.f32 %v520, %v541
        %v548 = vmul.f32 %v522, %v541
        %v549 = vmul.f32 %v524, %v541
        %v550 = vmul.f32 %v526, %v541
        %v551 = vmul.f32 %v528, %v541
        %v552 = vmul.f32 %v530, %v541
        %v553 = vmul.f32 %v532, %v541
        %v554 = vmul.f32 %v534, %v541
        %v555 = vmul.f32 %v536, %v541
        %v556 = vmul.f32 %v538, %v541
        %v557 = vmul.f32 %v540, %v541
        %v558 = vsub.f32 %v491, %v542
        %v559 = vsub.f32 %v492, %v543
        %v560 = vsub.f32 %v493, %v544
        %v561 = vsub.f32 %v494, %v545
        %v562 = vsub.f32 %v495, %v546
        %v563 = vsub.f32 %v496, %v547
        %v564 = vsub.f32 %v497, %v548
        %v565 = vsub.f32 %v498, %v549
        %v566 = vsub.f32 %v499, %v550
        %v567 = vsub.f32 %v500, %v551
        %v568 = vsub.f32 %v501, %v552
        %v569 = vsub.f32 %v502, %v553
        %v570 = vsub.f32 %v503, %v554
        %v571 = vsub.f32 %v504, %v555
        %v572 = vsub.f32 %v505, %v556
        %v573 = vsub.f32 %v506, %v557
        %v574 = vmul.f32 %v558, %v558
        %v575 = vmul.f32 %v559, %v559
        %v576 = vmul.f32 %v560, %v560
        %v577 = vmul.f32 %v561, %v561
        %v578 = vmul.f32 %v562, %v562
        %v579 = vmul.f32 %v563, %v563
        %v580 = vmul.f32 %v564, %v564
        %v581 = vmul.f32 %v565, %v565
        %v582 = vmul.f32 %v566, %v566
        %v583 = vmul.f32 %v567, %v567
        %v584 = vmul.f32 %v568, %v568
        %v585 = vmul.f32 %v569, %v569
        %v586 = vmul.f32 %v570, %v570
        %v587 = vmul.f32 %v571, %v571
        %v588 = vmul.f32 %v572, %v572
        %v589 = vmul.f32 %v573, %v573
        %590 = vadd.xlane.f32.xlu0 %v574
        %v591 = vpop.xlane.xlu0 %590
        %592 = vadd.xlane.f32.xlu0 %v575
        %v593 = vpop.xlane.xlu0 %592
        %594 = vadd.xlane.f32.xlu0 %v576
        %v595 = vpop.xlane.xlu0 %594
        %596 = vadd.xlane.f32.xlu0 %v577
        %v597 = vpop.xlane.xlu0 %596
        %598 = vadd.xlane.f32.xlu0 %v578
        %v599 = vpop.xlane.xlu0 %598
        %600 = vadd.xlane.f32.xlu0 %v579
        %v601 = vpop.xlane.xlu0 %600
        %602 = vadd.xlane.f32.xlu0 %v580
        %v603 = vpop.xlane.xlu0 %602
        %604 = vadd.xlane.f32.xlu0 %v581
        %v605 = vpop.xlane.xlu0 %604
        %606 = vadd.xlane.f32.xlu0 %v582
        %v607 = vpop.xlane.xlu0 %606
        %608 = vadd.xlane.f32.xlu0 %v583
        %v609 = vpop.xlane.xlu0 %608
        %610 = vadd.xlane.f32.xlu0 %v584
        %v611 = vpop.xlane.xlu0 %610
        %612 = vadd.xlane.f32.xlu0 %v585
        %v613 = vpop.xlane.xlu0 %612
        %614 = vadd.xlane.f32.xlu0 %v586
        %v615 = vpop.xlane.xlu0 %614
        %616 = vadd.xlane.f32.xlu0 %v587
        %v617 = vpop.xlane.xlu0 %616
        %618 = vadd.xlane.f32.xlu0 %v588
        %v619 = vpop.xlane.xlu0 %618
        %620 = vadd.xlane.f32.xlu0 %v589
        %v621 = vpop.xlane.xlu0 %620
        %v622 = vmul.f32 %v591, %v541
        %v623 = vmul.f32 %v593, %v541
        %v624 = vmul.f32 %v595, %v541
        %v625 = vmul.f32 %v597, %v541
        %v626 = vmul.f32 %v599, %v541
        %v627 = vmul.f32 %v601, %v541
        %v628 = vmul.f32 %v603, %v541
        %v629 = vmul.f32 %v605, %v541
        %v630 = vmul.f32 %v607, %v541
        %v631 = vmul.f32 %v609, %v541
        %v632 = vmul.f32 %v611, %v541
        %v633 = vmul.f32 %v613, %v541
        %v634 = vmul.f32 %v615, %v541
        %v635 = vmul.f32 %v617, %v541
        %v636 = vmul.f32 %v619, %v541
        %v637 = vmul.f32 %v621, %v541
        %v638 = vadd.f32 %v622, 1e-05
        %v639 = vadd.f32 %v623, 1e-05
        %v640 = vadd.f32 %v624, 1e-05
        %v641 = vadd.f32 %v625, 1e-05
        %v642 = vadd.f32 %v626, 1e-05
        %v643 = vadd.f32 %v627, 1e-05
        %v644 = vadd.f32 %v628, 1e-05
        %v645 = vadd.f32 %v629, 1e-05
        %v646 = vadd.f32 %v630, 1e-05
        %v647 = vadd.f32 %v631, 1e-05
        %v648 = vadd.f32 %v632, 1e-05
        %v649 = vadd.f32 %v633, 1e-05
        %v650 = vadd.f32 %v634, 1e-05
        %v651 = vadd.f32 %v635, 1e-05
        %v652 = vadd.f32 %v636, 1e-05
        %v653 = vadd.f32 %v637, 1e-05
        %v654 = vrsqrt.pop %v638
        %v655 = vrsqrt.pop %v639
        %v656 = vrsqrt.pop %v640
        %v657 = vrsqrt.pop %v641
        %v658 = vrsqrt.pop %v642
        %v659 = vrsqrt.pop %v643
        %v660 = vrsqrt.pop %v644
        %v661 = vrsqrt.pop %v645
        %v662 = vrsqrt.pop %v646
        %v663 = vrsqrt.pop %v647
        %v664 = vrsqrt.pop %v648
        %v665 = vrsqrt.pop %v649
        %v666 = vrsqrt.pop %v650
        %v667 = vrsqrt.pop %v651
        %v668 = vrsqrt.pop %v652
        %v669 = vrsqrt.pop %v653
        %v670 = vmul.f32 %v558, %v654
        %v671 = vmul.f32 %v559, %v655
        %v672 = vmul.f32 %v560, %v656
        %v673 = vmul.f32 %v561, %v657
        %v674 = vmul.f32 %v562, %v658
        %v675 = vmul.f32 %v563, %v659
        %v676 = vmul.f32 %v564, %v660
        %v677 = vmul.f32 %v565, %v661
        %v678 = vmul.f32 %v566, %v662
        %v679 = vmul.f32 %v567, %v663
        %v680 = vmul.f32 %v568, %v664
        %v681 = vmul.f32 %v569, %v665
        %v682 = vmul.f32 %v570, %v666
        %v683 = vmul.f32 %v571, %v667
        %v684 = vmul.f32 %v572, %v668
        %v685 = vmul.f32 %v573, %v669
        %v687 = vlaneseq
        %v688 = vshrl.u32 %v687, 7
        %v689 = vsub.s32 0, %v688
        %v690 = vrot.slane %v507, %v689
        %v692 = vmul.f32 %v670, %v690
        %v693 = vmul.f32 %v671, %v690
        %v694 = vmul.f32 %v672, %v690
        %v695 = vmul.f32 %v673, %v690
        %v696 = vmul.f32 %v674, %v690
        %v697 = vmul.f32 %v675, %v690
        %v698 = vmul.f32 %v676, %v690
        %v699 = vmul.f32 %v677, %v690
        %v700 = vmul.f32 %v678, %v690
        %v701 = vmul.f32 %v679, %v690
        %v702 = vmul.f32 %v680, %v690
        %v703 = vmul.f32 %v681, %v690
        %v704 = vmul.f32 %v682, %v690
        %v705 = vmul.f32 %v683, %v690
        %v706 = vmul.f32 %v684, %v690
        %v707 = vmul.f32 %v685, %v690
        %v709 = vlaneseq
        %v710 = vshrl.u32 %v709, 7
        %v711 = vsub.s32 0, %v710
        %v712 = vrot.slane %v508, %v711
        %v714 = vadd.f32 %v692, %v712
        %v715 = vadd.f32 %v693, %v712
        %v716 = vadd.f32 %v694, %v712
        %v717 = vadd.f32 %v695, %v712
        %v718 = vadd.f32 %v696, %v712
        %v719 = vadd.f32 %v697, %v712
        %v720 = vadd.f32 %v698, %v712
        %v721 = vadd.f32 %v699, %v712
        %v722 = vadd.f32 %v700, %v712
        %v723 = vadd.f32 %v701, %v712
        %v724 = vadd.f32 %v702, %v712
        %v725 = vadd.f32 %v703, %v712
        %v726 = vadd.f32 %v704, %v712
        %v727 = vadd.f32 %v705, %v712
        %v728 = vadd.f32 %v706, %v712
        %v729 = vadd.f32 %v707, %v712
        %v730 = vpack.c.bf16 %v715, %v714
        %v731 = vpack.c.bf16 %v717, %v716
        %v732 = vpack.c.bf16 %v719, %v718
        %v733 = vpack.c.bf16 %v721, %v720
        %v734 = vpack.c.bf16 %v723, %v722
        %v735 = vpack.c.bf16 %v725, %v724
        %v736 = vpack.c.bf16 %v727, %v726
        %v737 = vpack.c.bf16 %v729, %v728
        %v738 = vld [vmem:[#allocation5] sm:$0xff]
        %v739 = vld [vmem:[#allocation5 + $0x8] sm:$0xf]
        %v740 = vld [vmem:[#allocation5 + $0xc] sm:$0xff]
        %v741 = vld [vmem:[#allocation5 + $0x14] sm:$0xf]
        %v742 = vld [vmem:[#allocation5 + $0x18] sm:$0xff]
        %v743 = vld [vmem:[#allocation5 + $0x20] sm:$0xf]
        %v744 = vld [vmem:[#allocation5 + $0x24] sm:$0xff]
        %v745 = vld [vmem:[#allocation5 + $0x2c] sm:$0xf]
        %v746 = vld [vmem:[#allocation5 + $0x30] sm:$0xff]
        %v747 = vld [vmem:[#allocation5 + $0x38] sm:$0xf]
        %v748 = vld [vmem:[#allocation5 + $0x3c] sm:$0xff]
        %v749 = vld [vmem:[#allocation5 + $0x44] sm:$0xf]
        %v750 = vld [vmem:[#allocation5 + $0x48] sm:$0xff]
        %v751 = vld [vmem:[#allocation5 + $0x50] sm:$0xf]
        %v752 = vld [vmem:[#allocation5 + $0x54] sm:$0xff]
        %v753 = vld [vmem:[#allocation5 + $0x5c] sm:$0xf]
        %v754 = vld [vmem:[#allocation5 + $0x60] sm:$0xff]
        %v755 = vld [vmem:[#allocation5 + $0x68] sm:$0xf]
        %v756 = vld [vmem:[#allocation5 + $0x6c] sm:$0xff]
        %v757 = vld [vmem:[#allocation5 + $0x74] sm:$0xf]
        %v758 = vld [vmem:[#allocation5 + $0x78] sm:$0xff]
        %v759 = vld [vmem:[#allocation5 + $0x80] sm:$0xf]
        %v760 = vld [vmem:[#allocation5 + $0x84] sm:$0xff]
        %v761 = vld [vmem:[#allocation5 + $0x8c] sm:$0xf]
        %v762 = vld [vmem:[#allocation5 + $0x90] sm:$0xff]
        %v763 = vld [vmem:[#allocation5 + $0x98] sm:$0xf]
        %v764 = vld [vmem:[#allocation5 + $0x9c] sm:$0xff]
        %v765 = vld [vmem:[#allocation5 + $0xa4] sm:$0xf]
        %v766 = vld [vmem:[#allocation5 + $0xa8] sm:$0xff]
        %v767 = vld [vmem:[#allocation5 + $0xb0] sm:$0xf]
        %v768 = vld [vmem:[#allocation5 + $0xb4] sm:$0xff]
        %v769 = vld [vmem:[#allocation5 + $0xbc] sm:$0xf]
        %v802 = vunpack.c.l.b16 %v738
        %v803 = vunpack.c.h.b16 %v738
        %v804 = vunpack.c.l.b16 %v739
        %v805 = vunpack.c.l.b16 %v740
        %v806 = vunpack.c.h.b16 %v740
        %v807 = vunpack.c.l.b16 %v741
        %v808 = vunpack.c.l.b16 %v742
        %v809 = vunpack.c.h.b16 %v742
        %v810 = vunpack.c.l.b16 %v743
        %v811 = vunpack.c.l.b16 %v744
        %v812 = vunpack.c.h.b16 %v744
        %v813 = vunpack.c.l.b16 %v745
        %v814 = vunpack.c.l.b16 %v746
        %v815 = vunpack.c.h.b16 %v746
        %v816 = vunpack.c.l.b16 %v747
        %v817 = vunpack.c.l.b16 %v748
        %v818 = vunpack.c.h.b16 %v748
        %v819 = vunpack.c.l.b16 %v749
        %v820 = vunpack.c.l.b16 %v750
        %v821 = vunpack.c.h.b16 %v750
        %v822 = vunpack.c.l.b16 %v751
        %v823 = vunpack.c.l.b16 %v752
        %v824 = vunpack.c.h.b16 %v752
        %v825 = vunpack.c.l.b16 %v753
        %v826 = vunpack.c.l.b16 %v754
        %v827 = vunpack.c.h.b16 %v754
        %v828 = vunpack.c.l.b16 %v755
        %v829 = vunpack.c.l.b16 %v756
        %v830 = vunpack.c.h.b16 %v756
        %v831 = vunpack.c.l.b16 %v757
        %v832 = vunpack.c.l.b16 %v758
        %v833 = vunpack.c.h.b16 %v758
        %v834 = vunpack.c.l.b16 %v759
        %v835 = vunpack.c.l.b16 %v760
        %v836 = vunpack.c.h.b16 %v760
        %v837 = vunpack.c.l.b16 %v761
        %v838 = vunpack.c.l.b16 %v762
        %v839 = vunpack.c.h.b16 %v762
        %v840 = vunpack.c.l.b16 %v763
        %v841 = vunpack.c.l.b16 %v764
        %v842 = vunpack.c.h.b16 %v764
        %v843 = vunpack.c.l.b16 %v765
        %v844 = vunpack.c.l.b16 %v766
        %v845 = vunpack.c.h.b16 %v766
        %v846 = vunpack.c.l.b16 %v767
        %v847 = vunpack.c.l.b16 %v768
        %v848 = vunpack.c.h.b16 %v768
        %v849 = vunpack.c.l.b16 %v769
        %v850 = vpack.c.b16 %v805, %v802
        %v851 = vpack.c.b16 %v806, %v803
        %v852 = vpack.c.b16 %v807, %v804
        %v853 = vpack.c.b16 %v811, %v808
        %v854 = vpack.c.b16 %v812, %v809
        %v855 = vpack.c.b16 %v813, %v810
        %v856 = vpack.c.b16 %v817, %v814
        %v857 = vpack.c.b16 %v818, %v815
        %v858 = vpack.c.b16 %v819, %v816
        %v859 = vpack.c.b16 %v823, %v820
        %v860 = vpack.c.b16 %v824, %v821
        %v861 = vpack.c.b16 %v825, %v822
        %v862 = vpack.c.b16 %v829, %v826
        %v863 = vpack.c.b16 %v830, %v827
        %v864 = vpack.c.b16 %v831, %v828
        %v865 = vpack.c.b16 %v835, %v832
        %v866 = vpack.c.b16 %v836, %v833
        %v867 = vpack.c.b16 %v837, %v834
        %v868 = vpack.c.b16 %v841, %v838
        %v869 = vpack.c.b16 %v842, %v839
        %v870 = vpack.c.b16 %v843, %v840
        %v871 = vpack.c.b16 %v847, %v844
        %v872 = vpack.c.b16 %v848, %v845
        %v873 = vpack.c.b16 %v849, %v846
        %898 = vmatprep.subr.bf16.mxu0 %v851
        %899 = vmatpush1.bf16.msra.mxu0 %v850
        %900 = vmatprep.subr.bf16.mxu0 %v854
        %901 = vmatpush1.bf16.msra.mxu0 %v853
        %902 = vmatprep.subr.bf16.mxu0 %v857
        %903 = vmatpush1.bf16.msra.mxu0 %v856
        %904 = vmatprep.subr.bf16.mxu0 %v860
        %905 = vmatpush1.bf16.msra.mxu0 %v859
        %906 = vmatprep.subr.bf16.mxu0 %v863
        %907 = vmatpush1.bf16.msra.mxu0 %v862
        %908 = vmatprep.subr.bf16.mxu0 %v866
        %909 = vmatpush1.bf16.msra.mxu0 %v865
        %910 = vmatprep.subr.bf16.mxu0 %v869
        %911 = vmatpush1.bf16.msra.mxu0 %v868
        %912 = vmatprep.subr.bf16.mxu0 %v872
        %913 = vmatpush1.bf16.msra.mxu0 %v871
        %914 = vmatprep.subr.bf16.mxu0 0
        %915 = vmatpush1.bf16.msra.mxu0 0
        %916 = vmatprep.subr.bf16.mxu0 0
        %917 = vmatpush1.bf16.msra.mxu0 0
        %918 = vmatprep.subr.bf16.mxu0 0
        %919 = vmatpush1.bf16.msra.mxu0 0
        %920 = vmatprep.subr.bf16.mxu0 0
        %921 = vmatpush1.bf16.msra.mxu0 0
        %922 = vmatprep.subr.bf16.mxu0 0
        %923 = vmatpush1.bf16.msra.mxu0 0
        %924 = vmatprep.subr.bf16.mxu0 0
        %925 = vmatpush1.bf16.msra.mxu0 0
        %926 = vmatprep.subr.bf16.mxu0 0
        %927 = vmatpush1.bf16.msra.mxu0 0
        %928 = vmatprep.subr.bf16.mxu0 0
        %929 = vmatpush1.bf16.msra.mxu0 0
        %930 = vmatprep.mubr.bf16.mxu0 0
        %931 = vmatmul.mubr.bf16.gmra.mrb[0].mxu0 %v730
        %v932 = vpop.f32.mrb[0].mxu0
        %v933 = vadd.f32 0.0, %v932
        %v934 = vpop.f32.mrb[0].mxu0
        %v935 = vadd.f32 0.0, %v934
        %v936 = vpop.f32.mrb[0].mxu0
        %v937 = vadd.f32 0.0, %v936
        %v938 = vpop.f32.mrb[0].mxu0
        %v939 = vadd.f32 0.0, %v938
        %940 = vmatprep.mubr.bf16.mxu0 0
        %941 = vmatmul.mubr.bf16.gmra.mrb[0].mxu0 %v731
        %v942 = vpop.f32.mrb[0].mxu0
        %v943 = vadd.f32 0.0, %v942
        %v944 = vpop.f32.mrb[0].mxu0
        %v945 = vadd.f32 0.0, %v944
        %v946 = vpop.f32.mrb[0].mxu0
        %v947 = vadd.f32 0.0, %v946
        %v948 = vpop.f32.mrb[0].mxu0
        %v949 = vadd.f32 0.0, %v948
        %950 = vmatprep.mubr.bf16.mxu0 0
        %951 = vmatmul.mubr.bf16.gmra.mrb[0].mxu0 %v732
        %v952 = vpop.f32.mrb[0].mxu0
        %v953 = vadd.f32 0.0, %v952
        %v954 = vpop.f32.mrb[0].mxu0
        %v955 = vadd.f32 0.0, %v954
        %v956 = vpop.f32.mrb[0].mxu0
        %v957 = vadd.f32 0.0, %v956
        %v958 = vpop.f32.mrb[0].mxu0
        %v959 = vadd.f32 0.0, %v958
        %960 = vmatprep.mubr.bf16.mxu0 0
        %961 = vmatmul.mubr.bf16.gmra.mrb[0].mxu0 %v733
        %v962 = vpop.f32.mrb[0].mxu0
        %v963 = vadd.f32 0.0, %v962
        %v964 = vpop.f32.mrb[0].mxu0
        %v965 = vadd.f32 0.0, %v964
        %v966 = vpop.f32.mrb[0].mxu0
        %v967 = vadd.f32 0.0, %v966
        %v968 = vpop.f32.mrb[0].mxu0
        %v969 = vadd.f32 0.0, %v968
        %970 = vmatprep.mubr.bf16.mxu0 0
        %971 = vmatmul.mubr.bf16.gmra.mrb[0].mxu0 %v734
        %v972 = vpop.f32.mrb[0].mxu0
        %v973 = vadd.f32 0.0, %v972
        %v974 = vpop.f32.mrb[0].mxu0
        %v975 = vadd.f32 0.0, %v974
        %v976 = vpop.f32.mrb[0].mxu0
        %v977 = vadd.f32 0.0, %v976
        %v978 = vpop.f32.mrb[0].mxu0
        %v979 = vadd.f32 0.0, %v978
        %980 = vmatprep.mubr.bf16.mxu0 0
        %981 = vmatmul.mubr.bf16.gmra.mrb[0].mxu0 %v735
        %v982 = vpop.f32.mrb[0].mxu0
        %v983 = vadd.f32 0.0, %v982
        %v984 = vpop.f32.mrb[0].mxu0
        %v985 = vadd.f32 0.0, %v984
        %v986 = vpop.f32.mrb[0].mxu0
        %v987 = vadd.f32 0.0, %v986
        %v988 = vpop.f32.mrb[0].mxu0
        %v989 = vadd.f32 0.0, %v988
        %990 = vmatprep.mubr.bf16.mxu0 0
        %991 = vmatmul.mubr.bf16.gmra.mrb[0].mxu0 %v736
        %v992 = vpop.f32.mrb[0].mxu0
        %v993 = vadd.f32 0.0, %v992
        %v994 = vpop.f32.mrb[0].mxu0
        %v995 = vadd.f32 0.0, %v994
        %v996 = vpop.f32.mrb[0].mxu0
        %v997 = vadd.f32 0.0, %v996
        %v998 = vpop.f32.mrb[0].mxu0
        %v999 = vadd.f32 0.0, %v998
        %1000 = vmatprep.mubr.bf16.mxu0 0
        %1001 = vmatmul.mubr.bf16.gmra.mrb[0].mxu0 %v737
        %v1002 = vpop.f32.mrb[0].mxu0
        %v1003 = vadd.f32 0.0, %v1002
        %v1004 = vpop.f32.mrb[0].mxu0
        %v1005 = vadd.f32 0.0, %v1004
        %v1006 = vpop.f32.mrb[0].mxu0
        %v1007 = vadd.f32 0.0, %v1006
        %v1008 = vpop.f32.mrb[0].mxu0
        %v1009 = vadd.f32 0.0, %v1008
        %1010 = vdwg.mxu0
        %1011 = vmatprep.subr.bf16.mxu0 0
        %1012 = vmatpush1.bf16.msra.mxu0 %v852
        %1013 = vmatprep.subr.bf16.mxu0 0
        %1014 = vmatpush1.bf16.msra.mxu0 %v855
        %1015 = vmatprep.subr.bf16.mxu0 0
        %1016 = vmatpush1.bf16.msra.mxu0 %v858
        %1017 = vmatprep.subr.bf16.mxu0 0
        %1018 = vmatpush1.bf16.msra.mxu0 %v861
        %1019 = vmatprep.subr.bf16.mxu0 0
        %1020 = vmatpush1.bf16.msra.mxu0 %v864
        %1021 = vmatprep.subr.bf16.mxu0 0
        %1022 = vmatpush1.bf16.msra.mxu0 %v867
        %1023 = vmatprep.subr.bf16.mxu0 0
        %1024 = vmatpush1.bf16.msra.mxu0 %v870
        %1025 = vmatprep.subr.bf16.mxu0 0
        %1026 = vmatpush1.bf16.msra.mxu0 %v873
        %1027 = vmatprep.subr.bf16.mxu0 0
        %1028 = vmatpush1.bf16.msra.mxu0 0
        %1029 = vmatprep.subr.bf16.mxu0 0
        %1030 = vmatpush1.bf16.msra.mxu0 0
        %1031 = vmatprep.subr.bf16.mxu0 0
        %1032 = vmatpush1.bf16.msra.mxu0 0
        %1033 = vmatprep.subr.bf16.mxu0 0
        %1034 = vmatpush1.bf16.msra.mxu0 0
        %1035 = vmatprep.subr.bf16.mxu0 0
        %1036 = vmatpush1.bf16.msra.mxu0 0
        %1037 = vmatprep.subr.bf16.mxu0 0
        %1038 = vmatpush1.bf16.msra.mxu0 0
        %1039 = vmatprep.subr.bf16.mxu0 0
        %1040 = vmatpush1.bf16.msra.mxu0 0
        %1041 = vmatprep.subr.bf16.mxu0 0
        %1042 = vmatpush1.bf16.msra.mxu0 0
        %1043 = vmatprep.mubr.bf16.mxu0 0
        %1044 = vmatmul.mubr.bf16.gmra.mrb[0].mxu0 %v730
        %v1045 = vpop.f32.mrb[0].mxu0
        %v1046 = vadd.f32 0.0, %v1045
        %v1047 = vpop.f32.mrb[0].mxu0
        %v1048 = vpop.f32.mrb[0].mxu0
        %v1049 = vadd.f32 0.0, %v1048
        %v1050 = vpop.f32.mrb[0].mxu0
        %1051 = vmatprep.mubr.bf16.mxu0 0
        %1052 = vmatmul.mubr.bf16.gmra.mrb[0].mxu0 %v731
        %v1053 = vpop.f32.mrb[0].mxu0
        %v1054 = vadd.f32 0.0, %v1053
        %v1055 = vpop.f32.mrb[0].mxu0
        %v1056 = vpop.f32.mrb[0].mxu0
        %v1057 = vadd.f32 0.0, %v1056
        %v1058 = vpop.f32.mrb[0].mxu0
        %1059 = vmatprep.mubr.bf16.mxu0 0
        %1060 = vmatmul.mubr.bf16.gmra.mrb[0].mxu0 %v732
        %v1061 = vpop.f32.mrb[0].mxu0
        %v1062 = vadd.f32 0.0, %v1061
        %v1063 = vpop.f32.mrb[0].mxu0
        %v1064 = vpop.f32.mrb[0].mxu0
        %v1065 = vadd.f32 0.0, %v1064
        %v1066 = vpop.f32.mrb[0].mxu0
        %1067 = vmatprep.mubr.bf16.mxu0 0
        %1068 = vmatmul.mubr.bf16.gmra.mrb[0].mxu0 %v733
        %v1069 = vpop.f32.mrb[0].mxu0
        %v1070 = vadd.f32 0.0, %v1069
        %v1071 = vpop.f32.mrb[0].mxu0
        %v1072 = vpop.f32.mrb[0].mxu0
        %v1073 = vadd.f32 0.0, %v1072
        %v1074 = vpop.f32.mrb[0].mxu0
        %1075 = vmatprep.mubr.bf16.mxu0 0
        %1076 = vmatmul.mubr.bf16.gmra.mrb[0].mxu0 %v734
        %v1077 = vpop.f32.mrb[0].mxu0
        %v1078 = vadd.f32 0.0, %v1077
        %v1079 = vpop.f32.mrb[0].mxu0
        %v1080 = vpop.f32.mrb[0].mxu0
        %v1081 = vadd.f32 0.0, %v1080
        %v1082 = vpop.f32.mrb[0].mxu0
        %1083 = vmatprep.mubr.bf16.mxu0 0
        %1084 = vmatmul.mubr.bf16.gmra.mrb[0].mxu0 %v735
        %v1085 = vpop.f32.mrb[0].mxu0
        %v1086 = vadd.f32 0.0, %v1085
        %v1087 = vpop.f32.mrb[0].mxu0
        %v1088 = vpop.f32.mrb[0].mxu0
        %v1089 = vadd.f32 0.0, %v1088
        %v1090 = vpop.f32.mrb[0].mxu0
        %1091 = vmatprep.mubr.bf16.mxu0 0
        %1092 = vmatmul.mubr.bf16.gmra.mrb[0].mxu0 %v736
        %v1093 = vpop.f32.mrb[0].mxu0
        %v1094 = vadd.f32 0.0, %v1093
        %v1095 = vpop.f32.mrb[0].mxu0
        %v1096 = vpop.f32.mrb[0].mxu0
        %v1097 = vadd.f32 0.0, %v1096
        %v1098 = vpop.f32.mrb[0].mxu0
        %1099 = vmatprep.mubr.bf16.mxu0 0
        %1100 = vmatmul.mubr.bf16.gmra.mrb[0].mxu0 %v737
        %v1101 = vpop.f32.mrb[0].mxu0
        %v1102 = vadd.f32 0.0, %v1101
        %v1103 = vpop.f32.mrb[0].mxu0
        %v1104 = vpop.f32.mrb[0].mxu0
        %v1105 = vadd.f32 0.0, %v1104
        %v1106 = vpop.f32.mrb[0].mxu0
        %1107 = vdwg.mxu0
        %v1108 = vlaneseq
        %v1109 = vshrl.u32 %v1108, 7
        %v1110 = vadd.s32 %v1109, 8
        %v1111 = vadd.s32 %v1109, 16
        %v1112 = vadd.s32 %v1109, 24
        %v1113 = vadd.s32 %v1109, 32
        %v1114 = vadd.s32 %v1109, 40
        %v1115 = vadd.s32 %v1109, 48
        %v1116 = vadd.s32 %v1109, 56
        %v1117 = vadd.s32 %v1109, 64
        %v1118 = vadd.s32 %v1109, 72
        %v1119 = vadd.s32 %v1109, 80
        %v1120 = vadd.s32 %v1109, 88
        %v1121 = vadd.s32 %v1109, 96
        %v1122 = vadd.s32 %v1109, 104
        %v1123 = vadd.s32 %v1109, 112
        %v1124 = vadd.s32 %v1109, 120
        %v1125 = vlaneseq
        %v1126 = vand.u32 %v1125, 127
        %vm1127 = vcmp.le.s32.totalorder %v1126, %v1109
        %vm1128 = vcmp.le.s32.totalorder %v1126, %v1110
        %vm1129 = vcmp.le.s32.totalorder %v1126, %v1111
        %vm1130 = vcmp.le.s32.totalorder %v1126, %v1112
        %vm1131 = vcmp.le.s32.totalorder %v1126, %v1113
        %vm1132 = vcmp.le.s32.totalorder %v1126, %v1114
        %vm1133 = vcmp.le.s32.totalorder %v1126, %v1115
        %vm1134 = vcmp.le.s32.totalorder %v1126, %v1116
        %vm1135 = vcmp.le.s32.totalorder %v1126, %v1117
        %vm1136 = vcmp.le.s32.totalorder %v1126, %v1118
        %vm1137 = vcmp.le.s32.totalorder %v1126, %v1119
        %vm1138 = vcmp.le.s32.totalorder %v1126, %v1120
        %vm1139 = vcmp.le.s32.totalorder %v1126, %v1121
        %vm1140 = vcmp.le.s32.totalorder %v1126, %v1122
        %vm1141 = vcmp.le.s32.totalorder %v1126, %v1123
        %vm1142 = vcmp.le.s32.totalorder %v1126, %v1124
        %v1143 = vpack.c.bf16 %v937, %v933
        %v1144 = vpack.c.bf16 %v947, %v943
        %v1145 = vpack.c.bf16 %v957, %v953
        %v1146 = vpack.c.bf16 %v967, %v963
        %v1147 = vpack.c.bf16 %v977, %v973
        %v1148 = vpack.c.bf16 %v987, %v983
        %v1149 = vpack.c.bf16 %v997, %v993
        %v1150 = vpack.c.bf16 %v1007, %v1003
        %v1151 = vpack.c.bf16 %v939, %v935
        %v1152 = vpack.c.bf16 %v949, %v945
        %v1153 = vpack.c.bf16 %v959, %v955
        %v1154 = vpack.c.bf16 %v969, %v965
        %v1155 = vpack.c.bf16 %v979, %v975
        %v1156 = vpack.c.bf16 %v989, %v985
        %v1157 = vpack.c.bf16 %v999, %v995
        %v1158 = vpack.c.bf16 %v1009, %v1005
        %vm1159 = vcmask 261120
        %v1161 = vsel %vm1159, %v1143, 0
        %v1164 = vsel %vm1159, %v1144, 0
        %v1167 = vsel %vm1159, %v1145, 0
        %v1170 = vsel %vm1159, %v1146, 0
        %v1173 = vsel %vm1159, %v1147, 0
        %v1176 = vsel %vm1159, %v1148, 0
        %v1179 = vsel %vm1159, %v1149, 0
        %v1182 = vsel %vm1159, %v1150, 0
        %v1185 = vsel %vm1159, %v1151, 0
        %v1188 = vsel %vm1159, %v1152, 0
        %v1191 = vsel %vm1159, %v1153, 0
        %v1194 = vsel %vm1159, %v1154, 0
        %v1197 = vsel %vm1159, %v1155, 0
        %v1200 = vsel %vm1159, %v1156, 0
        %v1203 = vsel %vm1159, %v1157, 0
        %v1206 = vsel %vm1159, %v1158, 0
        %1208 = vmatprep.subr.bf16.mxu0 0
        %1209 = vmatpush1.bf16.xpose.msra.mxu0 %v1185
        %1210 = vmatprep.subr.bf16.mxu0 0
        %1211 = vmatpush1.bf16.xpose.msra.mxu0 %v1188
        %1212 = vmatprep.subr.bf16.mxu0 0
        %1213 = vmatpush1.bf16.xpose.msra.mxu0 %v1191
        %1214 = vmatprep.subr.bf16.mxu0 0
        %1215 = vmatpush1.bf16.xpose.msra.mxu0 %v1194
        %1216 = vmatprep.subr.bf16.mxu0 0
        %1217 = vmatpush1.bf16.xpose.msra.mxu0 %v1197
        %1218 = vmatprep.subr.bf16.mxu0 0
        %1219 = vmatpush1.bf16.xpose.msra.mxu0 %v1200
        %1220 = vmatprep.subr.bf16.mxu0 0
        %1221 = vmatpush1.bf16.xpose.msra.mxu0 %v1203
        %1222 = vmatprep.subr.bf16.mxu0 0
        %1223 = vmatpush1.bf16.xpose.msra.mxu0 %v1206
        %1224 = vmatprep.subr.bf16.mxu0 0
        %1225 = vmatpush1.bf16.xpose.msra.mxu0 0
        %1226 = vmatprep.subr.bf16.mxu0 0
        %1227 = vmatpush1.bf16.xpose.msra.mxu0 0
        %1228 = vmatprep.subr.bf16.mxu0 0
        %1229 = vmatpush1.bf16.xpose.msra.mxu0 0
        %1230 = vmatprep.subr.bf16.mxu0 0
        %1231 = vmatpush1.bf16.xpose.msra.mxu0 0
        %1232 = vmatprep.subr.bf16.mxu0 0
        %1233 = vmatpush1.bf16.xpose.msra.mxu0 0
        %1234 = vmatprep.subr.bf16.mxu0 0
        %1235 = vmatpush1.bf16.xpose.msra.mxu0 0
        %1236 = vmatprep.subr.bf16.mxu0 0
        %1237 = vmatpush1.bf16.xpose.msra.mxu0 0
        %1238 = vmatprep.subr.bf16.mxu0 0
        %1239 = vmatpush1.bf16.xpose.msra.mxu0 0
        %1240 = vmatprep.mubr.bf16.mxu0 0
        %1241 = vmatmul.mubr.bf16.gmra.mrb[0].mxu0 %v1161
        %v1242 = vpop.f32.mrb[0].mxu0
        %v1243 = vadd.f32 0.0, %v1242
        %v1244 = vpop.f32.mrb[0].mxu0
        %v1245 = vpop.f32.mrb[0].mxu0
        %v1246 = vadd.f32 0.0, %v1245
        %v1247 = vpop.f32.mrb[0].mxu0
        %1248 = vmatprep.mubr.bf16.mxu0 0
        %1249 = vmatmul.mubr.bf16.gmra.mrb[0].mxu0 %v1164
        %v1250 = vpop.f32.mrb[0].mxu0
        %v1251 = vadd.f32 0.0, %v1250
        %v1252 = vpop.f32.mrb[0].mxu0
        %v1253 = vpop.f32.mrb[0].mxu0
        %v1254 = vadd.f32 0.0, %v1253
        %v1255 = vpop.f32.mrb[0].mxu0
        %1256 = vmatprep.mubr.bf16.mxu0 0
        %1257 = vmatmul.mubr.bf16.gmra.mrb[0].mxu0 %v1167
        %v1258 = vpop.f32.mrb[0].mxu0
        %v1259 = vadd.f32 0.0, %v1258
        %v1260 = vpop.f32.mrb[0].mxu0
        %v1261 = vpop.f32.mrb[0].mxu0
        %v1262 = vadd.f32 0.0, %v1261
        %v1263 = vpop.f32.mrb[0].mxu0
        %1264 = vmatprep.mubr.bf16.mxu0 0
        %1265 = vmatmul.mubr.bf16.gmra.mrb[0].mxu0 %v1170
        %v1266 = vpop.f32.mrb[0].mxu0
        %v1267 = vadd.f32 0.0, %v1266
        %v1268 = vpop.f32.mrb[0].mxu0
        %v1269 = vpop.f32.mrb[0].mxu0
        %v1270 = vadd.f32 0.0, %v1269
        %v1271 = vpop.f32.mrb[0].mxu0
        %1272 = vmatprep.mubr.bf16.mxu0 0
        %1273 = vmatmul.mubr.bf16.gmra.mrb[0].mxu0 %v1173
        %v1274 = vpop.f32.mrb[0].mxu0
        %v1275 = vadd.f32 0.0, %v1274
        %v1276 = vpop.f32.mrb[0].mxu0
        %v1277 = vpop.f32.mrb[0].mxu0
        %v1278 = vadd.f32 0.0, %v1277
        %v1279 = vpop.f32.mrb[0].mxu0
        %1280 = vmatprep.mubr.bf16.mxu0 0
        %1281 = vmatmul.mubr.bf16.gmra.mrb[0].mxu0 %v1176
        %v1282 = vpop.f32.mrb[0].mxu0
        %v1283 = vadd.f32 0.0, %v1282
        %v1284 = vpop.f32.mrb[0].mxu0
        %v1285 = vpop.f32.mrb[0].mxu0
        %v1286 = vadd.f32 0.0, %v1285
        %v1287 = vpop.f32.mrb[0].mxu0
        %1288 = vmatprep.mubr.bf16.mxu0 0
        %1289 = vmatmul.mubr.bf16.gmra.mrb[0].mxu0 %v1179
        %v1290 = vpop.f32.mrb[0].mxu0
        %v1291 = vadd.f32 0.0, %v1290
        %v1292 = vpop.f32.mrb[0].mxu0
        %v1293 = vpop.f32.mrb[0].mxu0
        %v1294 = vadd.f32 0.0, %v1293
        %v1295 = vpop.f32.mrb[0].mxu0
        %1296 = vmatprep.mubr.bf16.mxu0 0
        %1297 = vmatmul.mubr.bf16.gmra.mrb[0].mxu0 %v1182
        %v1298 = vpop.f32.mrb[0].mxu0
        %v1299 = vadd.f32 0.0, %v1298
        %v1300 = vpop.f32.mrb[0].mxu0
        %v1301 = vpop.f32.mrb[0].mxu0
        %v1302 = vadd.f32 0.0, %v1301
        %v1303 = vpop.f32.mrb[0].mxu0
        %1304 = vdwg.mxu0
        %v1305 = vmul.f32 %v1243, 0.17677669
        %v1306 = vmul.f32 %v1246, 0.17677669
        %v1307 = vmul.f32 %v1251, 0.17677669
        %v1308 = vmul.f32 %v1254, 0.17677669
        %v1309 = vmul.f32 %v1259, 0.17677669
        %v1310 = vmul.f32 %v1262, 0.17677669
        %v1311 = vmul.f32 %v1267, 0.17677669
        %v1312 = vmul.f32 %v1270, 0.17677669
        %v1313 = vmul.f32 %v1275, 0.17677669
        %v1314 = vmul.f32 %v1278, 0.17677669
        %v1315 = vmul.f32 %v1283, 0.17677669
        %v1316 = vmul.f32 %v1286, 0.17677669
        %v1317 = vmul.f32 %v1291, 0.17677669
        %v1318 = vmul.f32 %v1294, 0.17677669
        %v1319 = vmul.f32 %v1299, 0.17677669
        %v1320 = vmul.f32 %v1302, 0.17677669
        %v1321 = vsel %vm1127, %v1305, -inf
        %v1322 = vsel %vm1128, %v1306, -inf
        %v1323 = vsel %vm1129, %v1307, -inf
        %v1324 = vsel %vm1130, %v1308, -inf
        %v1325 = vsel %vm1131, %v1309, -inf
        %v1326 = vsel %vm1132, %v1310, -inf
        %v1327 = vsel %vm1133, %v1311, -inf
        %v1328 = vsel %vm1134, %v1312, -inf
        %v1329 = vsel %vm1135, %v1313, -inf
        %v1330 = vsel %vm1136, %v1314, -inf
        %v1331 = vsel %vm1137, %v1315, -inf
        %v1332 = vsel %vm1138, %v1316, -inf
        %v1333 = vsel %vm1139, %v1317, -inf
        %v1334 = vsel %vm1140, %v1318, -inf
        %v1335 = vsel %vm1141, %v1319, -inf
        %v1336 = vsel %vm1142, %v1320, -inf
        %1337 = vmax.xlane.f32.xlu0 %v1321
        %v1338 = vpop.xlane.xlu0 %1337
        %1339 = vmax.xlane.f32.xlu0 %v1322
        %v1340 = vpop.xlane.xlu0 %1339
        %1341 = vmax.xlane.f32.xlu0 %v1323
        %v1342 = vpop.xlane.xlu0 %1341
        %1343 = vmax.xlane.f32.xlu0 %v1324
        %v1344 = vpop.xlane.xlu0 %1343
        %1345 = vmax.xlane.f32.xlu0 %v1325
        %v1346 = vpop.xlane.xlu0 %1345
        %1347 = vmax.xlane.f32.xlu0 %v1326
        %v1348 = vpop.xlane.xlu0 %1347
        %1349 = vmax.xlane.f32.xlu0 %v1327
        %v1350 = vpop.xlane.xlu0 %1349
        %1351 = vmax.xlane.f32.xlu0 %v1328
        %v1352 = vpop.xlane.xlu0 %1351
        %1353 = vmax.xlane.f32.xlu0 %v1329
        %v1354 = vpop.xlane.xlu0 %1353
        %1355 = vmax.xlane.f32.xlu0 %v1330
        %v1356 = vpop.xlane.xlu0 %1355
        %1357 = vmax.xlane.f32.xlu0 %v1331
        %v1358 = vpop.xlane.xlu0 %1357
        %1359 = vmax.xlane.f32.xlu0 %v1332
        %v1360 = vpop.xlane.xlu0 %1359
        %1361 = vmax.xlane.f32.xlu0 %v1333
        %v1362 = vpop.xlane.xlu0 %1361
        %1363 = vmax.xlane.f32.xlu0 %v1334
        %v1364 = vpop.xlane.xlu0 %1363
        %1365 = vmax.xlane.f32.xlu0 %v1335
        %v1366 = vpop.xlane.xlu0 %1365
        %1367 = vmax.xlane.f32.xlu0 %v1336
        %v1368 = vpop.xlane.xlu0 %1367
        %v1369 = vsub.f32 %v1321, %v1338
        %v1370 = vsub.f32 %v1322, %v1340
        %v1371 = vsub.f32 %v1323, %v1342
        %v1372 = vsub.f32 %v1324, %v1344
        %v1373 = vsub.f32 %v1325, %v1346
        %v1374 = vsub.f32 %v1326, %v1348
        %v1375 = vsub.f32 %v1327, %v1350
        %v1376 = vsub.f32 %v1328, %v1352
        %v1377 = vsub.f32 %v1329, %v1354
        %v1378 = vsub.f32 %v1330, %v1356
        %v1379 = vsub.f32 %v1331, %v1358
        %v1380 = vsub.f32 %v1332, %v1360
        %v1381 = vsub.f32 %v1333, %v1362
        %v1382 = vsub.f32 %v1334, %v1364
        %v1383 = vsub.f32 %v1335, %v1366
        %v1384 = vsub.f32 %v1336, %v1368
        %v1385 = vmul.f32 %v1369, 1.442695
        %v1386 = vpow.pop %v1385
        %v1387 = vmul.f32 %v1370, 1.442695
        %v1388 = vpow.pop %v1387
        %v1389 = vmul.f32 %v1371, 1.442695
        %v1390 = vpow.pop %v1389
        %v1391 = vmul.f32 %v1372, 1.442695
        %v1392 = vpow.pop %v1391
        %v1393 = vmul.f32 %v1373, 1.442695
        %v1394 = vpow.pop %v1393
        %v1395 = vmul.f32 %v1374, 1.442695
        %v1396 = vpow.pop %v1395
        %v1397 = vmul.f32 %v1375, 1.442695
        %v1398 = vpow.pop %v1397
        %v1399 = vmul.f32 %v1376, 1.442695
        %v1400 = vpow.pop %v1399
        %v1401 = vmul.f32 %v1377, 1.442695
        %v1402 = vpow.pop %v1401
        %v1403 = vmul.f32 %v1378, 1.442695
        %v1404 = vpow.pop %v1403
        %v1405 = vmul.f32 %v1379, 1.442695
        %v1406 = vpow.pop %v1405
        %v1407 = vmul.f32 %v1380, 1.442695
        %v1408 = vpow.pop %v1407
        %v1409 = vmul.f32 %v1381, 1.442695
        %v1410 = vpow.pop %v1409
        %v1411 = vmul.f32 %v1382, 1.442695
        %v1412 = vpow.pop %v1411
        %v1413 = vmul.f32 %v1383, 1.442695
        %v1414 = vpow.pop %v1413
        %v1415 = vmul.f32 %v1384, 1.442695
        %v1416 = vpow.pop %v1415
        %1417 = vadd.xlane.f32.xlu0 %v1386
        %v1418 = vpop.xlane.xlu0 %1417
        %1419 = vadd.xlane.f32.xlu0 %v1388
        %v1420 = vpop.xlane.xlu0 %1419
        %1421 = vadd.xlane.f32.xlu0 %v1390
        %v1422 = vpop.xlane.xlu0 %1421
        %1423 = vadd.xlane.f32.xlu0 %v1392
        %v1424 = vpop.xlane.xlu0 %1423
        %1425 = vadd.xlane.f32.xlu0 %v1394
        %v1426 = vpop.xlane.xlu0 %1425
        %1427 = vadd.xlane.f32.xlu0 %v1396
        %v1428 = vpop.xlane.xlu0 %1427
        %1429 = vadd.xlane.f32.xlu0 %v1398
        %v1430 = vpop.xlane.xlu0 %1429
        %1431 = vadd.xlane.f32.xlu0 %v1400
        %v1432 = vpop.xlane.xlu0 %1431
        %1433 = vadd.xlane.f32.xlu0 %v1402
        %v1434 = vpop.xlane.xlu0 %1433
        %1435 = vadd.xlane.f32.xlu0 %v1404
        %v1436 = vpop.xlane.xlu0 %1435
        %1437 = vadd.xlane.f32.xlu0 %v1406
        %v1438 = vpop.xlane.xlu0 %1437
        %1439 = vadd.xlane.f32.xlu0 %v1408
        %v1440 = vpop.xlane.xlu0 %1439
        %1441 = vadd.xlane.f32.xlu0 %v1410
        %v1442 = vpop.xlane.xlu0 %1441
        %1443 = vadd.xlane.f32.xlu0 %v1412
        %v1444 = vpop.xlane.xlu0 %1443
        %1445 = vadd.xlane.f32.xlu0 %v1414
        %v1446 = vpop.xlane.xlu0 %1445
        %1447 = vadd.xlane.f32.xlu0 %v1416
        %v1448 = vpop.xlane.xlu0 %1447
        %v1449 = vrcp.pop %v1418
        %v1450 = vrcp.pop %v1420
        %v1451 = vrcp.pop %v1422
        %v1452 = vrcp.pop %v1424
        %v1453 = vrcp.pop %v1426
        %v1454 = vrcp.pop %v1428
        %v1455 = vrcp.pop %v1430
        %v1456 = vrcp.pop %v1432
        %v1457 = vrcp.pop %v1434
        %v1458 = vrcp.pop %v1436
        %v1459 = vrcp.pop %v1438
        %v1460 = vrcp.pop %v1440
        %v1461 = vrcp.pop %v1442
        %v1462 = vrcp.pop %v1444
        %v1463 = vrcp.pop %v1446
        %v1464 = vrcp.pop %v1448
        %v1465 = vmul.f32 %v1386, %v1449
        %v1466 = vmul.f32 %v1388, %v1450
        %v1467 = vmul.f32 %v1390, %v1451
        %v1468 = vmul.f32 %v1392, %v1452
        %v1469 = vmul.f32 %v1394, %v1453
        %v1470 = vmul.f32 %v1396, %v1454
        %v1471 = vmul.f32 %v1398, %v1455
        %v1472 = vmul.f32 %v1400, %v1456
        %v1473 = vmul.f32 %v1402, %v1457
        %v1474 = vmul.f32 %v1404, %v1458
        %v1475 = vmul.f32 %v1406, %v1459
        %v1476 = vmul.f32 %v1408, %v1460
        %v1477 = vmul.f32 %v1410, %v1461
        %v1478 = vmul.f32 %v1412, %v1462
        %v1479 = vmul.f32 %v1414, %v1463
        %v1480 = vmul.f32 %v1416, %v1464
        %v1481 = vpack.c.bf16 %v1466, %v1465
        %v1482 = vpack.c.bf16 %v1468, %v1467
        %v1483 = vpack.c.bf16 %v1470, %v1469
        %v1484 = vpack.c.bf16 %v1472, %v1471
        %v1485 = vpack.c.bf16 %v1474, %v1473
        %v1486 = vpack.c.bf16 %v1476, %v1475
        %v1487 = vpack.c.bf16 %v1478, %v1477
        %v1488 = vpack.c.bf16 %v1480, %v1479
        %v1489 = vpack.c.bf16 %v1049, %v1046
        %v1490 = vpack.c.bf16 %v1057, %v1054
        %v1491 = vpack.c.bf16 %v1065, %v1062
        %v1492 = vpack.c.bf16 %v1073, %v1070
        %v1493 = vpack.c.bf16 %v1081, %v1078
        %v1494 = vpack.c.bf16 %v1089, %v1086
        %v1495 = vpack.c.bf16 %v1097, %v1094
        %v1496 = vpack.c.bf16 %v1105, %v1102
        %1497 = vmatprep.subr.bf16.mxu0 0
        %1498 = vmatpush1.bf16.msra.mxu0 %v1489
        %1499 = vmatprep.subr.bf16.mxu0 0
        %1500 = vmatpush1.bf16.msra.mxu0 %v1490
        %1501 = vmatprep.subr.bf16.mxu0 0
        %1502 = vmatpush1.bf16.msra.mxu0 %v1491
        %1503 = vmatprep.subr.bf16.mxu0 0
        %1504 = vmatpush1.bf16.msra.mxu0 %v1492
        %1505 = vmatprep.subr.bf16.mxu0 0
        %1506 = vmatpush1.bf16.msra.mxu0 %v1493
        %1507 = vmatprep.subr.bf16.mxu0 0
        %1508 = vmatpush1.bf16.msra.mxu0 %v1494
        %1509 = vmatprep.subr.bf16.mxu0 0
        %1510 = vmatpush1.bf16.msra.mxu0 %v1495
        %1511 = vmatprep.subr.bf16.mxu0 0
        %1512 = vmatpush1.bf16.msra.mxu0 %v1496
        %1513 = vmatprep.subr.bf16.mxu0 0
        %1514 = vmatpush1.bf16.msra.mxu0 0
        %1515 = vmatprep.subr.bf16.mxu0 0
        %1516 = vmatpush1.bf16.msra.mxu0 0
        %1517 = vmatprep.subr.bf16.mxu0 0
        %1518 = vmatpush1.bf16.msra.mxu0 0
        %1519 = vmatprep.subr.bf16.mxu0 0
        %1520 = vmatpush1.bf16.msra.mxu0 0
        %1521 = vmatprep.subr.bf16.mxu0 0
        %1522 = vmatpush1.bf16.msra.mxu0 0
        %1523 = vmatprep.subr.bf16.mxu0 0
        %1524 = vmatpush1.bf16.msra.mxu0 0
        %1525 = vmatprep.subr.bf16.mxu0 0
        %1526 = vmatpush1.bf16.msra.mxu0 0
        %1527 = vmatprep.subr.bf16.mxu0 0
        %1528 = vmatpush1.bf16.msra.mxu0 0
        %1529 = vmatprep.mubr.bf16.mxu0 0
        %1530 = vmatmul.mubr.bf16.gmra.mrb[0].mxu0 %v1481
        %v1531 = vpop.f32.mrb[0].mxu0
        %v1532 = vadd.f32 0.0, %v1531
        %v1533 = vpop.f32.mrb[0].mxu0
        %v1534 = vpop.f32.mrb[0].mxu0
        %v1535 = vadd.f32 0.0, %v1534
        %v1536 = vpop.f32.mrb[0].mxu0
        %1537 = vmatprep.mubr.bf16.mxu0 0
        %1538 = vmatmul.mubr.bf16.gmra.mrb[0].mxu0 %v1482
        %v1539 = vpop.f32.mrb[0].mxu0
        %v1540 = vadd.f32 0.0, %v1539
        %v1541 = vpop.f32.mrb[0].mxu0
        %v1542 = vpop.f32.mrb[0].mxu0
        %v1543 = vadd.f32 0.0, %v1542
        %v1544 = vpop.f32.mrb[0].mxu0
        %1545 = vmatprep.mubr.bf16.mxu0 0
        %1546 = vmatmul.mubr.bf16.gmra.mrb[0].mxu0 %v1483
        %v1547 = vpop.f32.mrb[0].mxu0
        %v1548 = vadd.f32 0.0, %v1547
        %v1549 = vpop.f32.mrb[0].mxu0
        %v1550 = vpop.f32.mrb[0].mxu0
        %v1551 = vadd.f32 0.0, %v1550
        %v1552 = vpop.f32.mrb[0].mxu0
        %1553 = vmatprep.mubr.bf16.mxu0 0
        %1554 = vmatmul.mubr.bf16.gmra.mrb[0].mxu0 %v1484
        %v1555 = vpop.f32.mrb[0].mxu0
        %v1556 = vadd.f32 0.0, %v1555
        %v1557 = vpop.f32.mrb[0].mxu0
        %v1558 = vpop.f32.mrb[0].mxu0
        %v1559 = vadd.f32 0.0, %v1558
        %v1560 = vpop.f32.mrb[0].mxu0
        %1561 = vmatprep.mubr.bf16.mxu0 0
        %1562 = vmatmul.mubr.bf16.gmra.mrb[0].mxu0 %v1485
        %v1563 = vpop.f32.mrb[0].mxu0
        %v1564 = vadd.f32 0.0, %v1563
        %v1565 = vpop.f32.mrb[0].mxu0
        %v1566 = vpop.f32.mrb[0].mxu0
        %v1567 = vadd.f32 0.0, %v1566
        %v1568 = vpop.f32.mrb[0].mxu0
        %1569 = vmatprep.mubr.bf16.mxu0 0
        %1570 = vmatmul.mubr.bf16.gmra.mrb[0].mxu0 %v1486
        %v1571 = vpop.f32.mrb[0].mxu0
        %v1572 = vadd.f32 0.0, %v1571
        %v1573 = vpop.f32.mrb[0].mxu0
        %v1574 = vpop.f32.mrb[0].mxu0
        %v1575 = vadd.f32 0.0, %v1574
        %v1576 = vpop.f32.mrb[0].mxu0
        %1577 = vmatprep.mubr.bf16.mxu0 0
        %1578 = vmatmul.mubr.bf16.gmra.mrb[0].mxu0 %v1487
        %v1579 = vpop.f32.mrb[0].mxu0
        %v1580 = vadd.f32 0.0, %v1579
        %v1581 = vpop.f32.mrb[0].mxu0
        %v1582 = vpop.f32.mrb[0].mxu0
        %v1583 = vadd.f32 0.0, %v1582
        %v1584 = vpop.f32.mrb[0].mxu0
        %1585 = vmatprep.mubr.bf16.mxu0 0
        %1586 = vmatmul.mubr.bf16.gmra.mrb[0].mxu0 %v1488
        %v1587 = vpop.f32.mrb[0].mxu0
        %v1588 = vadd.f32 0.0, %v1587
        %v1589 = vpop.f32.mrb[0].mxu0
        %v1590 = vpop.f32.mrb[0].mxu0
        %v1591 = vadd.f32 0.0, %v1590
        %v1592 = vpop.f32.mrb[0].mxu0
        %1593 = vdwg.mxu0
        %1602 = vrot.lane.b32.xlu0 %v1143, 96
        %v1603 = vpop.permute.xlu0 %1602
        %1604 = vrot.lane.b32.xlu0 %v1144, 96
        %v1605 = vpop.permute.xlu0 %1604
        %1606 = vrot.lane.b32.xlu0 %v1145, 96
        %v1607 = vpop.permute.xlu0 %1606
        %1608 = vrot.lane.b32.xlu0 %v1146, 96
        %v1609 = vpop.permute.xlu0 %1608
        %1610 = vrot.lane.b32.xlu0 %v1147, 96
        %v1611 = vpop.permute.xlu0 %1610
        %1612 = vrot.lane.b32.xlu0 %v1148, 96
        %v1613 = vpop.permute.xlu0 %1612
        %1614 = vrot.lane.b32.xlu0 %v1149, 96
        %v1615 = vpop.permute.xlu0 %1614
        %1616 = vrot.lane.b32.xlu0 %v1150, 96
        %v1617 = vpop.permute.xlu0 %1616
        %1626 = vrot.lane.b32.xlu0 %v1151, 96
        %v1627 = vpop.permute.xlu0 %1626
        %1628 = vrot.lane.b32.xlu0 %v1152, 96
        %v1629 = vpop.permute.xlu0 %1628
        %1630 = vrot.lane.b32.xlu0 %v1153, 96
        %v1631 = vpop.permute.xlu0 %1630
        %1632 = vrot.lane.b32.xlu0 %v1154, 96
        %v1633 = vpop.permute.xlu0 %1632
        %1634 = vrot.lane.b32.xlu0 %v1155, 96
        %v1635 = vpop.permute.xlu0 %1634
        %1636 = vrot.lane.b32.xlu0 %v1156, 96
        %v1637 = vpop.permute.xlu0 %1636
        %1638 = vrot.lane.b32.xlu0 %v1157, 96
        %v1639 = vpop.permute.xlu0 %1638
        %1640 = vrot.lane.b32.xlu0 %v1158, 96
        %v1641 = vpop.permute.xlu0 %1640
        %v1643 = vsel %vm1159, %v1603, 0
        %v1646 = vsel %vm1159, %v1605, 0
        %v1649 = vsel %vm1159, %v1607, 0
        %v1652 = vsel %vm1159, %v1609, 0
        %v1655 = vsel %vm1159, %v1611, 0
        %v1658 = vsel %vm1159, %v1613, 0
        %v1661 = vsel %vm1159, %v1615, 0
        %v1664 = vsel %vm1159, %v1617, 0
        %v1667 = vsel %vm1159, %v1627, 0
        %v1670 = vsel %vm1159, %v1629, 0
        %v1673 = vsel %vm1159, %v1631, 0
        %v1676 = vsel %vm1159, %v1633, 0
        %v1679 = vsel %vm1159, %v1635, 0
        %v1682 = vsel %vm1159, %v1637, 0
        %v1685 = vsel %vm1159, %v1639, 0
        %v1688 = vsel %vm1159, %v1641, 0
        %1690 = vmatprep.subr.bf16.mxu0 0
        %1691 = vmatpush1.bf16.xpose.msra.mxu0 %v1667
        %1692 = vmatprep.subr.bf16.mxu0 0
        %1693 = vmatpush1.bf16.xpose.msra.mxu0 %v1670
        %1694 = vmatprep.subr.bf16.mxu0 0
        %1695 = vmatpush1.bf16.xpose.msra.mxu0 %v1673
        %1696 = vmatprep.subr.bf16.mxu0 0
        %1697 = vmatpush1.bf16.xpose.msra.mxu0 %v1676
        %1698 = vmatprep.subr.bf16.mxu0 0
        %1699 = vmatpush1.bf16.xpose.msra.mxu0 %v1679
        %1700 = vmatprep.subr.bf16.mxu0 0
        %1701 = vmatpush1.bf16.xpose.msra.mxu0 %v1682
        %1702 = vmatprep.subr.bf16.mxu0 0
        %1703 = vmatpush1.bf16.xpose.msra.mxu0 %v1685
        %1704 = vmatprep.subr.bf16.mxu0 0
        %1705 = vmatpush1.bf16.xpose.msra.mxu0 %v1688
        %1706 = vmatprep.subr.bf16.mxu0 0
        %1707 = vmatpush1.bf16.xpose.msra.mxu0 0
        %1708 = vmatprep.subr.bf16.mxu0 0
        %1709 = vmatpush1.bf16.xpose.msra.mxu0 0
        %1710 = vmatprep.subr.bf16.mxu0 0
        %1711 = vmatpush1.bf16.xpose.msra.mxu0 0
        %1712 = vmatprep.subr.bf16.mxu0 0
        %1713 = vmatpush1.bf16.xpose.msra.mxu0 0
        %1714 = vmatprep.subr.bf16.mxu0 0
        %1715 = vmatpush1.bf16.xpose.msra.mxu0 0
        %1716 = vmatprep.subr.bf16.mxu0 0
        %1717 = vmatpush1.bf16.xpose.msra.mxu0 0
        %1718 = vmatprep.subr.bf16.mxu0 0
        %1719 = vmatpush1.bf16.xpose.msra.mxu0 0
        %1720 = vmatprep.subr.bf16.mxu0 0
        %1721 = vmatpush1.bf16.xpose.msra.mxu0 0
        %1722 = vmatprep.mubr.bf16.mxu0 0
        %1723 = vmatmul.mubr.bf16.gmra.mrb[0].mxu0 %v1643
        %v1724 = vpop.f32.mrb[0].mxu0
        %v1725 = vadd.f32 0.0, %v1724
        %v1726 = vpop.f32.mrb[0].mxu0
        %v1727 = vpop.f32.mrb[0].mxu0
        %v1728 = vadd.f32 0.0, %v1727
        %v1729 = vpop.f32.mrb[0].mxu0
        %1730 = vmatprep.mubr.bf16.mxu0 0
        %1731 = vmatmul.mubr.bf16.gmra.mrb[0].mxu0 %v1646
        %v1732 = vpop.f32.mrb[0].mxu0
        %v1733 = vadd.f32 0.0, %v1732
        %v1734 = vpop.f32.mrb[0].mxu0
        %v1735 = vpop.f32.mrb[0].mxu0
        %v1736 = vadd.f32 0.0, %v1735
        %v1737 = vpop.f32.mrb[0].mxu0
        %1738 = vmatprep.mubr.bf16.mxu0 0
        %1739 = vmatmul.mubr.bf16.gmra.mrb[0].mxu0 %v1649
        %v1740 = vpop.f32.mrb[0].mxu0
        %v1741 = vadd.f32 0.0, %v1740
        %v1742 = vpop.f32.mrb[0].mxu0
        %v1743 = vpop.f32.mrb[0].mxu0
        %v1744 = vadd.f32 0.0, %v1743
        %v1745 = vpop.f32.mrb[0].mxu0
        %1746 = vmatprep.mubr.bf16.mxu0 0
        %1747 = vmatmul.mubr.bf16.gmra.mrb[0].mxu0 %v1652
        %v1748 = vpop.f32.mrb[0].mxu0
        %v1749 = vadd.f32 0.0, %v1748
        %v1750 = vpop.f32.mrb[0].mxu0
        %v1751 = vpop.f32.mrb[0].mxu0
        %v1752 = vadd.f32 0.0, %v1751
        %v1753 = vpop.f32.mrb[0].mxu0
        %1754 = vmatprep.mubr.bf16.mxu0 0
        %1755 = vmatmul.mubr.bf16.gmra.mrb[0].mxu0 %v1655
        %v1756 = vpop.f32.mrb[0].mxu0
        %v1757 = vadd.f32 0.0, %v1756
        %v1758 = vpop.f32.mrb[0].mxu0
        %v1759 = vpop.f32.mrb[0].mxu0
        %v1760 = vadd.f32 0.0, %v1759
        %v1761 = vpop.f32.mrb[0].mxu0
        %1762 = vmatprep.mubr.bf16.mxu0 0
        %1763 = vmatmul.mubr.bf16.gmra.mrb[0].mxu0 %v1658
        %v1764 = vpop.f32.mrb[0].mxu0
        %v1765 = vadd.f32 0.0, %v1764
        %v1766 = vpop.f32.mrb[0].mxu0
        %v1767 = vpop.f32.mrb[0].mxu0
        %v1768 = vadd.f32 0.0, %v1767
        %v1769 = vpop.f32.mrb[0].mxu0
        %1770 = vmatprep.mubr.bf16.mxu0 0
        %1771 = vmatmul.mubr.bf16.gmra.mrb[0].mxu0 %v1661
        %v1772 = vpop.f32.mrb[0].mxu0
        %v1773 = vadd.f32 0.0, %v1772
        %v1774 = vpop.f32.mrb[0].mxu0
        %v1775 = vpop.f32.mrb[0].mxu0
        %v1776 = vadd.f32 0.0, %v1775
        %v1777 = vpop.f32.mrb[0].mxu0
        %1778 = vmatprep.mubr.bf16.mxu0 0
        %1779 = vmatmul.mubr.bf16.gmra.mrb[0].mxu0 %v1664
        %v1780 = vpop.f32.mrb[0].mxu0
        %v1781 = vadd.f32 0.0, %v1780
        %v1782 = vpop.f32.mrb[0].mxu0
        %v1783 = vpop.f32.mrb[0].mxu0
        %v1784 = vadd.f32 0.0, %v1783
        %v1785 = vpop.f32.mrb[0].mxu0
        %1786 = vdwg.mxu0
        %v1787 = vmul.f32 %v1725, 0.17677669
        %v1788 = vmul.f32 %v1728, 0.17677669
        %v1789 = vmul.f32 %v1733, 0.17677669
        %v1790 = vmul.f32 %v1736, 0.17677669
        %v1791 = vmul.f32 %v1741, 0.17677669
        %v1792 = vmul.f32 %v1744, 0.17677669
        %v1793 = vmul.f32 %v1749, 0.17677669
        %v1794 = vmul.f32 %v1752, 0.17677669
        %v1795 = vmul.f32 %v1757, 0.17677669
        %v1796 = vmul.f32 %v1760, 0.17677669
        %v1797 = vmul.f32 %v1765, 0.17677669
        %v1798 = vmul.f32 %v1768, 0.17677669
        %v1799 = vmul.f32 %v1773, 0.17677669
        %v1800 = vmul.f32 %v1776, 0.17677669
        %v1801 = vmul.f32 %v1781, 0.17677669
        %v1802 = vmul.f32 %v1784, 0.17677669
        %v1803 = vsel %vm1127, %v1787, -inf
        %v1804 = vsel %vm1128, %v1788, -inf
        %v1805 = vsel %vm1129, %v1789, -inf
        %v1806 = vsel %vm1130, %v1790, -inf
        %v1807 = vsel %vm1131, %v1791, -inf
        %v1808 = vsel %vm1132, %v1792, -inf
        %v1809 = vsel %vm1133, %v1793, -inf
        %v1810 = vsel %vm1134, %v1794, -inf
        %v1811 = vsel %vm1135, %v1795, -inf
        %v1812 = vsel %vm1136, %v1796, -inf
        %v1813 = vsel %vm1137, %v1797, -inf
        %v1814 = vsel %vm1138, %v1798, -inf
        %v1815 = vsel %vm1139, %v1799, -inf
        %v1816 = vsel %vm1140, %v1800, -inf
        %v1817 = vsel %vm1141, %v1801, -inf
        %v1818 = vsel %vm1142, %v1802, -inf
        %1819 = vmax.xlane.f32.xlu0 %v1803
        %v1820 = vpop.xlane.xlu0 %1819
        %1821 = vmax.xlane.f32.xlu0 %v1804
        %v1822 = vpop.xlane.xlu0 %1821
        %1823 = vmax.xlane.f32.xlu0 %v1805
        %v1824 = vpop.xlane.xlu0 %1823
        %1825 = vmax.xlane.f32.xlu0 %v1806
        %v1826 = vpop.xlane.xlu0 %1825
        %1827 = vmax.xlane.f32.xlu0 %v1807
        %v1828 = vpop.xlane.xlu0 %1827
        %1829 = vmax.xlane.f32.xlu0 %v1808
        %v1830 = vpop.xlane.xlu0 %1829
        %1831 = vmax.xlane.f32.xlu0 %v1809
        %v1832 = vpop.xlane.xlu0 %1831
        %1833 = vmax.xlane.f32.xlu0 %v1810
        %v1834 = vpop.xlane.xlu0 %1833
        %1835 = vmax.xlane.f32.xlu0 %v1811
        %v1836 = vpop.xlane.xlu0 %1835
        %1837 = vmax.xlane.f32.xlu0 %v1812
        %v1838 = vpop.xlane.xlu0 %1837
        %1839 = vmax.xlane.f32.xlu0 %v1813
        %v1840 = vpop.xlane.xlu0 %1839
        %1841 = vmax.xlane.f32.xlu0 %v1814
        %v1842 = vpop.xlane.xlu0 %1841
        %1843 = vmax.xlane.f32.xlu0 %v1815
        %v1844 = vpop.xlane.xlu0 %1843
        %1845 = vmax.xlane.f32.xlu0 %v1816
        %v1846 = vpop.xlane.xlu0 %1845
        %1847 = vmax.xlane.f32.xlu0 %v1817
        %v1848 = vpop.xlane.xlu0 %1847
        %1849 = vmax.xlane.f32.xlu0 %v1818
        %v1850 = vpop.xlane.xlu0 %1849
        %v1851 = vsub.f32 %v1803, %v1820
        %v1852 = vsub.f32 %v1804, %v1822
        %v1853 = vsub.f32 %v1805, %v1824
        %v1854 = vsub.f32 %v1806, %v1826
        %v1855 = vsub.f32 %v1807, %v1828
        %v1856 = vsub.f32 %v1808, %v1830
        %v1857 = vsub.f32 %v1809, %v1832
        %v1858 = vsub.f32 %v1810, %v1834
        %v1859 = vsub.f32 %v1811, %v1836
        %v1860 = vsub.f32 %v1812, %v1838
        %v1861 = vsub.f32 %v1813, %v1840
        %v1862 = vsub.f32 %v1814, %v1842
        %v1863 = vsub.f32 %v1815, %v1844
        %v1864 = vsub.f32 %v1816, %v1846
        %v1865 = vsub.f32 %v1817, %v1848
        %v1866 = vsub.f32 %v1818, %v1850
        %v1867 = vmul.f32 %v1851, 1.442695
        %v1868 = vpow.pop %v1867
        %v1869 = vmul.f32 %v1852, 1.442695
        %v1870 = vpow.pop %v1869
        %v1871 = vmul.f32 %v1853, 1.442695
        %v1872 = vpow.pop %v1871
        %v1873 = vmul.f32 %v1854, 1.442695
        %v1874 = vpow.pop %v1873
        %v1875 = vmul.f32 %v1855, 1.442695
        %v1876 = vpow.pop %v1875
        %v1877 = vmul.f32 %v1856, 1.442695
        %v1878 = vpow.pop %v1877
        %v1879 = vmul.f32 %v1857, 1.442695
        %v1880 = vpow.pop %v1879
        %v1881 = vmul.f32 %v1858, 1.442695
        %v1882 = vpow.pop %v1881
        %v1883 = vmul.f32 %v1859, 1.442695
        %v1884 = vpow.pop %v1883
        %v1885 = vmul.f32 %v1860, 1.442695
        %v1886 = vpow.pop %v1885
        %v1887 = vmul.f32 %v1861, 1.442695
        %v1888 = vpow.pop %v1887
        %v1889 = vmul.f32 %v1862, 1.442695
        %v1890 = vpow.pop %v1889
        %v1891 = vmul.f32 %v1863, 1.442695
        %v1892 = vpow.pop %v1891
        %v1893 = vmul.f32 %v1864, 1.442695
        %v1894 = vpow.pop %v1893
        %v1895 = vmul.f32 %v1865, 1.442695
        %v1896 = vpow.pop %v1895
        %v1897 = vmul.f32 %v1866, 1.442695
        %v1898 = vpow.pop %v1897
        %1899 = vadd.xlane.f32.xlu0 %v1868
        %v1900 = vpop.xlane.xlu0 %1899
        %1901 = vadd.xlane.f32.xlu0 %v1870
        %v1902 = vpop.xlane.xlu0 %1901
        %1903 = vadd.xlane.f32.xlu0 %v1872
        %v1904 = vpop.xlane.xlu0 %1903
        %1905 = vadd.xlane.f32.xlu0 %v1874
        %v1906 = vpop.xlane.xlu0 %1905
        %1907 = vadd.xlane.f32.xlu0 %v1876
        %v1908 = vpop.xlane.xlu0 %1907
        %1909 = vadd.xlane.f32.xlu0 %v1878
        %v1910 = vpop.xlane.xlu0 %1909
        %1911 = vadd.xlane.f32.xlu0 %v1880
        %v1912 = vpop.xlane.xlu0 %1911
        %1913 = vadd.xlane.f32.xlu0 %v1882
        %v1914 = vpop.xlane.xlu0 %1913
        %1915 = vadd.xlane.f32.xlu0 %v1884
        %v1916 = vpop.xlane.xlu0 %1915
        %1917 = vadd.xlane.f32.xlu0 %v1886
        %v1918 = vpop.xlane.xlu0 %1917
        %1919 = vadd.xlane.f32.xlu0 %v1888
        %v1920 = vpop.xlane.xlu0 %1919
        %1921 = vadd.xlane.f32.xlu0 %v1890
        %v1922 = vpop.xlane.xlu0 %1921
        %1923 = vadd.xlane.f32.xlu0 %v1892
        %v1924 = vpop.xlane.xlu0 %1923
        %1925 = vadd.xlane.f32.xlu0 %v1894
        %v1926 = vpop.xlane.xlu0 %1925
        %1927 = vadd.xlane.f32.xlu0 %v1896
        %v1928 = vpop.xlane.xlu0 %1927
        %1929 = vadd.xlane.f32.xlu0 %v1898
        %v1930 = vpop.xlane.xlu0 %1929
        %v1931 = vrcp.pop %v1900
        %v1932 = vrcp.pop %v1902
        %v1933 = vrcp.pop %v1904
        %v1934 = vrcp.pop %v1906
        %v1935 = vrcp.pop %v1908
        %v1936 = vrcp.pop %v1910
        %v1937 = vrcp.pop %v1912
        %v1938 = vrcp.pop %v1914
        %v1939 = vrcp.pop %v1916
        %v1940 = vrcp.pop %v1918
        %v1941 = vrcp.pop %v1920
        %v1942 = vrcp.pop %v1922
        %v1943 = vrcp.pop %v1924
        %v1944 = vrcp.pop %v1926
        %v1945 = vrcp.pop %v1928
        %v1946 = vrcp.pop %v1930
        %v1947 = vmul.f32 %v1868, %v1931
        %v1948 = vmul.f32 %v1870, %v1932
        %v1949 = vmul.f32 %v1872, %v1933
        %v1950 = vmul.f32 %v1874, %v1934
        %v1951 = vmul.f32 %v1876, %v1935
        %v1952 = vmul.f32 %v1878, %v1936
        %v1953 = vmul.f32 %v1880, %v1937
        %v1954 = vmul.f32 %v1882, %v1938
        %v1955 = vmul.f32 %v1884, %v1939
        %v1956 = vmul.f32 %v1886, %v1940
        %v1957 = vmul.f32 %v1888, %v1941
        %v1958 = vmul.f32 %v1890, %v1942
        %v1959 = vmul.f32 %v1892, %v1943
        %v1960 = vmul.f32 %v1894, %v1944
        %v1961 = vmul.f32 %v1896, %v1945
        %v1962 = vmul.f32 %v1898, %v1946
        %v1963 = vpack.c.bf16 %v1948, %v1947
        %v1964 = vpack.c.bf16 %v1950, %v1949
        %v1965 = vpack.c.bf16 %v1952, %v1951
        %v1966 = vpack.c.bf16 %v1954, %v1953
        %v1967 = vpack.c.bf16 %v1956, %v1955
        %v1968 = vpack.c.bf16 %v1958, %v1957
        %v1969 = vpack.c.bf16 %v1960, %v1959
        %v1970 = vpack.c.bf16 %v1962, %v1961
        %1979 = vrot.lane.b32.xlu0 %v1489, 96
        %v1980 = vpop.permute.xlu0 %1979
        %1981 = vrot.lane.b32.xlu0 %v1490, 96
        %v1982 = vpop.permute.xlu0 %1981
        %1983 = vrot.lane.b32.xlu0 %v1491, 96
        %v1984 = vpop.permute.xlu0 %1983
        %1985 = vrot.lane.b32.xlu0 %v1492, 96
        %v1986 = vpop.permute.xlu0 %1985
        %1987 = vrot.lane.b32.xlu0 %v1493, 96
        %v1988 = vpop.permute.xlu0 %1987
        %1989 = vrot.lane.b32.xlu0 %v1494, 96
        %v1990 = vpop.permute.xlu0 %1989
        %1991 = vrot.lane.b32.xlu0 %v1495, 96
        %v1992 = vpop.permute.xlu0 %1991
        %1993 = vrot.lane.b32.xlu0 %v1496, 96
        %v1994 = vpop.permute.xlu0 %1993
        %2003 = vmatprep.subr.bf16.mxu0 0
        %2004 = vmatpush1.bf16.msra.mxu0 %v1980
        %2005 = vmatprep.subr.bf16.mxu0 0
        %2006 = vmatpush1.bf16.msra.mxu0 %v1982
        %2007 = vmatprep.subr.bf16.mxu0 0
        %2008 = vmatpush1.bf16.msra.mxu0 %v1984
        %2009 = vmatprep.subr.bf16.mxu0 0
        %2010 = vmatpush1.bf16.msra.mxu0 %v1986
        %2011 = vmatprep.subr.bf16.mxu0 0
        %2012 = vmatpush1.bf16.msra.mxu0 %v1988
        %2013 = vmatprep.subr.bf16.mxu0 0
        %2014 = vmatpush1.bf16.msra.mxu0 %v1990
        %2015 = vmatprep.subr.bf16.mxu0 0
        %2016 = vmatpush1.bf16.msra.mxu0 %v1992
        %2017 = vmatprep.subr.bf16.mxu0 0
        %2018 = vmatpush1.bf16.msra.mxu0 %v1994
        %2019 = vmatprep.subr.bf16.mxu0 0
        %2020 = vmatpush1.bf16.msra.mxu0 0
        %2021 = vmatprep.subr.bf16.mxu0 0
        %2022 = vmatpush1.bf16.msra.mxu0 0
        %2023 = vmatprep.subr.bf16.mxu0 0
        %2024 = vmatpush1.bf16.msra.mxu0 0
        %2025 = vmatprep.subr.bf16.mxu0 0
        %2026 = vmatpush1.bf16.msra.mxu0 0
        %2027 = vmatprep.subr.bf16.mxu0 0
        %2028 = vmatpush1.bf16.msra.mxu0 0
        %2029 = vmatprep.subr.bf16.mxu0 0
        %2030 = vmatpush1.bf16.msra.mxu0 0
        %2031 = vmatprep.subr.bf16.mxu0 0
        %2032 = vmatpush1.bf16.msra.mxu0 0
        %2033 = vmatprep.subr.bf16.mxu0 0
        %2034 = vmatpush1.bf16.msra.mxu0 0
        %2035 = vmatprep.mubr.bf16.mxu0 0
        %2036 = vmatmul.mubr.bf16.gmra.mrb[0].mxu0 %v1963
        %v2037 = vpop.f32.mrb[0].mxu0
        %v2038 = vadd.f32 0.0, %v2037
        %v2039 = vpop.f32.mrb[0].mxu0
        %v2040 = vpop.f32.mrb[0].mxu0
        %v2041 = vadd.f32 0.0, %v2040
        %v2042 = vpop.f32.mrb[0].mxu0
        %2043 = vmatprep.mubr.bf16.mxu0 0
        %2044 = vmatmul.mubr.bf16.gmra.mrb[0].mxu0 %v1964
        %v2045 = vpop.f32.mrb[0].mxu0
        %v2046 = vadd.f32 0.0, %v2045
        %v2047 = vpop.f32.mrb[0].mxu0
        %v2048 = vpop.f32.mrb[0].mxu0
        %v2049 = vadd.f32 0.0, %v2048
        %v2050 = vpop.f32.mrb[0].mxu0
        %2051 = vmatprep.mubr.bf16.mxu0 0
        %2052 = vmatmul.mubr.bf16.gmra.mrb[0].mxu0 %v1965
        %v2053 = vpop.f32.mrb[0].mxu0
        %v2054 = vadd.f32 0.0, %v2053
        %v2055 = vpop.f32.mrb[0].mxu0
        %v2056 = vpop.f32.mrb[0].mxu0
        %v2057 = vadd.f32 0.0, %v2056
        %v2058 = vpop.f32.mrb[0].mxu0
        %2059 = vmatprep.mubr.bf16.mxu0 0
        %2060 = vmatmul.mubr.bf16.gmra.mrb[0].mxu0 %v1966
        %v2061 = vpop.f32.mrb[0].mxu0
        %v2062 = vadd.f32 0.0, %v2061
        %v2063 = vpop.f32.mrb[0].mxu0
        %v2064 = vpop.f32.mrb[0].mxu0
        %v2065 = vadd.f32 0.0, %v2064
        %v2066 = vpop.f32.mrb[0].mxu0
        %2067 = vmatprep.mubr.bf16.mxu0 0
        %2068 = vmatmul.mubr.bf16.gmra.mrb[0].mxu0 %v1967
        %v2069 = vpop.f32.mrb[0].mxu0
        %v2070 = vadd.f32 0.0, %v2069
        %v2071 = vpop.f32.mrb[0].mxu0
        %v2072 = vpop.f32.mrb[0].mxu0
        %v2073 = vadd.f32 0.0, %v2072
        %v2074 = vpop.f32.mrb[0].mxu0
        %2075 = vmatprep.mubr.bf16.mxu0 0
        %2076 = vmatmul.mubr.bf16.gmra.mrb[0].mxu0 %v1968
        %v2077 = vpop.f32.mrb[0].mxu0
        %v2078 = vadd.f32 0.0, %v2077
        %v2079 = vpop.f32.mrb[0].mxu0
        %v2080 = vpop.f32.mrb[0].mxu0
        %v2081 = vadd.f32 0.0, %v2080
        %v2082 = vpop.f32.mrb[0].mxu0
        %2083 = vmatprep.mubr.bf16.mxu0 0
        %2084 = vmatmul.mubr.bf16.gmra.mrb[0].mxu0 %v1969
        %v2085 = vpop.f32.mrb[0].mxu0
        %v2086 = vadd.f32 0.0, %v2085
        %v2087 = vpop.f32.mrb[0].mxu0
        %v2088 = vpop.f32.mrb[0].mxu0
        %v2089 = vadd.f32 0.0, %v2088
        %v2090 = vpop.f32.mrb[0].mxu0
        %2091 = vmatprep.mubr.bf16.mxu0 0
        %2092 = vmatmul.mubr.bf16.gmra.mrb[0].mxu0 %v1970
        %v2093 = vpop.f32.mrb[0].mxu0
        %v2094 = vadd.f32 0.0, %v2093
        %v2095 = vpop.f32.mrb[0].mxu0
        %v2096 = vpop.f32.mrb[0].mxu0
        %v2097 = vadd.f32 0.0, %v2096
        %v2098 = vpop.f32.mrb[0].mxu0
        %2099 = vdwg.mxu0
        %2100 = vrot.lane.b32.xlu0 %v1143, 64
        %v2101 = vpop.permute.xlu0 %2100
        %2102 = vrot.lane.b32.xlu0 %v1144, 64
        %v2103 = vpop.permute.xlu0 %2102
        %2104 = vrot.lane.b32.xlu0 %v1145, 64
        %v2105 = vpop.permute.xlu0 %2104
        %2106 = vrot.lane.b32.xlu0 %v1146, 64
        %v2107 = vpop.permute.xlu0 %2106
        %2108 = vrot.lane.b32.xlu0 %v1147, 64
        %v2109 = vpop.permute.xlu0 %2108
        %2110 = vrot.lane.b32.xlu0 %v1148, 64
        %v2111 = vpop.permute.xlu0 %2110
        %2112 = vrot.lane.b32.xlu0 %v1149, 64
        %v2113 = vpop.permute.xlu0 %2112
        %2114 = vrot.lane.b32.xlu0 %v1150, 64
        %v2115 = vpop.permute.xlu0 %2114
        %2116 = vrot.lane.b32.xlu0 %v1151, 64
        %v2117 = vpop.permute.xlu0 %2116
        %2118 = vrot.lane.b32.xlu0 %v1152, 64
        %v2119 = vpop.permute.xlu0 %2118
        %2120 = vrot.lane.b32.xlu0 %v1153, 64
        %v2121 = vpop.permute.xlu0 %2120
        %2122 = vrot.lane.b32.xlu0 %v1154, 64
        %v2123 = vpop.permute.xlu0 %2122
        %2124 = vrot.lane.b32.xlu0 %v1155, 64
        %v2125 = vpop.permute.xlu0 %2124
        %2126 = vrot.lane.b32.xlu0 %v1156, 64
        %v2127 = vpop.permute.xlu0 %2126
        %2128 = vrot.lane.b32.xlu0 %v1157, 64
        %v2129 = vpop.permute.xlu0 %2128
        %2130 = vrot.lane.b32.xlu0 %v1158, 64
        %v2131 = vpop.permute.xlu0 %2130
        %v2133 = vsel %vm1159, %v2101, 0
        %v2136 = vsel %vm1159, %v2103, 0
        %v2139 = vsel %vm1159, %v2105, 0
        %v2142 = vsel %vm1159, %v2107, 0
        %v2145 = vsel %vm1159, %v2109, 0
        %v2148 = vsel %vm1159, %v2111, 0
        %v2151 = vsel %vm1159, %v2113, 0
        %v2154 = vsel %vm1159, %v2115, 0
        %v2157 = vsel %vm1159, %v2117, 0
        %v2160 = vsel %vm1159, %v2119, 0
        %v2163 = vsel %vm1159, %v2121, 0
        %v2166 = vsel %vm1159, %v2123, 0
        %v2169 = vsel %vm1159, %v2125, 0
        %v2172 = vsel %vm1159, %v2127, 0
        %v2175 = vsel %vm1159, %v2129, 0
        %v2178 = vsel %vm1159, %v2131, 0
        %2180 = vmatprep.subr.bf16.mxu0 0
        %2181 = vmatpush1.bf16.xpose.msra.mxu0 %v2157
        %2182 = vmatprep.subr.bf16.mxu0 0
        %2183 = vmatpush1.bf16.xpose.msra.mxu0 %v2160
        %2184 = vmatprep.subr.bf16.mxu0 0
        %2185 = vmatpush1.bf16.xpose.msra.mxu0 %v2163
        %2186 = vmatprep.subr.bf16.mxu0 0
        %2187 = vmatpush1.bf16.xpose.msra.mxu0 %v2166
        %2188 = vmatprep.subr.bf16.mxu0 0
        %2189 = vmatpush1.bf16.xpose.msra.mxu0 %v2169
        %2190 = vmatprep.subr.bf16.mxu0 0
        %2191 = vmatpush1.bf16.xpose.msra.mxu0 %v2172
        %2192 = vmatprep.subr.bf16.mxu0 0
        %2193 = vmatpush1.bf16.xpose.msra.mxu0 %v2175
        %2194 = vmatprep.subr.bf16.mxu0 0
        %2195 = vmatpush1.bf16.xpose.msra.mxu0 %v2178
        %2196 = vmatprep.subr.bf16.mxu0 0
        %2197 = vmatpush1.bf16.xpose.msra.mxu0 0
        %2198 = vmatprep.subr.bf16.mxu0 0
        %2199 = vmatpush1.bf16.xpose.msra.mxu0 0
        %2200 = vmatprep.subr.bf16.mxu0 0
        %2201 = vmatpush1.bf16.xpose.msra.mxu0 0
        %2202 = vmatprep.subr.bf16.mxu0 0
        %2203 = vmatpush1.bf16.xpose.msra.mxu0 0
        %2204 = vmatprep.subr.bf16.mxu0 0
        %2205 = vmatpush1.bf16.xpose.msra.mxu0 0
        %2206 = vmatprep.subr.bf16.mxu0 0
        %2207 = vmatpush1.bf16.xpose.msra.mxu0 0
        %2208 = vmatprep.subr.bf16.mxu0 0
        %2209 = vmatpush1.bf16.xpose.msra.mxu0 0
        %2210 = vmatprep.subr.bf16.mxu0 0
        %2211 = vmatpush1.bf16.xpose.msra.mxu0 0
        %2212 = vmatprep.mubr.bf16.mxu0 0
        %2213 = vmatmul.mubr.bf16.gmra.mrb[0].mxu0 %v2133
        %v2214 = vpop.f32.mrb[0].mxu0
        %v2215 = vadd.f32 0.0, %v2214
        %v2216 = vpop.f32.mrb[0].mxu0
        %v2217 = vpop.f32.mrb[0].mxu0
        %v2218 = vadd.f32 0.0, %v2217
        %v2219 = vpop.f32.mrb[0].mxu0
        %2220 = vmatprep.mubr.bf16.mxu0 0
        %2221 = vmatmul.mubr.bf16.gmra.mrb[0].mxu0 %v2136
        %v2222 = vpop.f32.mrb[0].mxu0
        %v2223 = vadd.f32 0.0, %v2222
        %v2224 = vpop.f32.mrb[0].mxu0
        %v2225 = vpop.f32.mrb[0].mxu0
        %v2226 = vadd.f32 0.0, %v2225
        %v2227 = vpop.f32.mrb[0].mxu0
        %2228 = vmatprep.mubr.bf16.mxu0 0
        %2229 = vmatmul.mubr.bf16.gmra.mrb[0].mxu0 %v2139
        %v2230 = vpop.f32.mrb[0].mxu0
        %v2231 = vadd.f32 0.0, %v2230
        %v2232 = vpop.f32.mrb[0].mxu0
        %v2233 = vpop.f32.mrb[0].mxu0
        %v2234 = vadd.f32 0.0, %v2233
        %v2235 = vpop.f32.mrb[0].mxu0
        %2236 = vmatprep.mubr.bf16.mxu0 0
        %2237 = vmatmul.mubr.bf16.gmra.mrb[0].mxu0 %v2142
        %v2238 = vpop.f32.mrb[0].mxu0
        %v2239 = vadd.f32 0.0, %v2238
        %v2240 = vpop.f32.mrb[0].mxu0
        %v2241 = vpop.f32.mrb[0].mxu0
        %v2242 = vadd.f32 0.0, %v2241
        %v2243 = vpop.f32.mrb[0].mxu0
        %2244 = vmatprep.mubr.bf16.mxu0 0
        %2245 = vmatmul.mubr.bf16.gmra.mrb[0].mxu0 %v2145
        %v2246 = vpop.f32.mrb[0].mxu0
        %v2247 = vadd.f32 0.0, %v2246
        %v2248 = vpop.f32.mrb[0].mxu0
        %v2249 = vpop.f32.mrb[0].mxu0
        %v2250 = vadd.f32 0.0, %v2249
        %v2251 = vpop.f32.mrb[0].mxu0
        %2252 = vmatprep.mubr.bf16.mxu0 0
        %2253 = vmatmul.mubr.bf16.gmra.mrb[0].mxu0 %v2148
        %v2254 = vpop.f32.mrb[0].mxu0
        %v2255 = vadd.f32 0.0, %v2254
        %v2256 = vpop.f32.mrb[0].mxu0
        %v2257 = vpop.f32.mrb[0].mxu0
        %v2258 = vadd.f32 0.0, %v2257
        %v2259 = vpop.f32.mrb[0].mxu0
        %2260 = vmatprep.mubr.bf16.mxu0 0
        %2261 = vmatmul.mubr.bf16.gmra.mrb[0].mxu0 %v2151
        %v2262 = vpop.f32.mrb[0].mxu0
        %v2263 = vadd.f32 0.0, %v2262
        %v2264 = vpop.f32.mrb[0].mxu0
        %v2265 = vpop.f32.mrb[0].mxu0
        %v2266 = vadd.f32 0.0, %v2265
        %v2267 = vpop.f32.mrb[0].mxu0
        %2268 = vmatprep.mubr.bf16.mxu0 0
        %2269 = vmatmul.mubr.bf16.gmra.mrb[0].mxu0 %v2154
        %v2270 = vpop.f32.mrb[0].mxu0
        %v2271 = vadd.f32 0.0, %v2270
        %v2272 = vpop.f32.mrb[0].mxu0
        %v2273 = vpop.f32.mrb[0].mxu0
        %v2274 = vadd.f32 0.0, %v2273
        %v2275 = vpop.f32.mrb[0].mxu0
        %2276 = vdwg.mxu0
        %v2277 = vmul.f32 %v2215, 0.17677669
        %v2278 = vmul.f32 %v2218, 0.17677669
        %v2279 = vmul.f32 %v2223, 0.17677669
        %v2280 = vmul.f32 %v2226, 0.17677669
        %v2281 = vmul.f32 %v2231, 0.17677669
        %v2282 = vmul.f32 %v2234, 0.17677669
        %v2283 = vmul.f32 %v2239, 0.17677669
        %v2284 = vmul.f32 %v2242, 0.17677669
        %v2285 = vmul.f32 %v2247, 0.17677669
        %v2286 = vmul.f32 %v2250, 0.17677669
        %v2287 = vmul.f32 %v2255, 0.17677669
        %v2288 = vmul.f32 %v2258, 0.17677669
        %v2289 = vmul.f32 %v2263, 0.17677669
        %v2290 = vmul.f32 %v2266, 0.17677669
        %v2291 = vmul.f32 %v2271, 0.17677669
        %v2292 = vmul.f32 %v2274, 0.17677669
        %v2293 = vsel %vm1127, %v2277, -inf
        %v2294 = vsel %vm1128, %v2278, -inf
        %v2295 = vsel %vm1129, %v2279, -inf
        %v2296 = vsel %vm1130, %v2280, -inf
        %v2297 = vsel %vm1131, %v2281, -inf
        %v2298 = vsel %vm1132, %v2282, -inf
        %v2299 = vsel %vm1133, %v2283, -inf
        %v2300 = vsel %vm1134, %v2284, -inf
        %v2301 = vsel %vm1135, %v2285, -inf
        %v2302 = vsel %vm1136, %v2286, -inf
        %v2303 = vsel %vm1137, %v2287, -inf
        %v2304 = vsel %vm1138, %v2288, -inf
        %v2305 = vsel %vm1139, %v2289, -inf
        %v2306 = vsel %vm1140, %v2290, -inf
        %v2307 = vsel %vm1141, %v2291, -inf
        %v2308 = vsel %vm1142, %v2292, -inf
        %2309 = vmax.xlane.f32.xlu0 %v2293
        %v2310 = vpop.xlane.xlu0 %2309
        %2311 = vmax.xlane.f32.xlu0 %v2294
        %v2312 = vpop.xlane.xlu0 %2311
        %2313 = vmax.xlane.f32.xlu0 %v2295
        %v2314 = vpop.xlane.xlu0 %2313
        %2315 = vmax.xlane.f32.xlu0 %v2296
        %v2316 = vpop.xlane.xlu0 %2315
        %2317 = vmax.xlane.f32.xlu0 %v2297
        %v2318 = vpop.xlane.xlu0 %2317
        %2319 = vmax.xlane.f32.xlu0 %v2298
        %v2320 = vpop.xlane.xlu0 %2319
        %2321 = vmax.xlane.f32.xlu0 %v2299
        %v2322 = vpop.xlane.xlu0 %2321
        %2323 = vmax.xlane.f32.xlu0 %v2300
        %v2324 = vpop.xlane.xlu0 %2323
        %2325 = vmax.xlane.f32.xlu0 %v2301
        %v2326 = vpop.xlane.xlu0 %2325
        %2327 = vmax.xlane.f32.xlu0 %v2302
        %v2328 = vpop.xlane.xlu0 %2327
        %2329 = vmax.xlane.f32.xlu0 %v2303
        %v2330 = vpop.xlane.xlu0 %2329
        %2331 = vmax.xlane.f32.xlu0 %v2304
        %v2332 = vpop.xlane.xlu0 %2331
        %2333 = vmax.xlane.f32.xlu0 %v2305
        %v2334 = vpop.xlane.xlu0 %2333
        %2335 = vmax.xlane.f32.xlu0 %v2306
        %v2336 = vpop.xlane.xlu0 %2335
        %2337 = vmax.xlane.f32.xlu0 %v2307
        %v2338 = vpop.xlane.xlu0 %2337
        %2339 = vmax.xlane.f32.xlu0 %v2308
        %v2340 = vpop.xlane.xlu0 %2339
        %v2341 = vsub.f32 %v2293, %v2310
        %v2342 = vsub.f32 %v2294, %v2312
        %v2343 = vsub.f32 %v2295, %v2314
        %v2344 = vsub.f32 %v2296, %v2316
        %v2345 = vsub.f32 %v2297, %v2318
        %v2346 = vsub.f32 %v2298, %v2320
        %v2347 = vsub.f32 %v2299, %v2322
        %v2348 = vsub.f32 %v2300, %v2324
        %v2349 = vsub.f32 %v2301, %v2326
        %v2350 = vsub.f32 %v2302, %v2328
        %v2351 = vsub.f32 %v2303, %v2330
        %v2352 = vsub.f32 %v2304, %v2332
        %v2353 = vsub.f32 %v2305, %v2334
        %v2354 = vsub.f32 %v2306, %v2336
        %v2355 = vsub.f32 %v2307, %v2338
        %v2356 = vsub.f32 %v2308, %v2340
        %v2357 = vmul.f32 %v2341, 1.442695
        %v2358 = vpow.pop %v2357
        %v2359 = vmul.f32 %v2342, 1.442695
        %v2360 = vpow.pop %v2359
        %v2361 = vmul.f32 %v2343, 1.442695
        %v2362 = vpow.pop %v2361
        %v2363 = vmul.f32 %v2344, 1.442695
        %v2364 = vpow.pop %v2363
        %v2365 = vmul.f32 %v2345, 1.442695
        %v2366 = vpow.pop %v2365
        %v2367 = vmul.f32 %v2346, 1.442695
        %v2368 = vpow.pop %v2367
        %v2369 = vmul.f32 %v2347, 1.442695
        %v2370 = vpow.pop %v2369
        %v2371 = vmul.f32 %v2348, 1.442695
        %v2372 = vpow.pop %v2371
        %v2373 = vmul.f32 %v2349, 1.442695
        %v2374 = vpow.pop %v2373
        %v2375 = vmul.f32 %v2350, 1.442695
        %v2376 = vpow.pop %v2375
        %v2377 = vmul.f32 %v2351, 1.442695
        %v2378 = vpow.pop %v2377
        %v2379 = vmul.f32 %v2352, 1.442695
        %v2380 = vpow.pop %v2379
        %v2381 = vmul.f32 %v2353, 1.442695
        %v2382 = vpow.pop %v2381
        %v2383 = vmul.f32 %v2354, 1.442695
        %v2384 = vpow.pop %v2383
        %v2385 = vmul.f32 %v2355, 1.442695
        %v2386 = vpow.pop %v2385
        %v2387 = vmul.f32 %v2356, 1.442695
        %v2388 = vpow.pop %v2387
        %2389 = vadd.xlane.f32.xlu0 %v2358
        %v2390 = vpop.xlane.xlu0 %2389
        %2391 = vadd.xlane.f32.xlu0 %v2360
        %v2392 = vpop.xlane.xlu0 %2391
        %2393 = vadd.xlane.f32.xlu0 %v2362
        %v2394 = vpop.xlane.xlu0 %2393
        %2395 = vadd.xlane.f32.xlu0 %v2364
        %v2396 = vpop.xlane.xlu0 %2395
        %2397 = vadd.xlane.f32.xlu0 %v2366
        %v2398 = vpop.xlane.xlu0 %2397
        %2399 = vadd.xlane.f32.xlu0 %v2368
        %v2400 = vpop.xlane.xlu0 %2399
        %2401 = vadd.xlane.f32.xlu0 %v2370
        %v2402 = vpop.xlane.xlu0 %2401
        %2403 = vadd.xlane.f32.xlu0 %v2372
        %v2404 = vpop.xlane.xlu0 %2403
        %2405 = vadd.xlane.f32.xlu0 %v2374
        %v2406 = vpop.xlane.xlu0 %2405
        %2407 = vadd.xlane.f32.xlu0 %v2376
        %v2408 = vpop.xlane.xlu0 %2407
        %2409 = vadd.xlane.f32.xlu0 %v2378
        %v2410 = vpop.xlane.xlu0 %2409
        %2411 = vadd.xlane.f32.xlu0 %v2380
        %v2412 = vpop.xlane.xlu0 %2411
        %2413 = vadd.xlane.f32.xlu0 %v2382
        %v2414 = vpop.xlane.xlu0 %2413
        %2415 = vadd.xlane.f32.xlu0 %v2384
        %v2416 = vpop.xlane.xlu0 %2415
        %2417 = vadd.xlane.f32.xlu0 %v2386
        %v2418 = vpop.xlane.xlu0 %2417
        %2419 = vadd.xlane.f32.xlu0 %v2388
        %v2420 = vpop.xlane.xlu0 %2419
        %v2421 = vrcp.pop %v2390
        %v2422 = vrcp.pop %v2392
        %v2423 = vrcp.pop %v2394
        %v2424 = vrcp.pop %v2396
        %v2425 = vrcp.pop %v2398
        %v2426 = vrcp.pop %v2400
        %v2427 = vrcp.pop %v2402
        %v2428 = vrcp.pop %v2404
        %v2429 = vrcp.pop %v2406
        %v2430 = vrcp.pop %v2408
        %v2431 = vrcp.pop %v2410
        %v2432 = vrcp.pop %v2412
        %v2433 = vrcp.pop %v2414
        %v2434 = vrcp.pop %v2416
        %v2435 = vrcp.pop %v2418
        %v2436 = vrcp.pop %v2420
        %v2437 = vmul.f32 %v2358, %v2421
        %v2438 = vmul.f32 %v2360, %v2422
        %v2439 = vmul.f32 %v2362, %v2423
        %v2440 = vmul.f32 %v2364, %v2424
        %v2441 = vmul.f32 %v2366, %v2425
        %v2442 = vmul.f32 %v2368, %v2426
        %v2443 = vmul.f32 %v2370, %v2427
        %v2444 = vmul.f32 %v2372, %v2428
        %v2445 = vmul.f32 %v2374, %v2429
        %v2446 = vmul.f32 %v2376, %v2430
        %v2447 = vmul.f32 %v2378, %v2431
        %v2448 = vmul.f32 %v2380, %v2432
        %v2449 = vmul.f32 %v2382, %v2433
        %v2450 = vmul.f32 %v2384, %v2434
        %v2451 = vmul.f32 %v2386, %v2435
        %v2452 = vmul.f32 %v2388, %v2436
        %v2453 = vpack.c.bf16 %v2438, %v2437
        %v2454 = vpack.c.bf16 %v2440, %v2439
        %v2455 = vpack.c.bf16 %v2442, %v2441
        %v2456 = vpack.c.bf16 %v2444, %v2443
        %v2457 = vpack.c.bf16 %v2446, %v2445
        %v2458 = vpack.c.bf16 %v2448, %v2447
        %v2459 = vpack.c.bf16 %v2450, %v2449
        %v2460 = vpack.c.bf16 %v2452, %v2451
        %2461 = vrot.lane.b32.xlu0 %v1489, 64
        %v2462 = vpop.permute.xlu0 %2461
        %2463 = vrot.lane.b32.xlu0 %v1490, 64
        %v2464 = vpop.permute.xlu0 %2463
        %2465 = vrot.lane.b32.xlu0 %v1491, 64
        %v2466 = vpop.permute.xlu0 %2465
        %2467 = vrot.lane.b32.xlu0 %v1492, 64
        %v2468 = vpop.permute.xlu0 %2467
        %2469 = vrot.lane.b32.xlu0 %v1493, 64
        %v2470 = vpop.permute.xlu0 %2469
        %2471 = vrot.lane.b32.xlu0 %v1494, 64
        %v2472 = vpop.permute.xlu0 %2471
        %2473 = vrot.lane.b32.xlu0 %v1495, 64
        %v2474 = vpop.permute.xlu0 %2473
        %2475 = vrot.lane.b32.xlu0 %v1496, 64
        %v2476 = vpop.permute.xlu0 %2475
        %2485 = vmatprep.subr.bf16.mxu0 0
        %2486 = vmatpush1.bf16.msra.mxu0 %v2462
        %2487 = vmatprep.subr.bf16.mxu0 0
        %2488 = vmatpush1.bf16.msra.mxu0 %v2464
        %2489 = vmatprep.subr.bf16.mxu0 0
        %2490 = vmatpush1.bf16.msra.mxu0 %v2466
        %2491 = vmatprep.subr.bf16.mxu0 0
        %2492 = vmatpush1.bf16.msra.mxu0 %v2468
        %2493 = vmatprep.subr.bf16.mxu0 0
        %2494 = vmatpush1.bf16.msra.mxu0 %v2470
        %2495 = vmatprep.subr.bf16.mxu0 0
        %2496 = vmatpush1.bf16.msra.mxu0 %v2472
        %2497 = vmatprep.subr.bf16.mxu0 0
        %2498 = vmatpush1.bf16.msra.mxu0 %v2474
        %2499 = vmatprep.subr.bf16.mxu0 0
        %2500 = vmatpush1.bf16.msra.mxu0 %v2476
        %2501 = vmatprep.subr.bf16.mxu0 0
        %2502 = vmatpush1.bf16.msra.mxu0 0
        %2503 = vmatprep.subr.bf16.mxu0 0
        %2504 = vmatpush1.bf16.msra.mxu0 0
        %2505 = vmatprep.subr.bf16.mxu0 0
        %2506 = vmatpush1.bf16.msra.mxu0 0
        %2507 = vmatprep.subr.bf16.mxu0 0
        %2508 = vmatpush1.bf16.msra.mxu0 0
        %2509 = vmatprep.subr.bf16.mxu0 0
        %2510 = vmatpush1.bf16.msra.mxu0 0
        %2511 = vmatprep.subr.bf16.mxu0 0
        %2512 = vmatpush1.bf16.msra.mxu0 0
        %2513 = vmatprep.subr.bf16.mxu0 0
        %2514 = vmatpush1.bf16.msra.mxu0 0
        %2515 = vmatprep.subr.bf16.mxu0 0
        %2516 = vmatpush1.bf16.msra.mxu0 0
        %2517 = vmatprep.mubr.bf16.mxu0 0
        %2518 = vmatmul.mubr.bf16.gmra.mrb[0].mxu0 %v2453
        %v2519 = vpop.f32.mrb[0].mxu0
        %v2520 = vadd.f32 0.0, %v2519
        %v2521 = vpop.f32.mrb[0].mxu0
        %v2522 = vpop.f32.mrb[0].mxu0
        %v2523 = vadd.f32 0.0, %v2522
        %v2524 = vpop.f32.mrb[0].mxu0
        %2525 = vmatprep.mubr.bf16.mxu0 0
        %2526 = vmatmul.mubr.bf16.gmra.mrb[0].mxu0 %v2454
        %v2527 = vpop.f32.mrb[0].mxu0
        %v2528 = vadd.f32 0.0, %v2527
        %v2529 = vpop.f32.mrb[0].mxu0
        %v2530 = vpop.f32.mrb[0].mxu0
        %v2531 = vadd.f32 0.0, %v2530
        %v2532 = vpop.f32.mrb[0].mxu0
        %2533 = vmatprep.mubr.bf16.mxu0 0
        %2534 = vmatmul.mubr.bf16.gmra.mrb[0].mxu0 %v2455
        %v2535 = vpop.f32.mrb[0].mxu0
        %v2536 = vadd.f32 0.0, %v2535
        %v2537 = vpop.f32.mrb[0].mxu0
        %v2538 = vpop.f32.mrb[0].mxu0
        %v2539 = vadd.f32 0.0, %v2538
        %v2540 = vpop.f32.mrb[0].mxu0
        %2541 = vmatprep.mubr.bf16.mxu0 0
        %2542 = vmatmul.mubr.bf16.gmra.mrb[0].mxu0 %v2456
        %v2543 = vpop.f32.mrb[0].mxu0
        %v2544 = vadd.f32 0.0, %v2543
        %v2545 = vpop.f32.mrb[0].mxu0
        %v2546 = vpop.f32.mrb[0].mxu0
        %v2547 = vadd.f32 0.0, %v2546
        %v2548 = vpop.f32.mrb[0].mxu0
        %2549 = vmatprep.mubr.bf16.mxu0 0
        %2550 = vmatmul.mubr.bf16.gmra.mrb[0].mxu0 %v2457
        %v2551 = vpop.f32.mrb[0].mxu0
        %v2552 = vadd.f32 0.0, %v2551
        %v2553 = vpop.f32.mrb[0].mxu0
        %v2554 = vpop.f32.mrb[0].mxu0
        %v2555 = vadd.f32 0.0, %v2554
        %v2556 = vpop.f32.mrb[0].mxu0
        %2557 = vmatprep.mubr.bf16.mxu0 0
        %2558 = vmatmul.mubr.bf16.gmra.mrb[0].mxu0 %v2458
        %v2559 = vpop.f32.mrb[0].mxu0
        %v2560 = vadd.f32 0.0, %v2559
        %v2561 = vpop.f32.mrb[0].mxu0
        %v2562 = vpop.f32.mrb[0].mxu0
        %v2563 = vadd.f32 0.0, %v2562
        %v2564 = vpop.f32.mrb[0].mxu0
        %2565 = vmatprep.mubr.bf16.mxu0 0
        %2566 = vmatmul.mubr.bf16.gmra.mrb[0].mxu0 %v2459
        %v2567 = vpop.f32.mrb[0].mxu0
        %v2568 = vadd.f32 0.0, %v2567
        %v2569 = vpop.f32.mrb[0].mxu0
        %v2570 = vpop.f32.mrb[0].mxu0
        %v2571 = vadd.f32 0.0, %v2570
        %v2572 = vpop.f32.mrb[0].mxu0
        %2573 = vmatprep.mubr.bf16.mxu0 0
        %2574 = vmatmul.mubr.bf16.gmra.mrb[0].mxu0 %v2460
        %v2575 = vpop.f32.mrb[0].mxu0
        %v2576 = vadd.f32 0.0, %v2575
        %v2577 = vpop.f32.mrb[0].mxu0
        %v2578 = vpop.f32.mrb[0].mxu0
        %v2579 = vadd.f32 0.0, %v2578
        %v2580 = vpop.f32.mrb[0].mxu0
        %2581 = vdwg.mxu0
        %2582 = vrot.lane.b32.xlu0 %v1143, 32
        %v2583 = vpop.permute.xlu0 %2582
        %2584 = vrot.lane.b32.xlu0 %v1144, 32
        %v2585 = vpop.permute.xlu0 %2584
        %2586 = vrot.lane.b32.xlu0 %v1145, 32
        %v2587 = vpop.permute.xlu0 %2586
        %2588 = vrot.lane.b32.xlu0 %v1146, 32
        %v2589 = vpop.permute.xlu0 %2588
        %2590 = vrot.lane.b32.xlu0 %v1147, 32
        %v2591 = vpop.permute.xlu0 %2590
        %2592 = vrot.lane.b32.xlu0 %v1148, 32
        %v2593 = vpop.permute.xlu0 %2592
        %2594 = vrot.lane.b32.xlu0 %v1149, 32
        %v2595 = vpop.permute.xlu0 %2594
        %2596 = vrot.lane.b32.xlu0 %v1150, 32
        %v2597 = vpop.permute.xlu0 %2596
        %2598 = vrot.lane.b32.xlu0 %v1151, 32
        %v2599 = vpop.permute.xlu0 %2598
        %2600 = vrot.lane.b32.xlu0 %v1152, 32
        %v2601 = vpop.permute.xlu0 %2600
        %2602 = vrot.lane.b32.xlu0 %v1153, 32
        %v2603 = vpop.permute.xlu0 %2602
        %2604 = vrot.lane.b32.xlu0 %v1154, 32
        %v2605 = vpop.permute.xlu0 %2604
        %2606 = vrot.lane.b32.xlu0 %v1155, 32
        %v2607 = vpop.permute.xlu0 %2606
        %2608 = vrot.lane.b32.xlu0 %v1156, 32
        %v2609 = vpop.permute.xlu0 %2608
        %2610 = vrot.lane.b32.xlu0 %v1157, 32
        %v2611 = vpop.permute.xlu0 %2610
        %2612 = vrot.lane.b32.xlu0 %v1158, 32
        %v2613 = vpop.permute.xlu0 %2612
        %v2615 = vsel %vm1159, %v2583, 0
        %v2618 = vsel %vm1159, %v2585, 0
        %v2621 = vsel %vm1159, %v2587, 0
        %v2624 = vsel %vm1159, %v2589, 0
        %v2627 = vsel %vm1159, %v2591, 0
        %v2630 = vsel %vm1159, %v2593, 0
        %v2633 = vsel %vm1159, %v2595, 0
        %v2636 = vsel %vm1159, %v2597, 0
        %v2639 = vsel %vm1159, %v2599, 0
        %v2642 = vsel %vm1159, %v2601, 0
        %v2645 = vsel %vm1159, %v2603, 0
        %v2648 = vsel %vm1159, %v2605, 0
        %v2651 = vsel %vm1159, %v2607, 0
        %v2654 = vsel %vm1159, %v2609, 0
        %v2657 = vsel %vm1159, %v2611, 0
        %v2660 = vsel %vm1159, %v2613, 0
        %2662 = vmatprep.subr.bf16.mxu0 0
        %2663 = vmatpush1.bf16.xpose.msra.mxu0 %v2639
        %2664 = vmatprep.subr.bf16.mxu0 0
        %2665 = vmatpush1.bf16.xpose.msra.mxu0 %v2642
        %2666 = vmatprep.subr.bf16.mxu0 0
        %2667 = vmatpush1.bf16.xpose.msra.mxu0 %v2645
        %2668 = vmatprep.subr.bf16.mxu0 0
        %2669 = vmatpush1.bf16.xpose.msra.mxu0 %v2648
        %2670 = vmatprep.subr.bf16.mxu0 0
        %2671 = vmatpush1.bf16.xpose.msra.mxu0 %v2651
        %2672 = vmatprep.subr.bf16.mxu0 0
        %2673 = vmatpush1.bf16.xpose.msra.mxu0 %v2654
        %2674 = vmatprep.subr.bf16.mxu0 0
        %2675 = vmatpush1.bf16.xpose.msra.mxu0 %v2657
        %2676 = vmatprep.subr.bf16.mxu0 0
        %2677 = vmatpush1.bf16.xpose.msra.mxu0 %v2660
        %2678 = vmatprep.subr.bf16.mxu0 0
        %2679 = vmatpush1.bf16.xpose.msra.mxu0 0
        %2680 = vmatprep.subr.bf16.mxu0 0
        %2681 = vmatpush1.bf16.xpose.msra.mxu0 0
        %2682 = vmatprep.subr.bf16.mxu0 0
        %2683 = vmatpush1.bf16.xpose.msra.mxu0 0
        %2684 = vmatprep.subr.bf16.mxu0 0
        %2685 = vmatpush1.bf16.xpose.msra.mxu0 0
        %2686 = vmatprep.subr.bf16.mxu0 0
        %2687 = vmatpush1.bf16.xpose.msra.mxu0 0
        %2688 = vmatprep.subr.bf16.mxu0 0
        %2689 = vmatpush1.bf16.xpose.msra.mxu0 0
        %2690 = vmatprep.subr.bf16.mxu0 0
        %2691 = vmatpush1.bf16.xpose.msra.mxu0 0
        %2692 = vmatprep.subr.bf16.mxu0 0
        %2693 = vmatpush1.bf16.xpose.msra.mxu0 0
        %2694 = vmatprep.mubr.bf16.mxu0 0
        %2695 = vmatmul.mubr.bf16.gmra.mrb[0].mxu0 %v2615
        %v2696 = vpop.f32.mrb[0].mxu0
        %v2697 = vadd.f32 0.0, %v2696
        %v2698 = vpop.f32.mrb[0].mxu0
        %v2699 = vpop.f32.mrb[0].mxu0
        %v2700 = vadd.f32 0.0, %v2699
        %v2701 = vpop.f32.mrb[0].mxu0
        %2702 = vmatprep.mubr.bf16.mxu0 0
        %2703 = vmatmul.mubr.bf16.gmra.mrb[0].mxu0 %v2618
        %v2704 = vpop.f32.mrb[0].mxu0
        %v2705 = vadd.f32 0.0, %v2704
        %v2706 = vpop.f32.mrb[0].mxu0
        %v2707 = vpop.f32.mrb[0].mxu0
        %v2708 = vadd.f32 0.0, %v2707
        %v2709 = vpop.f32.mrb[0].mxu0
        %2710 = vmatprep.mubr.bf16.mxu0 0
        %2711 = vmatmul.mubr.bf16.gmra.mrb[0].mxu0 %v2621
        %v2712 = vpop.f32.mrb[0].mxu0
        %v2713 = vadd.f32 0.0, %v2712
        %v2714 = vpop.f32.mrb[0].mxu0
        %v2715 = vpop.f32.mrb[0].mxu0
        %v2716 = vadd.f32 0.0, %v2715
        %v2717 = vpop.f32.mrb[0].mxu0
        %2718 = vmatprep.mubr.bf16.mxu0 0
        %2719 = vmatmul.mubr.bf16.gmra.mrb[0].mxu0 %v2624
        %v2720 = vpop.f32.mrb[0].mxu0
        %v2721 = vadd.f32 0.0, %v2720
        %v2722 = vpop.f32.mrb[0].mxu0
        %v2723 = vpop.f32.mrb[0].mxu0
        %v2724 = vadd.f32 0.0, %v2723
        %v2725 = vpop.f32.mrb[0].mxu0
        %2726 = vmatprep.mubr.bf16.mxu0 0
        %2727 = vmatmul.mubr.bf16.gmra.mrb[0].mxu0 %v2627
        %v2728 = vpop.f32.mrb[0].mxu0
        %v2729 = vadd.f32 0.0, %v2728
        %v2730 = vpop.f32.mrb[0].mxu0
        %v2731 = vpop.f32.mrb[0].mxu0
        %v2732 = vadd.f32 0.0, %v2731
        %v2733 = vpop.f32.mrb[0].mxu0
        %2734 = vmatprep.mubr.bf16.mxu0 0
        %2735 = vmatmul.mubr.bf16.gmra.mrb[0].mxu0 %v2630
        %v2736 = vpop.f32.mrb[0].mxu0
        %v2737 = vadd.f32 0.0, %v2736
        %v2738 = vpop.f32.mrb[0].mxu0
        %v2739 = vpop.f32.mrb[0].mxu0
        %v2740 = vadd.f32 0.0, %v2739
        %v2741 = vpop.f32.mrb[0].mxu0
        %2742 = vmatprep.mubr.bf16.mxu0 0
        %2743 = vmatmul.mubr.bf16.gmra.mrb[0].mxu0 %v2633
        %v2744 = vpop.f32.mrb[0].mxu0
        %v2745 = vadd.f32 0.0, %v2744
        %v2746 = vpop.f32.mrb[0].mxu0
        %v2747 = vpop.f32.mrb[0].mxu0
        %v2748 = vadd.f32 0.0, %v2747
        %v2749 = vpop.f32.mrb[0].mxu0
        %2750 = vmatprep.mubr.bf16.mxu0 0
        %2751 = vmatmul.mubr.bf16.gmra.mrb[0].mxu0 %v2636
        %v2752 = vpop.f32.mrb[0].mxu0
        %v2753 = vadd.f32 0.0, %v2752
        %v2754 = vpop.f32.mrb[0].mxu0
        %v2755 = vpop.f32.mrb[0].mxu0
        %v2756 = vadd.f32 0.0, %v2755
        %v2757 = vpop.f32.mrb[0].mxu0
        %2758 = vdwg.mxu0
        %v2759 = vmul.f32 %v2697, 0.17677669
        %v2760 = vmul.f32 %v2700, 0.17677669
        %v2761 = vmul.f32 %v2705, 0.17677669
        %v2762 = vmul.f32 %v2708, 0.17677669
        %v2763 = vmul.f32 %v2713, 0.17677669
        %v2764 = vmul.f32 %v2716, 0.17677669
        %v2765 = vmul.f32 %v2721, 0.17677669
        %v2766 = vmul.f32 %v2724, 0.17677669
        %v2767 = vmul.f32 %v2729, 0.17677669
        %v2768 = vmul.f32 %v2732, 0.17677669
        %v2769 = vmul.f32 %v2737, 0.17677669
        %v2770 = vmul.f32 %v2740, 0.17677669
        %v2771 = vmul.f32 %v2745, 0.17677669
        %v2772 = vmul.f32 %v2748, 0.17677669
        %v2773 = vmul.f32 %v2753, 0.17677669
        %v2774 = vmul.f32 %v2756, 0.17677669
        %v2775 = vsel %vm1127, %v2759, -inf
        %v2776 = vsel %vm1128, %v2760, -inf
        %v2777 = vsel %vm1129, %v2761, -inf
        %v2778 = vsel %vm1130, %v2762, -inf
        %v2779 = vsel %vm1131, %v2763, -inf
        %v2780 = vsel %vm1132, %v2764, -inf
        %v2781 = vsel %vm1133, %v2765, -inf
        %v2782 = vsel %vm1134, %v2766, -inf
        %v2783 = vsel %vm1135, %v2767, -inf
        %v2784 = vsel %vm1136, %v2768, -inf
        %v2785 = vsel %vm1137, %v2769, -inf
        %v2786 = vsel %vm1138, %v2770, -inf
        %v2787 = vsel %vm1139, %v2771, -inf
        %v2788 = vsel %vm1140, %v2772, -inf
        %v2789 = vsel %vm1141, %v2773, -inf
        %v2790 = vsel %vm1142, %v2774, -inf
        %2791 = vmax.xlane.f32.xlu0 %v2775
        %v2792 = vpop.xlane.xlu0 %2791
        %2793 = vmax.xlane.f32.xlu0 %v2776
        %v2794 = vpop.xlane.xlu0 %2793
        %2795 = vmax.xlane.f32.xlu0 %v2777
        %v2796 = vpop.xlane.xlu0 %2795
        %2797 = vmax.xlane.f32.xlu0 %v2778
        %v2798 = vpop.xlane.xlu0 %2797
        %2799 = vmax.xlane.f32.xlu0 %v2779
        %v2800 = vpop.xlane.xlu0 %2799
        %2801 = vmax.xlane.f32.xlu0 %v2780
        %v2802 = vpop.xlane.xlu0 %2801
        %2803 = vmax.xlane.f32.xlu0 %v2781
        %v2804 = vpop.xlane.xlu0 %2803
        %2805 = vmax.xlane.f32.xlu0 %v2782
        %v2806 = vpop.xlane.xlu0 %2805
        %2807 = vmax.xlane.f32.xlu0 %v2783
        %v2808 = vpop.xlane.xlu0 %2807
        %2809 = vmax.xlane.f32.xlu0 %v2784
        %v2810 = vpop.xlane.xlu0 %2809
        %2811 = vmax.xlane.f32.xlu0 %v2785
        %v2812 = vpop.xlane.xlu0 %2811
        %2813 = vmax.xlane.f32.xlu0 %v2786
        %v2814 = vpop.xlane.xlu0 %2813
        %2815 = vmax.xlane.f32.xlu0 %v2787
        %v2816 = vpop.xlane.xlu0 %2815
        %2817 = vmax.xlane.f32.xlu0 %v2788
        %v2818 = vpop.xlane.xlu0 %2817
        %2819 = vmax.xlane.f32.xlu0 %v2789
        %v2820 = vpop.xlane.xlu0 %2819
        %2821 = vmax.xlane.f32.xlu0 %v2790
        %v2822 = vpop.xlane.xlu0 %2821
        %v2823 = vsub.f32 %v2775, %v2792
        %v2824 = vsub.f32 %v2776, %v2794
        %v2825 = vsub.f32 %v2777, %v2796
        %v2826 = vsub.f32 %v2778, %v2798
        %v2827 = vsub.f32 %v2779, %v2800
        %v2828 = vsub.f32 %v2780, %v2802
        %v2829 = vsub.f32 %v2781, %v2804
        %v2830 = vsub.f32 %v2782, %v2806
        %v2831 = vsub.f32 %v2783, %v2808
        %v2832 = vsub.f32 %v2784, %v2810
        %v2833 = vsub.f32 %v2785, %v2812
        %v2834 = vsub.f32 %v2786, %v2814
        %v2835 = vsub.f32 %v2787, %v2816
        %v2836 = vsub.f32 %v2788, %v2818
        %v2837 = vsub.f32 %v2789, %v2820
        %v2838 = vsub.f32 %v2790, %v2822
        %v2839 = vmul.f32 %v2823, 1.442695
        %v2840 = vpow.pop %v2839
        %v2841 = vmul.f32 %v2824, 1.442695
        %v2842 = vpow.pop %v2841
        %v2843 = vmul.f32 %v2825, 1.442695
        %v2844 = vpow.pop %v2843
        %v2845 = vmul.f32 %v2826, 1.442695
        %v2846 = vpow.pop %v2845
        %v2847 = vmul.f32 %v2827, 1.442695
        %v2848 = vpow.pop %v2847
        %v2849 = vmul.f32 %v2828, 1.442695
        %v2850 = vpow.pop %v2849
        %v2851 = vmul.f32 %v2829, 1.442695
        %v2852 = vpow.pop %v2851
        %v2853 = vmul.f32 %v2830, 1.442695
        %v2854 = vpow.pop %v2853
        %v2855 = vmul.f32 %v2831, 1.442695
        %v2856 = vpow.pop %v2855
        %v2857 = vmul.f32 %v2832, 1.442695
        %v2858 = vpow.pop %v2857
        %v2859 = vmul.f32 %v2833, 1.442695
        %v2860 = vpow.pop %v2859
        %v2861 = vmul.f32 %v2834, 1.442695
        %v2862 = vpow.pop %v2861
        %v2863 = vmul.f32 %v2835, 1.442695
        %v2864 = vpow.pop %v2863
        %v2865 = vmul.f32 %v2836, 1.442695
        %v2866 = vpow.pop %v2865
        %v2867 = vmul.f32 %v2837, 1.442695
        %v2868 = vpow.pop %v2867
        %v2869 = vmul.f32 %v2838, 1.442695
        %v2870 = vpow.pop %v2869
        %2871 = vadd.xlane.f32.xlu0 %v2840
        %v2872 = vpop.xlane.xlu0 %2871
        %2873 = vadd.xlane.f32.xlu0 %v2842
        %v2874 = vpop.xlane.xlu0 %2873
        %2875 = vadd.xlane.f32.xlu0 %v2844
        %v2876 = vpop.xlane.xlu0 %2875
        %2877 = vadd.xlane.f32.xlu0 %v2846
        %v2878 = vpop.xlane.xlu0 %2877
        %2879 = vadd.xlane.f32.xlu0 %v2848
        %v2880 = vpop.xlane.xlu0 %2879
        %2881 = vadd.xlane.f32.xlu0 %v2850
        %v2882 = vpop.xlane.xlu0 %2881
        %2883 = vadd.xlane.f32.xlu0 %v2852
        %v2884 = vpop.xlane.xlu0 %2883
        %2885 = vadd.xlane.f32.xlu0 %v2854
        %v2886 = vpop.xlane.xlu0 %2885
        %2887 = vadd.xlane.f32.xlu0 %v2856
        %v2888 = vpop.xlane.xlu0 %2887
        %2889 = vadd.xlane.f32.xlu0 %v2858
        %v2890 = vpop.xlane.xlu0 %2889
        %2891 = vadd.xlane.f32.xlu0 %v2860
        %v2892 = vpop.xlane.xlu0 %2891
        %2893 = vadd.xlane.f32.xlu0 %v2862
        %v2894 = vpop.xlane.xlu0 %2893
        %2895 = vadd.xlane.f32.xlu0 %v2864
        %v2896 = vpop.xlane.xlu0 %2895
        %2897 = vadd.xlane.f32.xlu0 %v2866
        %v2898 = vpop.xlane.xlu0 %2897
        %2899 = vadd.xlane.f32.xlu0 %v2868
        %v2900 = vpop.xlane.xlu0 %2899
        %2901 = vadd.xlane.f32.xlu0 %v2870
        %v2902 = vpop.xlane.xlu0 %2901
        %v2903 = vrcp.pop %v2872
        %v2904 = vrcp.pop %v2874
        %v2905 = vrcp.pop %v2876
        %v2906 = vrcp.pop %v2878
        %v2907 = vrcp.pop %v2880
        %v2908 = vrcp.pop %v2882
        %v2909 = vrcp.pop %v2884
        %v2910 = vrcp.pop %v2886
        %v2911 = vrcp.pop %v2888
        %v2912 = vrcp.pop %v2890
        %v2913 = vrcp.pop %v2892
        %v2914 = vrcp.pop %v2894
        %v2915 = vrcp.pop %v2896
        %v2916 = vrcp.pop %v2898
        %v2917 = vrcp.pop %v2900
        %v2918 = vrcp.pop %v2902
        %v2919 = vmul.f32 %v2840, %v2903
        %v2920 = vmul.f32 %v2842, %v2904
        %v2921 = vmul.f32 %v2844, %v2905
        %v2922 = vmul.f32 %v2846, %v2906
        %v2923 = vmul.f32 %v2848, %v2907
        %v2924 = vmul.f32 %v2850, %v2908
        %v2925 = vmul.f32 %v2852, %v2909
        %v2926 = vmul.f32 %v2854, %v2910
        %v2927 = vmul.f32 %v2856, %v2911
        %v2928 = vmul.f32 %v2858, %v2912
        %v2929 = vmul.f32 %v2860, %v2913
        %v2930 = vmul.f32 %v2862, %v2914
        %v2931 = vmul.f32 %v2864, %v2915
        %v2932 = vmul.f32 %v2866, %v2916
        %v2933 = vmul.f32 %v2868, %v2917
        %v2934 = vmul.f32 %v2870, %v2918
        %v2935 = vpack.c.bf16 %v2920, %v2919
        %v2936 = vpack.c.bf16 %v2922, %v2921
        %v2937 = vpack.c.bf16 %v2924, %v2923
        %v2938 = vpack.c.bf16 %v2926, %v2925
        %v2939 = vpack.c.bf16 %v2928, %v2927
        %v2940 = vpack.c.bf16 %v2930, %v2929
        %v2941 = vpack.c.bf16 %v2932, %v2931
        %v2942 = vpack.c.bf16 %v2934, %v2933
        %2943 = vrot.lane.b32.xlu0 %v1489, 32
        %v2944 = vpop.permute.xlu0 %2943
        %2945 = vrot.lane.b32.xlu0 %v1490, 32
        %v2946 = vpop.permute.xlu0 %2945
        %2947 = vrot.lane.b32.xlu0 %v1491, 32
        %v2948 = vpop.permute.xlu0 %2947
        %2949 = vrot.lane.b32.xlu0 %v1492, 32
        %v2950 = vpop.permute.xlu0 %2949
        %2951 = vrot.lane.b32.xlu0 %v1493, 32
        %v2952 = vpop.permute.xlu0 %2951
        %2953 = vrot.lane.b32.xlu0 %v1494, 32
        %v2954 = vpop.permute.xlu0 %2953
        %2955 = vrot.lane.b32.xlu0 %v1495, 32
        %v2956 = vpop.permute.xlu0 %2955
        %2957 = vrot.lane.b32.xlu0 %v1496, 32
        %v2958 = vpop.permute.xlu0 %2957
        %2967 = vmatprep.subr.bf16.mxu0 0
        %2968 = vmatpush1.bf16.msra.mxu0 %v2944
        %2969 = vmatprep.subr.bf16.mxu0 0
        %2970 = vmatpush1.bf16.msra.mxu0 %v2946
        %2971 = vmatprep.subr.bf16.mxu0 0
        %2972 = vmatpush1.bf16.msra.mxu0 %v2948
        %2973 = vmatprep.subr.bf16.mxu0 0
        %2974 = vmatpush1.bf16.msra.mxu0 %v2950
        %2975 = vmatprep.subr.bf16.mxu0 0
        %2976 = vmatpush1.bf16.msra.mxu0 %v2952
        %2977 = vmatprep.subr.bf16.mxu0 0
        %2978 = vmatpush1.bf16.msra.mxu0 %v2954
        %2979 = vmatprep.subr.bf16.mxu0 0
        %2980 = vmatpush1.bf16.msra.mxu0 %v2956
        %2981 = vmatprep.subr.bf16.mxu0 0
        %2982 = vmatpush1.bf16.msra.mxu0 %v2958
        %2983 = vmatprep.subr.bf16.mxu0 0
        %2984 = vmatpush1.bf16.msra.mxu0 0
        %2985 = vmatprep.subr.bf16.mxu0 0
        %2986 = vmatpush1.bf16.msra.mxu0 0
        %2987 = vmatprep.subr.bf16.mxu0 0
        %2988 = vmatpush1.bf16.msra.mxu0 0
        %2989 = vmatprep.subr.bf16.mxu0 0
        %2990 = vmatpush1.bf16.msra.mxu0 0
        %2991 = vmatprep.subr.bf16.mxu0 0
        %2992 = vmatpush1.bf16.msra.mxu0 0
        %2993 = vmatprep.subr.bf16.mxu0 0
        %2994 = vmatpush1.bf16.msra.mxu0 0
        %2995 = vmatprep.subr.bf16.mxu0 0
        %2996 = vmatpush1.bf16.msra.mxu0 0
        %2997 = vmatprep.subr.bf16.mxu0 0
        %2998 = vmatpush1.bf16.msra.mxu0 0
        %2999 = vmatprep.mubr.bf16.mxu0 0
        %3000 = vmatmul.mubr.bf16.gmra.mrb[0].mxu0 %v2935
        %v3001 = vpop.f32.mrb[0].mxu0
        %v3002 = vadd.f32 0.0, %v3001
        %v3003 = vpop.f32.mrb[0].mxu0
        %v3004 = vpop.f32.mrb[0].mxu0
        %v3005 = vadd.f32 0.0, %v3004
        %v3006 = vpop.f32.mrb[0].mxu0
        %3007 = vmatprep.mubr.bf16.mxu0 0
        %3008 = vmatmul.mubr.bf16.gmra.mrb[0].mxu0 %v2936
        %v3009 = vpop.f32.mrb[0].mxu0
        %v3010 = vadd.f32 0.0, %v3009
        %v3011 = vpop.f32.mrb[0].mxu0
        %v3012 = vpop.f32.mrb[0].mxu0
        %v3013 = vadd.f32 0.0, %v3012
        %v3014 = vpop.f32.mrb[0].mxu0
        %3015 = vmatprep.mubr.bf16.mxu0 0
        %3016 = vmatmul.mubr.bf16.gmra.mrb[0].mxu0 %v2937
        %v3017 = vpop.f32.mrb[0].mxu0
        %v3018 = vadd.f32 0.0, %v3017
        %v3019 = vpop.f32.mrb[0].mxu0
        %v3020 = vpop.f32.mrb[0].mxu0
        %v3021 = vadd.f32 0.0, %v3020
        %v3022 = vpop.f32.mrb[0].mxu0
        %3023 = vmatprep.mubr.bf16.mxu0 0
        %3024 = vmatmul.mubr.bf16.gmra.mrb[0].mxu0 %v2938
        %v3025 = vpop.f32.mrb[0].mxu0
        %v3026 = vadd.f32 0.0, %v3025
        %v3027 = vpop.f32.mrb[0].mxu0
        %v3028 = vpop.f32.mrb[0].mxu0
        %v3029 = vadd.f32 0.0, %v3028
        %v3030 = vpop.f32.mrb[0].mxu0
        %3031 = vmatprep.mubr.bf16.mxu0 0
        %3032 = vmatmul.mubr.bf16.gmra.mrb[0].mxu0 %v2939
        %v3033 = vpop.f32.mrb[0].mxu0
        %v3034 = vadd.f32 0.0, %v3033
        %v3035 = vpop.f32.mrb[0].mxu0
        %v3036 = vpop.f32.mrb[0].mxu0
        %v3037 = vadd.f32 0.0, %v3036
        %v3038 = vpop.f32.mrb[0].mxu0
        %3039 = vmatprep.mubr.bf16.mxu0 0
        %3040 = vmatmul.mubr.bf16.gmra.mrb[0].mxu0 %v2940
        %v3041 = vpop.f32.mrb[0].mxu0
        %v3042 = vadd.f32 0.0, %v3041
        %v3043 = vpop.f32.mrb[0].mxu0
        %v3044 = vpop.f32.mrb[0].mxu0
        %v3045 = vadd.f32 0.0, %v3044
        %v3046 = vpop.f32.mrb[0].mxu0
        %3047 = vmatprep.mubr.bf16.mxu0 0
        %3048 = vmatmul.mubr.bf16.gmra.mrb[0].mxu0 %v2941
        %v3049 = vpop.f32.mrb[0].mxu0
        %v3050 = vadd.f32 0.0, %v3049
        %v3051 = vpop.f32.mrb[0].mxu0
        %v3052 = vpop.f32.mrb[0].mxu0
        %v3053 = vadd.f32 0.0, %v3052
        %v3054 = vpop.f32.mrb[0].mxu0
        %3055 = vmatprep.mubr.bf16.mxu0 0
        %3056 = vmatmul.mubr.bf16.gmra.mrb[0].mxu0 %v2942
        %v3057 = vpop.f32.mrb[0].mxu0
        %v3058 = vadd.f32 0.0, %v3057
        %v3059 = vpop.f32.mrb[0].mxu0
        %v3060 = vpop.f32.mrb[0].mxu0
        %v3061 = vadd.f32 0.0, %v3060
        %v3062 = vpop.f32.mrb[0].mxu0
        %3063 = vdwg.mxu0
        %3080 = vrot.lane.b32.xlu0 %v2038, 32
        %v3081 = vpop.permute.xlu0 %3080
        %3082 = vrot.lane.b32.xlu0 %v2041, 32
        %v3083 = vpop.permute.xlu0 %3082
        %3084 = vrot.lane.b32.xlu0 %v2046, 32
        %v3085 = vpop.permute.xlu0 %3084
        %3086 = vrot.lane.b32.xlu0 %v2049, 32
        %v3087 = vpop.permute.xlu0 %3086
        %3088 = vrot.lane.b32.xlu0 %v2054, 32
        %v3089 = vpop.permute.xlu0 %3088
        %3090 = vrot.lane.b32.xlu0 %v2057, 32
        %v3091 = vpop.permute.xlu0 %3090
        %3092 = vrot.lane.b32.xlu0 %v2062, 32
        %v3093 = vpop.permute.xlu0 %3092
        %3094 = vrot.lane.b32.xlu0 %v2065, 32
        %v3095 = vpop.permute.xlu0 %3094
        %3096 = vrot.lane.b32.xlu0 %v2070, 32
        %v3097 = vpop.permute.xlu0 %3096
        %3098 = vrot.lane.b32.xlu0 %v2073, 32
        %v3099 = vpop.permute.xlu0 %3098
        %3100 = vrot.lane.b32.xlu0 %v2078, 32
        %v3101 = vpop.permute.xlu0 %3100
        %3102 = vrot.lane.b32.xlu0 %v2081, 32
        %v3103 = vpop.permute.xlu0 %3102
        %3104 = vrot.lane.b32.xlu0 %v2086, 32
        %v3105 = vpop.permute.xlu0 %3104
        %3106 = vrot.lane.b32.xlu0 %v2089, 32
        %v3107 = vpop.permute.xlu0 %3106
        %3108 = vrot.lane.b32.xlu0 %v2094, 32
        %v3109 = vpop.permute.xlu0 %3108
        %3110 = vrot.lane.b32.xlu0 %v2097, 32
        %v3111 = vpop.permute.xlu0 %3110
        %3144 = vrot.lane.b32.xlu0 %v2520, 64
        %v3145 = vpop.permute.xlu0 %3144
        %3146 = vrot.lane.b32.xlu0 %v2523, 64
        %v3147 = vpop.permute.xlu0 %3146
        %3148 = vrot.lane.b32.xlu0 %v2528, 64
        %v3149 = vpop.permute.xlu0 %3148
        %3150 = vrot.lane.b32.xlu0 %v2531, 64
        %v3151 = vpop.permute.xlu0 %3150
        %3152 = vrot.lane.b32.xlu0 %v2536, 64
        %v3153 = vpop.permute.xlu0 %3152
        %3154 = vrot.lane.b32.xlu0 %v2539, 64
        %v3155 = vpop.permute.xlu0 %3154
        %3156 = vrot.lane.b32.xlu0 %v2544, 64
        %v3157 = vpop.permute.xlu0 %3156
        %3158 = vrot.lane.b32.xlu0 %v2547, 64
        %v3159 = vpop.permute.xlu0 %3158
        %3160 = vrot.lane.b32.xlu0 %v2552, 64
        %v3161 = vpop.permute.xlu0 %3160
        %3162 = vrot.lane.b32.xlu0 %v2555, 64
        %v3163 = vpop.permute.xlu0 %3162
        %3164 = vrot.lane.b32.xlu0 %v2560, 64
        %v3165 = vpop.permute.xlu0 %3164
        %3166 = vrot.lane.b32.xlu0 %v2563, 64
        %v3167 = vpop.permute.xlu0 %3166
        %3168 = vrot.lane.b32.xlu0 %v2568, 64
        %v3169 = vpop.permute.xlu0 %3168
        %3170 = vrot.lane.b32.xlu0 %v2571, 64
        %v3171 = vpop.permute.xlu0 %3170
        %3172 = vrot.lane.b32.xlu0 %v2576, 64
        %v3173 = vpop.permute.xlu0 %3172
        %3174 = vrot.lane.b32.xlu0 %v2579, 64
        %v3175 = vpop.permute.xlu0 %3174
        %3208 = vrot.lane.b32.xlu0 %v3002, 96
        %v3209 = vpop.permute.xlu0 %3208
        %3210 = vrot.lane.b32.xlu0 %v3005, 96
        %v3211 = vpop.permute.xlu0 %3210
        %3212 = vrot.lane.b32.xlu0 %v3010, 96
        %v3213 = vpop.permute.xlu0 %3212
        %3214 = vrot.lane.b32.xlu0 %v3013, 96
        %v3215 = vpop.permute.xlu0 %3214
        %3216 = vrot.lane.b32.xlu0 %v3018, 96
        %v3217 = vpop.permute.xlu0 %3216
        %3218 = vrot.lane.b32.xlu0 %v3021, 96
        %v3219 = vpop.permute.xlu0 %3218
        %3220 = vrot.lane.b32.xlu0 %v3026, 96
        %v3221 = vpop.permute.xlu0 %3220
        %3222 = vrot.lane.b32.xlu0 %v3029, 96
        %v3223 = vpop.permute.xlu0 %3222
        %3224 = vrot.lane.b32.xlu0 %v3034, 96
        %v3225 = vpop.permute.xlu0 %3224
        %3226 = vrot.lane.b32.xlu0 %v3037, 96
        %v3227 = vpop.permute.xlu0 %3226
        %3228 = vrot.lane.b32.xlu0 %v3042, 96
        %v3229 = vpop.permute.xlu0 %3228
        %3230 = vrot.lane.b32.xlu0 %v3045, 96
        %v3231 = vpop.permute.xlu0 %3230
        %3232 = vrot.lane.b32.xlu0 %v3050, 96
        %v3233 = vpop.permute.xlu0 %3232
        %3234 = vrot.lane.b32.xlu0 %v3053, 96
        %v3235 = vpop.permute.xlu0 %3234
        %3236 = vrot.lane.b32.xlu0 %v3058, 96
        %v3237 = vpop.permute.xlu0 %3236
        %3238 = vrot.lane.b32.xlu0 %v3061, 96
        %v3239 = vpop.permute.xlu0 %3238
        %v3256 = vsel %vm1159, %v1532, %v3081
        %v3257 = vsel %vm1159, %v1535, %v3083
        %v3258 = vsel %vm1159, %v1540, %v3085
        %v3259 = vsel %vm1159, %v1543, %v3087
        %v3260 = vsel %vm1159, %v1548, %v3089
        %v3261 = vsel %vm1159, %v1551, %v3091
        %v3262 = vsel %vm1159, %v1556, %v3093
        %v3263 = vsel %vm1159, %v1559, %v3095
        %v3264 = vsel %vm1159, %v1564, %v3097
        %v3265 = vsel %vm1159, %v1567, %v3099
        %v3266 = vsel %vm1159, %v1572, %v3101
        %v3267 = vsel %vm1159, %v1575, %v3103
        %v3268 = vsel %vm1159, %v1580, %v3105
        %v3269 = vsel %vm1159, %v1583, %v3107
        %v3270 = vsel %vm1159, %v1588, %v3109
        %v3271 = vsel %vm1159, %v1591, %v3111
        %vm3272 = vcmask 523264
        %v3273 = vsel %vm3272, %v3256, %v3145
        %v3274 = vsel %vm3272, %v3257, %v3147
        %v3275 = vsel %vm3272, %v3258, %v3149
        %v3276 = vsel %vm3272, %v3259, %v3151
        %v3277 = vsel %vm3272, %v3260, %v3153
        %v3278 = vsel %vm3272, %v3261, %v3155
        %v3279 = vsel %vm3272, %v3262, %v3157
        %v3280 = vsel %vm3272, %v3263, %v3159
        %v3281 = vsel %vm3272, %v3264, %v3161
        %v3282 = vsel %vm3272, %v3265, %v3163
        %v3283 = vsel %vm3272, %v3266, %v3165
        %v3284 = vsel %vm3272, %v3267, %v3167
        %v3285 = vsel %vm3272, %v3268, %v3169
        %v3286 = vsel %vm3272, %v3269, %v3171
        %v3287 = vsel %vm3272, %v3270, %v3173
        %v3288 = vsel %vm3272, %v3271, %v3175
        %vm3289 = vcmask 785408
        %v3290 = vsel %vm3289, %v3273, %v3209
        %v3291 = vsel %vm3289, %v3274, %v3211
        %v3292 = vsel %vm3289, %v3275, %v3213
        %v3293 = vsel %vm3289, %v3276, %v3215
        %v3294 = vsel %vm3289, %v3277, %v3217
        %v3295 = vsel %vm3289, %v3278, %v3219
        %v3296 = vsel %vm3289, %v3279, %v3221
        %v3297 = vsel %vm3289, %v3280, %v3223
        %v3298 = vsel %vm3289, %v3281, %v3225
        %v3299 = vsel %vm3289, %v3282, %v3227
        %v3300 = vsel %vm3289, %v3283, %v3229
        %v3301 = vsel %vm3289, %v3284, %v3231
        %v3302 = vsel %vm3289, %v3285, %v3233
        %v3303 = vsel %vm3289, %v3286, %v3235
        %v3304 = vsel %vm3289, %v3287, %v3237
        %v3305 = vsel %vm3289, %v3288, %v3239
        %v3306 = vpack.c.bf16 %v3291, %v3290
        %v3307 = vpack.c.bf16 %v3293, %v3292
        %v3308 = vpack.c.bf16 %v3295, %v3294
        %v3309 = vpack.c.bf16 %v3297, %v3296
        %v3310 = vpack.c.bf16 %v3299, %v3298
        %v3311 = vpack.c.bf16 %v3301, %v3300
        %v3312 = vpack.c.bf16 %v3303, %v3302
        %v3313 = vpack.c.bf16 %v3305, %v3304
        %v3314 = vld [vmem:[#allocation7] sm:$0xf]
        %v3315 = vld [vmem:[#allocation7 + $0x4] sm:$0xf]
        %v3316 = vld [vmem:[#allocation7 + $0x8] sm:$0xf]
        %v3317 = vld [vmem:[#allocation7 + $0xc] sm:$0xf]
        %v3318 = vld [vmem:[#allocation7 + $0x10] sm:$0xf]
        %v3319 = vld [vmem:[#allocation7 + $0x14] sm:$0xf]
        %v3320 = vld [vmem:[#allocation7 + $0x18] sm:$0xf]
        %v3321 = vld [vmem:[#allocation7 + $0x1c] sm:$0xf]
        %v3322 = vld [vmem:[#allocation7 + $0x20] sm:$0xf]
        %v3323 = vld [vmem:[#allocation7 + $0x24] sm:$0xf]
        %v3324 = vld [vmem:[#allocation7 + $0x28] sm:$0xf]
        %v3325 = vld [vmem:[#allocation7 + $0x2c] sm:$0xf]
        %v3326 = vld [vmem:[#allocation7 + $0x30] sm:$0xf]
        %v3327 = vld [vmem:[#allocation7 + $0x34] sm:$0xf]
        %v3328 = vld [vmem:[#allocation7 + $0x38] sm:$0xf]
        %v3329 = vld [vmem:[#allocation7 + $0x3c] sm:$0xf]
        %v3330 = vld [vmem:[%s5] sm:$0x1]
        %v3332 = vlaneseq
        %v3333 = vshrl.u32 %v3332, 7
        %v3334 = vsub.s32 0, %v3333
        %v3335 = vrot.slane %v3330, %v3334
        %v3353 = vunpack.c.l.b16 %v3314
        %v3354 = vunpack.c.l.b16 %v3315
        %v3355 = vunpack.c.l.b16 %v3316
        %v3356 = vunpack.c.l.b16 %v3317
        %v3357 = vunpack.c.l.b16 %v3318
        %v3358 = vunpack.c.l.b16 %v3319
        %v3359 = vunpack.c.l.b16 %v3320
        %v3360 = vunpack.c.l.b16 %v3321
        %v3361 = vunpack.c.l.b16 %v3322
        %v3362 = vunpack.c.l.b16 %v3323
        %v3363 = vunpack.c.l.b16 %v3324
        %v3364 = vunpack.c.l.b16 %v3325
        %v3365 = vunpack.c.l.b16 %v3326
        %v3366 = vunpack.c.l.b16 %v3327
        %v3367 = vunpack.c.l.b16 %v3328
        %v3368 = vunpack.c.l.b16 %v3329
        %v3369 = vpack.c.b16 %v3354, %v3353
        %v3370 = vpack.c.b16 %v3356, %v3355
        %v3371 = vpack.c.b16 %v3358, %v3357
        %v3372 = vpack.c.b16 %v3360, %v3359
        %v3373 = vpack.c.b16 %v3362, %v3361
        %v3374 = vpack.c.b16 %v3364, %v3363
        %v3375 = vpack.c.b16 %v3366, %v3365
        %v3376 = vpack.c.b16 %v3368, %v3367
        %3385 = vmatprep.subr.bf16.mxu0 0
        %3386 = vmatpush1.bf16.msra.mxu0 %v3369
        %3387 = vmatprep.subr.bf16.mxu0 0
        %3388 = vmatpush1.bf16.msra.mxu0 %v3370
        %3389 = vmatprep.subr.bf16.mxu0 0
        %3390 = vmatpush1.bf16.msra.mxu0 %v3371
        %3391 = vmatprep.subr.bf16.mxu0 0
        %3392 = vmatpush1.bf16.msra.mxu0 %v3372
        %3393 = vmatprep.subr.bf16.mxu0 0
        %3394 = vmatpush1.bf16.msra.mxu0 %v3373
        %3395 = vmatprep.subr.bf16.mxu0 0
        %3396 = vmatpush1.bf16.msra.mxu0 %v3374
        %3397 = vmatprep.subr.bf16.mxu0 0
        %3398 = vmatpush1.bf16.msra.mxu0 %v3375
        %3399 = vmatprep.subr.bf16.mxu0 0
        %3400 = vmatpush1.bf16.msra.mxu0 %v3376
        %3401 = vmatprep.subr.bf16.mxu0 0
        %3402 = vmatpush1.bf16.msra.mxu0 0
        %3403 = vmatprep.subr.bf16.mxu0 0
        %3404 = vmatpush1.bf16.msra.mxu0 0
        %3405 = vmatprep.subr.bf16.mxu0 0
        %3406 = vmatpush1.bf16.msra.mxu0 0
        %3407 = vmatprep.subr.bf16.mxu0 0
        %3408 = vmatpush1.bf16.msra.mxu0 0
        %3409 = vmatprep.subr.bf16.mxu0 0
        %3410 = vmatpush1.bf16.msra.mxu0 0
        %3411 = vmatprep.subr.bf16.mxu0 0
        %3412 = vmatpush1.bf16.msra.mxu0 0
        %3413 = vmatprep.subr.bf16.mxu0 0
        %3414 = vmatpush1.bf16.msra.mxu0 0
        %3415 = vmatprep.subr.bf16.mxu0 0
        %3416 = vmatpush1.bf16.msra.mxu0 0
        %3417 = vmatprep.mubr.bf16.mxu0 0
        %3418 = vmatmul.mubr.bf16.gmra.mrb[0].mxu0 %v3306
        %v3419 = vpop.f32.mrb[0].mxu0
        %v3420 = vadd.f32 %v3335, %v3419
        %v3421 = vpop.f32.mrb[0].mxu0
        %v3422 = vpop.f32.mrb[0].mxu0
        %v3423 = vadd.f32 %v3335, %v3422
        %v3424 = vpop.f32.mrb[0].mxu0
        %3425 = vmatprep.mubr.bf16.mxu0 0
        %3426 = vmatmul.mubr.bf16.gmra.mrb[0].mxu0 %v3307
        %v3427 = vpop.f32.mrb[0].mxu0
        %v3428 = vadd.f32 %v3335, %v3427
        %v3429 = vpop.f32.mrb[0].mxu0
        %v3430 = vpop.f32.mrb[0].mxu0
        %v3431 = vadd.f32 %v3335, %v3430
        %v3432 = vpop.f32.mrb[0].mxu0
        %3433 = vmatprep.mubr.bf16.mxu0 0
        %3434 = vmatmul.mubr.bf16.gmra.mrb[0].mxu0 %v3308
        %v3435 = vpop.f32.mrb[0].mxu0
        %v3436 = vadd.f32 %v3335, %v3435
        %v3437 = vpop.f32.mrb[0].mxu0
        %v3438 = vpop.f32.mrb[0].mxu0
        %v3439 = vadd.f32 %v3335, %v3438
        %v3440 = vpop.f32.mrb[0].mxu0
        %3441 = vmatprep.mubr.bf16.mxu0 0
        %3442 = vmatmul.mubr.bf16.gmra.mrb[0].mxu0 %v3309
        %v3443 = vpop.f32.mrb[0].mxu0
        %v3444 = vadd.f32 %v3335, %v3443
        %v3445 = vpop.f32.mrb[0].mxu0
        %v3446 = vpop.f32.mrb[0].mxu0
        %v3447 = vadd.f32 %v3335, %v3446
        %v3448 = vpop.f32.mrb[0].mxu0
        %3449 = vmatprep.mubr.bf16.mxu0 0
        %3450 = vmatmul.mubr.bf16.gmra.mrb[0].mxu0 %v3310
        %v3451 = vpop.f32.mrb[0].mxu0
        %v3452 = vadd.f32 %v3335, %v3451
        %v3453 = vpop.f32.mrb[0].mxu0
        %v3454 = vpop.f32.mrb[0].mxu0
        %v3455 = vadd.f32 %v3335, %v3454
        %v3456 = vpop.f32.mrb[0].mxu0
        %3457 = vmatprep.mubr.bf16.mxu0 0
        %3458 = vmatmul.mubr.bf16.gmra.mrb[0].mxu0 %v3311
        %v3459 = vpop.f32.mrb[0].mxu0
        %v3460 = vadd.f32 %v3335, %v3459
        %v3461 = vpop.f32.mrb[0].mxu0
        %v3462 = vpop.f32.mrb[0].mxu0
        %v3463 = vadd.f32 %v3335, %v3462
        %v3464 = vpop.f32.mrb[0].mxu0
        %3465 = vmatprep.mubr.bf16.mxu0 0
        %3466 = vmatmul.mubr.bf16.gmra.mrb[0].mxu0 %v3312
        %v3467 = vpop.f32.mrb[0].mxu0
        %v3468 = vadd.f32 %v3335, %v3467
        %v3469 = vpop.f32.mrb[0].mxu0
        %v3470 = vpop.f32.mrb[0].mxu0
        %v3471 = vadd.f32 %v3335, %v3470
        %v3472 = vpop.f32.mrb[0].mxu0
        %3473 = vmatprep.mubr.bf16.mxu0 0
        %3474 = vmatmul.mubr.bf16.gmra.mrb[0].mxu0 %v3313
        %v3475 = vpop.f32.mrb[0].mxu0
        %v3476 = vadd.f32 %v3335, %v3475
        %v3477 = vpop.f32.mrb[0].mxu0
        %v3478 = vpop.f32.mrb[0].mxu0
        %v3479 = vadd.f32 %v3335, %v3478
        %v3480 = vpop.f32.mrb[0].mxu0
        %3481 = vdwg.mxu0
        %v3482 = vadd.f32 %v491, %v3420
        %v3483 = vadd.f32 %v492, %v3423
        %v3484 = vadd.f32 %v493, %v3428
        %v3485 = vadd.f32 %v494, %v3431
        %v3486 = vadd.f32 %v495, %v3436
        %v3487 = vadd.f32 %v496, %v3439
        %v3488 = vadd.f32 %v497, %v3444
        %v3489 = vadd.f32 %v498, %v3447
        %v3490 = vadd.f32 %v499, %v3452
        %v3491 = vadd.f32 %v500, %v3455
        %v3492 = vadd.f32 %v501, %v3460
        %v3493 = vadd.f32 %v502, %v3463
        %v3494 = vadd.f32 %v503, %v3468
        %v3495 = vadd.f32 %v504, %v3471
        %v3496 = vadd.f32 %v505, %v3476
        %v3497 = vadd.f32 %v506, %v3479
        %v3498 = vld [vmem:[%s6] sm:$0x1]
        %v3499 = vld [vmem:[%s7] sm:$0x1]
        %3500 = vadd.xlane.f32.xlu0 %v3482
        %v3501 = vpop.xlane.xlu0 %3500
        %3502 = vadd.xlane.f32.xlu0 %v3483
        %v3503 = vpop.xlane.xlu0 %3502
        %3504 = vadd.xlane.f32.xlu0 %v3484
        %v3505 = vpop.xlane.xlu0 %3504
        %3506 = vadd.xlane.f32.xlu0 %v3485
        %v3507 = vpop.xlane.xlu0 %3506
        %3508 = vadd.xlane.f32.xlu0 %v3486
        %v3509 = vpop.xlane.xlu0 %3508
        %3510 = vadd.xlane.f32.xlu0 %v3487
        %v3511 = vpop.xlane.xlu0 %3510
        %3512 = vadd.xlane.f32.xlu0 %v3488
        %v3513 = vpop.xlane.xlu0 %3512
        %3514 = vadd.xlane.f32.xlu0 %v3489
        %v3515 = vpop.xlane.xlu0 %3514
        %3516 = vadd.xlane.f32.xlu0 %v3490
        %v3517 = vpop.xlane.xlu0 %3516
        %3518 = vadd.xlane.f32.xlu0 %v3491
        %v3519 = vpop.xlane.xlu0 %3518
        %3520 = vadd.xlane.f32.xlu0 %v3492
        %v3521 = vpop.xlane.xlu0 %3520
        %3522 = vadd.xlane.f32.xlu0 %v3493
        %v3523 = vpop.xlane.xlu0 %3522
        %3524 = vadd.xlane.f32.xlu0 %v3494
        %v3525 = vpop.xlane.xlu0 %3524
        %3526 = vadd.xlane.f32.xlu0 %v3495
        %v3527 = vpop.xlane.xlu0 %3526
        %3528 = vadd.xlane.f32.xlu0 %v3496
        %v3529 = vpop.xlane.xlu0 %3528
        %3530 = vadd.xlane.f32.xlu0 %v3497
        %v3531 = vpop.xlane.xlu0 %3530
        %v3532 = vmul.f32 %v3501, %v541
        %v3533 = vmul.f32 %v3503, %v541
        %v3534 = vmul.f32 %v3505, %v541
        %v3535 = vmul.f32 %v3507, %v541
        %v3536 = vmul.f32 %v3509, %v541
        %v3537 = vmul.f32 %v3511, %v541
        %v3538 = vmul.f32 %v3513, %v541
        %v3539 = vmul.f32 %v3515, %v541
        %v3540 = vmul.f32 %v3517, %v541
        %v3541 = vmul.f32 %v3519, %v541
        %v3542 = vmul.f32 %v3521, %v541
        %v3543 = vmul.f32 %v3523, %v541
        %v3544 = vmul.f32 %v3525, %v541
        %v3545 = vmul.f32 %v3527, %v541
        %v3546 = vmul.f32 %v3529, %v541
        %v3547 = vmul.f32 %v3531, %v541
        %v3548 = vsub.f32 %v3482, %v3532
        %v3549 = vsub.f32 %v3483, %v3533
        %v3550 = vsub.f32 %v3484, %v3534
        %v3551 = vsub.f32 %v3485, %v3535
        %v3552 = vsub.f32 %v3486, %v3536
        %v3553 = vsub.f32 %v3487, %v3537
        %v3554 = vsub.f32 %v3488, %v3538
        %v3555 = vsub.f32 %v3489, %v3539
        %v3556 = vsub.f32 %v3490, %v3540
        %v3557 = vsub.f32 %v3491, %v3541
        %v3558 = vsub.f32 %v3492, %v3542
        %v3559 = vsub.f32 %v3493, %v3543
        %v3560 = vsub.f32 %v3494, %v3544
        %v3561 = vsub.f32 %v3495, %v3545
        %v3562 = vsub.f32 %v3496, %v3546
        %v3563 = vsub.f32 %v3497, %v3547
        %v3564 = vmul.f32 %v3548, %v3548
        %v3565 = vmul.f32 %v3549, %v3549
        %v3566 = vmul.f32 %v3550, %v3550
        %v3567 = vmul.f32 %v3551, %v3551
        %v3568 = vmul.f32 %v3552, %v3552
        %v3569 = vmul.f32 %v3553, %v3553
        %v3570 = vmul.f32 %v3554, %v3554
        %v3571 = vmul.f32 %v3555, %v3555
        %v3572 = vmul.f32 %v3556, %v3556
        %v3573 = vmul.f32 %v3557, %v3557
        %v3574 = vmul.f32 %v3558, %v3558
        %v3575 = vmul.f32 %v3559, %v3559
        %v3576 = vmul.f32 %v3560, %v3560
        %v3577 = vmul.f32 %v3561, %v3561
        %v3578 = vmul.f32 %v3562, %v3562
        %v3579 = vmul.f32 %v3563, %v3563
        %3580 = vadd.xlane.f32.xlu0 %v3564
        %v3581 = vpop.xlane.xlu0 %3580
        %3582 = vadd.xlane.f32.xlu0 %v3565
        %v3583 = vpop.xlane.xlu0 %3582
        %3584 = vadd.xlane.f32.xlu0 %v3566
        %v3585 = vpop.xlane.xlu0 %3584
        %3586 = vadd.xlane.f32.xlu0 %v3567
        %v3587 = vpop.xlane.xlu0 %3586
        %3588 = vadd.xlane.f32.xlu0 %v3568
        %v3589 = vpop.xlane.xlu0 %3588
        %3590 = vadd.xlane.f32.xlu0 %v3569
        %v3591 = vpop.xlane.xlu0 %3590
        %3592 = vadd.xlane.f32.xlu0 %v3570
        %v3593 = vpop.xlane.xlu0 %3592
        %3594 = vadd.xlane.f32.xlu0 %v3571
        %v3595 = vpop.xlane.xlu0 %3594
        %3596 = vadd.xlane.f32.xlu0 %v3572
        %v3597 = vpop.xlane.xlu0 %3596
        %3598 = vadd.xlane.f32.xlu0 %v3573
        %v3599 = vpop.xlane.xlu0 %3598
        %3600 = vadd.xlane.f32.xlu0 %v3574
        %v3601 = vpop.xlane.xlu0 %3600
        %3602 = vadd.xlane.f32.xlu0 %v3575
        %v3603 = vpop.xlane.xlu0 %3602
        %3604 = vadd.xlane.f32.xlu0 %v3576
        %v3605 = vpop.xlane.xlu0 %3604
        %3606 = vadd.xlane.f32.xlu0 %v3577
        %v3607 = vpop.xlane.xlu0 %3606
        %3608 = vadd.xlane.f32.xlu0 %v3578
        %v3609 = vpop.xlane.xlu0 %3608
        %3610 = vadd.xlane.f32.xlu0 %v3579
        %v3611 = vpop.xlane.xlu0 %3610
        %v3612 = vmul.f32 %v3581, %v541
        %v3613 = vmul.f32 %v3583, %v541
        %v3614 = vmul.f32 %v3585, %v541
        %v3615 = vmul.f32 %v3587, %v541
        %v3616 = vmul.f32 %v3589, %v541
        %v3617 = vmul.f32 %v3591, %v541
        %v3618 = vmul.f32 %v3593, %v541
        %v3619 = vmul.f32 %v3595, %v541
        %v3620 = vmul.f32 %v3597, %v541
        %v3621 = vmul.f32 %v3599, %v541
        %v3622 = vmul.f32 %v3601, %v541
        %v3623 = vmul.f32 %v3603, %v541
        %v3624 = vmul.f32 %v3605, %v541
        %v3625 = vmul.f32 %v3607, %v541
        %v3626 = vmul.f32 %v3609, %v541
        %v3627 = vmul.f32 %v3611, %v541
        %v3628 = vadd.f32 %v3612, 1e-05
        %v3629 = vadd.f32 %v3613, 1e-05
        %v3630 = vadd.f32 %v3614, 1e-05
        %v3631 = vadd.f32 %v3615, 1e-05
        %v3632 = vadd.f32 %v3616, 1e-05
        %v3633 = vadd.f32 %v3617, 1e-05
        %v3634 = vadd.f32 %v3618, 1e-05
        %v3635 = vadd.f32 %v3619, 1e-05
        %v3636 = vadd.f32 %v3620, 1e-05
        %v3637 = vadd.f32 %v3621, 1e-05
        %v3638 = vadd.f32 %v3622, 1e-05
        %v3639 = vadd.f32 %v3623, 1e-05
        %v3640 = vadd.f32 %v3624, 1e-05
        %v3641 = vadd.f32 %v3625, 1e-05
        %v3642 = vadd.f32 %v3626, 1e-05
        %v3643 = vadd.f32 %v3627, 1e-05
        %v3644 = vrsqrt.pop %v3628
        %v3645 = vrsqrt.pop %v3629
        %v3646 = vrsqrt.pop %v3630
        %v3647 = vrsqrt.pop %v3631
        %v3648 = vrsqrt.pop %v3632
        %v3649 = vrsqrt.pop %v3633
        %v3650 = vrsqrt.pop %v3634
        %v3651 = vrsqrt.pop %v3635
        %v3652 = vrsqrt.pop %v3636
        %v3653 = vrsqrt.pop %v3637
        %v3654 = vrsqrt.pop %v3638
        %v3655 = vrsqrt.pop %v3639
        %v3656 = vrsqrt.pop %v3640
        %v3657 = vrsqrt.pop %v3641
        %v3658 = vrsqrt.pop %v3642
        %v3659 = vrsqrt.pop %v3643
        %v3660 = vmul.f32 %v3548, %v3644
        %v3661 = vmul.f32 %v3549, %v3645
        %v3662 = vmul.f32 %v3550, %v3646
        %v3663 = vmul.f32 %v3551, %v3647
        %v3664 = vmul.f32 %v3552, %v3648
        %v3665 = vmul.f32 %v3553, %v3649
        %v3666 = vmul.f32 %v3554, %v3650
        %v3667 = vmul.f32 %v3555, %v3651
        %v3668 = vmul.f32 %v3556, %v3652
        %v3669 = vmul.f32 %v3557, %v3653
        %v3670 = vmul.f32 %v3558, %v3654
        %v3671 = vmul.f32 %v3559, %v3655
        %v3672 = vmul.f32 %v3560, %v3656
        %v3673 = vmul.f32 %v3561, %v3657
        %v3674 = vmul.f32 %v3562, %v3658
        %v3675 = vmul.f32 %v3563, %v3659
        %v3677 = vlaneseq
        %v3678 = vshrl.u32 %v3677, 7
        %v3679 = vsub.s32 0, %v3678
        %v3680 = vrot.slane %v3498, %v3679
        %v3682 = vmul.f32 %v3660, %v3680
        %v3683 = vmul.f32 %v3661, %v3680
        %v3684 = vmul.f32 %v3662, %v3680
        %v3685 = vmul.f32 %v3663, %v3680
        %v3686 = vmul.f32 %v3664, %v3680
        %v3687 = vmul.f32 %v3665, %v3680
        %v3688 = vmul.f32 %v3666, %v3680
        %v3689 = vmul.f32 %v3667, %v3680
        %v3690 = vmul.f32 %v3668, %v3680
        %v3691 = vmul.f32 %v3669, %v3680
        %v3692 = vmul.f32 %v3670, %v3680
        %v3693 = vmul.f32 %v3671, %v3680
        %v3694 = vmul.f32 %v3672, %v3680
        %v3695 = vmul.f32 %v3673, %v3680
        %v3696 = vmul.f32 %v3674, %v3680
        %v3697 = vmul.f32 %v3675, %v3680
        %v3699 = vlaneseq
        %v3700 = vshrl.u32 %v3699, 7
        %v3701 = vsub.s32 0, %v3700
        %v3702 = vrot.slane %v3499, %v3701
        %v3704 = vadd.f32 %v3682, %v3702
        %v3705 = vadd.f32 %v3683, %v3702
        %v3706 = vadd.f32 %v3684, %v3702
        %v3707 = vadd.f32 %v3685, %v3702
        %v3708 = vadd.f32 %v3686, %v3702
        %v3709 = vadd.f32 %v3687, %v3702
        %v3710 = vadd.f32 %v3688, %v3702
        %v3711 = vadd.f32 %v3689, %v3702
        %v3712 = vadd.f32 %v3690, %v3702
        %v3713 = vadd.f32 %v3691, %v3702
        %v3714 = vadd.f32 %v3692, %v3702
        %v3715 = vadd.f32 %v3693, %v3702
        %v3716 = vadd.f32 %v3694, %v3702
        %v3717 = vadd.f32 %v3695, %v3702
        %v3718 = vadd.f32 %v3696, %v3702
        %v3719 = vadd.f32 %v3697, %v3702
        %v3720 = vpack.c.bf16 %v3705, %v3704
        %v3721 = vpack.c.bf16 %v3707, %v3706
        %v3722 = vpack.c.bf16 %v3709, %v3708
        %v3723 = vpack.c.bf16 %v3711, %v3710
        %v3724 = vpack.c.bf16 %v3713, %v3712
        %v3725 = vpack.c.bf16 %v3715, %v3714
        %v3726 = vpack.c.bf16 %v3717, %v3716
        %v3727 = vpack.c.bf16 %v3719, %v3718
        %v3728 = vld [vmem:[#allocation8] sm:$0xff]
        %v3729 = vld [vmem:[#allocation8 + $0x8] sm:$0xff]
        %v3730 = vld [vmem:[#allocation8 + $0x10] sm:$0xff]
        %v3731 = vld [vmem:[#allocation8 + $0x18] sm:$0xff]
        %v3732 = vld [vmem:[#allocation8 + $0x20] sm:$0xff]
        %v3733 = vld [vmem:[#allocation8 + $0x28] sm:$0xff]
        %v3734 = vld [vmem:[#allocation8 + $0x30] sm:$0xff]
        %v3735 = vld [vmem:[#allocation8 + $0x38] sm:$0xff]
        %v3736 = vld [vmem:[#allocation8 + $0x40] sm:$0xff]
        %v3737 = vld [vmem:[#allocation8 + $0x48] sm:$0xff]
        %v3738 = vld [vmem:[#allocation8 + $0x50] sm:$0xff]
        %v3739 = vld [vmem:[#allocation8 + $0x58] sm:$0xff]
        %v3740 = vld [vmem:[#allocation8 + $0x60] sm:$0xff]
        %v3741 = vld [vmem:[#allocation8 + $0x68] sm:$0xff]
        %v3742 = vld [vmem:[#allocation8 + $0x70] sm:$0xff]
        %v3743 = vld [vmem:[#allocation8 + $0x78] sm:$0xff]
        %v3744 = vld [vmem:[#allocation8 + $0x80] sm:$0xff]
        %v3745 = vld [vmem:[#allocation8 + $0x88] sm:$0xff]
        %v3746 = vld [vmem:[#allocation8 + $0x90] sm:$0xff]
        %v3747 = vld [vmem:[#allocation8 + $0x98] sm:$0xff]
        %v3748 = vld [vmem:[#allocation8 + $0xa0] sm:$0xff]
        %v3749 = vld [vmem:[#allocation8 + $0xa8] sm:$0xff]
        %v3750 = vld [vmem:[#allocation8 + $0xb0] sm:$0xff]
        %v3751 = vld [vmem:[#allocation8 + $0xb8] sm:$0xff]
        %v3752 = vld [vmem:[#allocation8 + $0xc0] sm:$0xff]
        %v3753 = vld [vmem:[#allocation8 + $0xc8] sm:$0xff]
        %v3754 = vld [vmem:[#allocation8 + $0xd0] sm:$0xff]
        %v3755 = vld [vmem:[#allocation8 + $0xd8] sm:$0xff]
        %v3756 = vld [vmem:[#allocation8 + $0xe0] sm:$0xff]
        %v3757 = vld [vmem:[#allocation8 + $0xe8] sm:$0xff]
        %v3758 = vld [vmem:[#allocation8 + $0xf0] sm:$0xff]
        %v3759 = vld [vmem:[#allocation8 + $0xf8] sm:$0xff]
        %v3760 = vld [vmem:[%s9] sm:$0xf]
        %v3762 = vlaneseq
        %v3763 = vshrl.u32 %v3762, 7
        %v3764 = vsub.s32 0, %v3763
        %v3765 = vrot.slane %v3760, %v3764
        %v3766 = vlaneseq
        %v3767 = vshrl.u32 %v3766, 7
        %v3768 = vsub.s32 1, %v3767
        %v3769 = vrot.slane %v3760, %v3768
        %v3770 = vlaneseq
        %v3771 = vshrl.u32 %v3770, 7
        %v3772 = vsub.s32 2, %v3771
        %v3773 = vrot.slane %v3760, %v3772
        %v3774 = vlaneseq
        %v3775 = vshrl.u32 %v3774, 7
        %v3776 = vsub.s32 3, %v3775
        %v3777 = vrot.slane %v3760, %v3776
        %v3814 = vunpack.c.l.b16 %v3728
        %v3815 = vunpack.c.h.b16 %v3728
        %v3816 = vunpack.c.l.b16 %v3729
        %v3817 = vunpack.c.h.b16 %v3729
        %v3818 = vunpack.c.l.b16 %v3730
        %v3819 = vunpack.c.h.b16 %v3730
        %v3820 = vunpack.c.l.b16 %v3731
        %v3821 = vunpack.c.h.b16 %v3731
        %v3822 = vunpack.c.l.b16 %v3732
        %v3823 = vunpack.c.h.b16 %v3732
        %v3824 = vunpack.c.l.b16 %v3733
        %v3825 = vunpack.c.h.b16 %v3733
        %v3826 = vunpack.c.l.b16 %v3734
        %v3827 = vunpack.c.h.b16 %v3734
        %v3828 = vunpack.c.l.b16 %v3735
        %v3829 = vunpack.c.h.b16 %v3735
        %v3830 = vunpack.c.l.b16 %v3736
        %v3831 = vunpack.c.h.b16 %v3736
        %v3832 = vunpack.c.l.b16 %v3737
        %v3833 = vunpack.c.h.b16 %v3737
        %v3834 = vunpack.c.l.b16 %v3738
        %v3835 = vunpack.c.h.b16 %v3738
        %v3836 = vunpack.c.l.b16 %v3739
        %v3837 = vunpack.c.h.b16 %v3739
        %v3838 = vunpack.c.l.b16 %v3740
        %v3839 = vunpack.c.h.b16 %v3740
        %v3840 = vunpack.c.l.b16 %v3741
        %v3841 = vunpack.c.h.b16 %v3741
        %v3842 = vunpack.c.l.b16 %v3742
        %v3843 = vunpack.c.h.b16 %v3742
        %v3844 = vunpack.c.l.b16 %v3743
        %v3845 = vunpack.c.h.b16 %v3743
        %v3846 = vunpack.c.l.b16 %v3744
        %v3847 = vunpack.c.h.b16 %v3744
        %v3848 = vunpack.c.l.b16 %v3745
        %v3849 = vunpack.c.h.b16 %v3745
        %v3850 = vunpack.c.l.b16 %v3746
        %v3851 = vunpack.c.h.b16 %v3746
        %v3852 = vunpack.c.l.b16 %v3747
        %v3853 = vunpack.c.h.b16 %v3747
        %v3854 = vunpack.c.l.b16 %v3748
        %v3855 = vunpack.c.h.b16 %v3748
        %v3856 = vunpack.c.l.b16 %v3749
        %v3857 = vunpack.c.h.b16 %v3749
        %v3858 = vunpack.c.l.b16 %v3750
        %v3859 = vunpack.c.h.b16 %v3750
        %v3860 = vunpack.c.l.b16 %v3751
        %v3861 = vunpack.c.h.b16 %v3751
        %v3862 = vunpack.c.l.b16 %v3752
        %v3863 = vunpack.c.h.b16 %v3752
        %v3864 = vunpack.c.l.b16 %v3753
        %v3865 = vunpack.c.h.b16 %v3753
        %v3866 = vunpack.c.l.b16 %v3754
        %v3867 = vunpack.c.h.b16 %v3754
        %v3868 = vunpack.c.l.b16 %v3755
        %v3869 = vunpack.c.h.b16 %v3755
        %v3870 = vunpack.c.l.b16 %v3756
        %v3871 = vunpack.c.h.b16 %v3756
        %v3872 = vunpack.c.l.b16 %v3757
        %v3873 = vunpack.c.h.b16 %v3757
        %v3874 = vunpack.c.l.b16 %v3758
        %v3875 = vunpack.c.h.b16 %v3758
        %v3876 = vunpack.c.l.b16 %v3759
        %v3877 = vunpack.c.h.b16 %v3759
        %v3878 = vpack.c.b16 %v3818, %v3814
        %v3879 = vpack.c.b16 %v3819, %v3815
        %v3880 = vpack.c.b16 %v3820, %v3816
        %v3881 = vpack.c.b16 %v3821, %v3817
        %v3882 = vpack.c.b16 %v3826, %v3822
        %v3883 = vpack.c.b16 %v3827, %v3823
        %v3884 = vpack.c.b16 %v3828, %v3824
        %v3885 = vpack.c.b16 %v3829, %v3825
        %v3886 = vpack.c.b16 %v3834, %v3830
        %v3887 = vpack.c.b16 %v3835, %v3831
        %v3888 = vpack.c.b16 %v3836, %v3832
        %v3889 = vpack.c.b16 %v3837, %v3833
        %v3890 = vpack.c.b16 %v3842, %v3838
        %v3891 = vpack.c.b16 %v3843, %v3839
        %v3892 = vpack.c.b16 %v3844, %v3840
        %v3893 = vpack.c.b16 %v3845, %v3841
        %v3894 = vpack.c.b16 %v3850, %v3846
        %v3895 = vpack.c.b16 %v3851, %v3847
        %v3896 = vpack.c.b16 %v3852, %v3848
        %v3897 = vpack.c.b16 %v3853, %v3849
        %v3898 = vpack.c.b16 %v3858, %v3854
        %v3899 = vpack.c.b16 %v3859, %v3855
        %v3900 = vpack.c.b16 %v3860, %v3856
        %v3901 = vpack.c.b16 %v3861, %v3857
        %v3902 = vpack.c.b16 %v3866, %v3862
        %v3903 = vpack.c.b16 %v3867, %v3863
        %v3904 = vpack.c.b16 %v3868, %v3864
        %v3905 = vpack.c.b16 %v3869, %v3865
        %v3906 = vpack.c.b16 %v3874, %v3870
        %v3907 = vpack.c.b16 %v3875, %v3871
        %v3908 = vpack.c.b16 %v3876, %v3872
        %v3909 = vpack.c.b16 %v3877, %v3873
        %3942 = vmatprep.subr.bf16.mxu0 %v3879
        %3943 = vmatpush1.bf16.msra.mxu0 %v3878
        %3944 = vmatprep.subr.bf16.mxu0 %v3883
        %3945 = vmatpush1.bf16.msra.mxu0 %v3882
        %3946 = vmatprep.subr.bf16.mxu0 %v3887
        %3947 = vmatpush1.bf16.msra.mxu0 %v3886
        %3948 = vmatprep.subr.bf16.mxu0 %v3891
        %3949 = vmatpush1.bf16.msra.mxu0 %v3890
        %3950 = vmatprep.subr.bf16.mxu0 %v3895
        %3951 = vmatpush1.bf16.msra.mxu0 %v3894
        %3952 = vmatprep.subr.bf16.mxu0 %v3899
        %3953 = vmatpush1.bf16.msra.mxu0 %v3898
        %3954 = vmatprep.subr.bf16.mxu0 %v3903
        %3955 = vmatpush1.bf16.msra.mxu0 %v3902
        %3956 = vmatprep.subr.bf16.mxu0 %v3907
        %3957 = vmatpush1.bf16.msra.mxu0 %v3906
        %3958 = vmatprep.subr.bf16.mxu0 0
        %3959 = vmatpush1.bf16.msra.mxu0 0
        %3960 = vmatprep.subr.bf16.mxu0 0
        %3961 = vmatpush1.bf16.msra.mxu0 0
        %3962 = vmatprep.subr.bf16.mxu0 0
        %3963 = vmatpush1.bf16.msra.mxu0 0
        %3964 = vmatprep.subr.bf16.mxu0 0
        %3965 = vmatpush1.bf16.msra.mxu0 0
        %3966 = vmatprep.subr.bf16.mxu0 0
        %3967 = vmatpush1.bf16.msra.mxu0 0
        %3968 = vmatprep.subr.bf16.mxu0 0
        %3969 = vmatpush1.bf16.msra.mxu0 0
        %3970 = vmatprep.subr.bf16.mxu0 0
        %3971 = vmatpush1.bf16.msra.mxu0 0
        %3972 = vmatprep.subr.bf16.mxu0 0
        %3973 = vmatpush1.bf16.msra.mxu0 0
        %3974 = vmatprep.mubr.bf16.mxu0 0
        %3975 = vmatmul.mubr.bf16.gmra.mrb[0].mxu0 %v3720
        %v3976 = vpop.f32.mrb[0].mxu0
        %v3977 = vadd.f32 %v3765, %v3976
        %v3978 = vpop.f32.mrb[0].mxu0
        %v3979 = vadd.f32 %v3769, %v3978
        %v3980 = vpop.f32.mrb[0].mxu0
        %v3981 = vadd.f32 %v3765, %v3980
        %v3982 = vpop.f32.mrb[0].mxu0
        %v3983 = vadd.f32 %v3769, %v3982
        %3984 = vmatprep.mubr.bf16.mxu0 0
        %3985 = vmatmul.mubr.bf16.gmra.mrb[0].mxu0 %v3721
        %v3986 = vpop.f32.mrb[0].mxu0
        %v3987 = vadd.f32 %v3765, %v3986
        %v3988 = vpop.f32.mrb[0].mxu0
        %v3989 = vadd.f32 %v3769, %v3988
        %v3990 = vpop.f32.mrb[0].mxu0
        %v3991 = vadd.f32 %v3765, %v3990
        %v3992 = vpop.f32.mrb[0].mxu0
        %v3993 = vadd.f32 %v3769, %v3992
        %3994 = vmatprep.mubr.bf16.mxu0 0
        %3995 = vmatmul.mubr.bf16.gmra.mrb[0].mxu0 %v3722
        %v3996 = vpop.f32.mrb[0].mxu0
        %v3997 = vadd.f32 %v3765, %v3996
        %v3998 = vpop.f32.mrb[0].mxu0
        %v3999 = vadd.f32 %v3769, %v3998
        %v4000 = vpop.f32.mrb[0].mxu0
        %v4001 = vadd.f32 %v3765, %v4000
        %v4002 = vpop.f32.mrb[0].mxu0
        %v4003 = vadd.f32 %v3769, %v4002
        %4004 = vmatprep.mubr.bf16.mxu0 0
        %4005 = vmatmul.mubr.bf16.gmra.mrb[0].mxu0 %v3723
        %v4006 = vpop.f32.mrb[0].mxu0
        %v4007 = vadd.f32 %v3765, %v4006
        %v4008 = vpop.f32.mrb[0].mxu0
        %v4009 = vadd.f32 %v3769, %v4008
        %v4010 = vpop.f32.mrb[0].mxu0
        %v4011 = vadd.f32 %v3765, %v4010
        %v4012 = vpop.f32.mrb[0].mxu0
        %v4013 = vadd.f32 %v3769, %v4012
        %4014 = vmatprep.mubr.bf16.mxu0 0
        %4015 = vmatmul.mubr.bf16.gmra.mrb[0].mxu0 %v3724
        %v4016 = vpop.f32.mrb[0].mxu0
        %v4017 = vadd.f32 %v3765, %v4016
        %v4018 = vpop.f32.mrb[0].mxu0
        %v4019 = vadd.f32 %v3769, %v4018
        %v4020 = vpop.f32.mrb[0].mxu0
        %v4021 = vadd.f32 %v3765, %v4020
        %v4022 = vpop.f32.mrb[0].mxu0
        %v4023 = vadd.f32 %v3769, %v4022
        %4024 = vmatprep.mubr.bf16.mxu0 0
        %4025 = vmatmul.mubr.bf16.gmra.mrb[0].mxu0 %v3725
        %v4026 = vpop.f32.mrb[0].mxu0
        %v4027 = vadd.f32 %v3765, %v4026
        %v4028 = vpop.f32.mrb[0].mxu0
        %v4029 = vadd.f32 %v3769, %v4028
        %v4030 = vpop.f32.mrb[0].mxu0
        %v4031 = vadd.f32 %v3765, %v4030
        %v4032 = vpop.f32.mrb[0].mxu0
        %v4033 = vadd.f32 %v3769, %v4032
        %4034 = vmatprep.mubr.bf16.mxu0 0
        %4035 = vmatmul.mubr.bf16.gmra.mrb[0].mxu0 %v3726
        %v4036 = vpop.f32.mrb[0].mxu0
        %v4037 = vadd.f32 %v3765, %v4036
        %v4038 = vpop.f32.mrb[0].mxu0
        %v4039 = vadd.f32 %v3769, %v4038
        %v4040 = vpop.f32.mrb[0].mxu0
        %v4041 = vadd.f32 %v3765, %v4040
        %v4042 = vpop.f32.mrb[0].mxu0
        %v4043 = vadd.f32 %v3769, %v4042
        %4044 = vmatprep.mubr.bf16.mxu0 0
        %4045 = vmatmul.mubr.bf16.gmra.mrb[0].mxu0 %v3727
        %v4046 = vpop.f32.mrb[0].mxu0
        %v4047 = vadd.f32 %v3765, %v4046
        %v4048 = vpop.f32.mrb[0].mxu0
        %v4049 = vadd.f32 %v3769, %v4048
        %v4050 = vpop.f32.mrb[0].mxu0
        %v4051 = vadd.f32 %v3765, %v4050
        %v4052 = vpop.f32.mrb[0].mxu0
        %v4053 = vadd.f32 %v3769, %v4052
        %4054 = vdwg.mxu0
        %4055 = vmatprep.subr.bf16.mxu0 %v3881
        %4056 = vmatpush1.bf16.msra.mxu0 %v3880
        %4057 = vmatprep.subr.bf16.mxu0 %v3885
        %4058 = vmatpush1.bf16.msra.mxu0 %v3884
        %4059 = vmatprep.subr.bf16.mxu0 %v3889
        %4060 = vmatpush1.bf16.msra.mxu0 %v3888
        %4061 = vmatprep.subr.bf16.mxu0 %v3893
        %4062 = vmatpush1.bf16.msra.mxu0 %v3892
        %4063 = vmatprep.subr.bf16.mxu0 %v3897
        %4064 = vmatpush1.bf16.msra.mxu0 %v3896
        %4065 = vmatprep.subr.bf16.mxu0 %v3901
        %4066 = vmatpush1.bf16.msra.mxu0 %v3900
        %4067 = vmatprep.subr.bf16.mxu0 %v3905
        %4068 = vmatpush1.bf16.msra.mxu0 %v3904
        %4069 = vmatprep.subr.bf16.mxu0 %v3909
        %4070 = vmatpush1.bf16.msra.mxu0 %v3908
        %4071 = vmatprep.subr.bf16.mxu0 0
        %4072 = vmatpush1.bf16.msra.mxu0 0
        %4073 = vmatprep.subr.bf16.mxu0 0
        %4074 = vmatpush1.bf16.msra.mxu0 0
        %4075 = vmatprep.subr.bf16.mxu0 0
        %4076 = vmatpush1.bf16.msra.mxu0 0
        %4077 = vmatprep.subr.bf16.mxu0 0
        %4078 = vmatpush1.bf16.msra.mxu0 0
        %4079 = vmatprep.subr.bf16.mxu0 0
        %4080 = vmatpush1.bf16.msra.mxu0 0
        %4081 = vmatprep.subr.bf16.mxu0 0
        %4082 = vmatpush1.bf16.msra.mxu0 0
        %4083 = vmatprep.subr.bf16.mxu0 0
        %4084 = vmatpush1.bf16.msra.mxu0 0
        %4085 = vmatprep.subr.bf16.mxu0 0
        %4086 = vmatpush1.bf16.msra.mxu0 0
        %4087 = vmatprep.mubr.bf16.mxu0 0
        %4088 = vmatmul.mubr.bf16.gmra.mrb[0].mxu0 %v3720
        %v4089 = vpop.f32.mrb[0].mxu0
        %v4090 = vadd.f32 %v3773, %v4089
        %v4091 = vpop.f32.mrb[0].mxu0
        %v4092 = vadd.f32 %v3777, %v4091
        %v4093 = vpop.f32.mrb[0].mxu0
        %v4094 = vadd.f32 %v3773, %v4093
        %v4095 = vpop.f32.mrb[0].mxu0
        %v4096 = vadd.f32 %v3777, %v4095
        %4097 = vmatprep.mubr.bf16.mxu0 0
        %4098 = vmatmul.mubr.bf16.gmra.mrb[0].mxu0 %v3721
        %v4099 = vpop.f32.mrb[0].mxu0
        %v4100 = vadd.f32 %v3773, %v4099
        %v4101 = vpop.f32.mrb[0].mxu0
        %v4102 = vadd.f32 %v3777, %v4101
        %v4103 = vpop.f32.mrb[0].mxu0
        %v4104 = vadd.f32 %v3773, %v4103
        %v4105 = vpop.f32.mrb[0].mxu0
        %v4106 = vadd.f32 %v3777, %v4105
        %4107 = vmatprep.mubr.bf16.mxu0 0
        %4108 = vmatmul.mubr.bf16.gmra.mrb[0].mxu0 %v3722
        %v4109 = vpop.f32.mrb[0].mxu0
        %v4110 = vadd.f32 %v3773, %v4109
        %v4111 = vpop.f32.mrb[0].mxu0
        %v4112 = vadd.f32 %v3777, %v4111
        %v4113 = vpop.f32.mrb[0].mxu0
        %v4114 = vadd.f32 %v3773, %v4113
        %v4115 = vpop.f32.mrb[0].mxu0
        %v4116 = vadd.f32 %v3777, %v4115
        %4117 = vmatprep.mubr.bf16.mxu0 0
        %4118 = vmatmul.mubr.bf16.gmra.mrb[0].mxu0 %v3723
        %v4119 = vpop.f32.mrb[0].mxu0
        %v4120 = vadd.f32 %v3773, %v4119
        %v4121 = vpop.f32.mrb[0].mxu0
        %v4122 = vadd.f32 %v3777, %v4121
        %v4123 = vpop.f32.mrb[0].mxu0
        %v4124 = vadd.f32 %v3773, %v4123
        %v4125 = vpop.f32.mrb[0].mxu0
        %v4126 = vadd.f32 %v3777, %v4125
        %4127 = vmatprep.mubr.bf16.mxu0 0
        %4128 = vmatmul.mubr.bf16.gmra.mrb[0].mxu0 %v3724
        %v4129 = vpop.f32.mrb[0].mxu0
        %v4130 = vadd.f32 %v3773, %v4129
        %v4131 = vpop.f32.mrb[0].mxu0
        %v4132 = vadd.f32 %v3777, %v4131
        %v4133 = vpop.f32.mrb[0].mxu0
        %v4134 = vadd.f32 %v3773, %v4133
        %v4135 = vpop.f32.mrb[0].mxu0
        %v4136 = vadd.f32 %v3777, %v4135
        %4137 = vmatprep.mubr.bf16.mxu0 0
        %4138 = vmatmul.mubr.bf16.gmra.mrb[0].mxu0 %v3725
        %v4139 = vpop.f32.mrb[0].mxu0
        %v4140 = vadd.f32 %v3773, %v4139
        %v4141 = vpop.f32.mrb[0].mxu0
        %v4142 = vadd.f32 %v3777, %v4141
        %v4143 = vpop.f32.mrb[0].mxu0
        %v4144 = vadd.f32 %v3773, %v4143
        %v4145 = vpop.f32.mrb[0].mxu0
        %v4146 = vadd.f32 %v3777, %v4145
        %4147 = vmatprep.mubr.bf16.mxu0 0
        %4148 = vmatmul.mubr.bf16.gmra.mrb[0].mxu0 %v3726
        %v4149 = vpop.f32.mrb[0].mxu0
        %v4150 = vadd.f32 %v3773, %v4149
        %v4151 = vpop.f32.mrb[0].mxu0
        %v4152 = vadd.f32 %v3777, %v4151
        %v4153 = vpop.f32.mrb[0].mxu0
        %v4154 = vadd.f32 %v3773, %v4153
        %v4155 = vpop.f32.mrb[0].mxu0
        %v4156 = vadd.f32 %v3777, %v4155
        %4157 = vmatprep.mubr.bf16.mxu0 0
        %4158 = vmatmul.mubr.bf16.gmra.mrb[0].mxu0 %v3727
        %v4159 = vpop.f32.mrb[0].mxu0
        %v4160 = vadd.f32 %v3773, %v4159
        %v4161 = vpop.f32.mrb[0].mxu0
        %v4162 = vadd.f32 %v3777, %v4161
        %v4163 = vpop.f32.mrb[0].mxu0
        %v4164 = vadd.f32 %v3773, %v4163
        %v4165 = vpop.f32.mrb[0].mxu0
        %v4166 = vadd.f32 %v3777, %v4165
        %4167 = vdwg.mxu0
        %v4168 = vmax.f32 %v3977, 0.0
        %v4169 = vmax.f32 %v3979, 0.0
        %v4170 = vmax.f32 %v4090, 0.0
        %v4171 = vmax.f32 %v4092, 0.0
        %v4172 = vmax.f32 %v3981, 0.0
        %v4173 = vmax.f32 %v3983, 0.0
        %v4174 = vmax.f32 %v4094, 0.0
        %v4175 = vmax.f32 %v4096, 0.0
        %v4176 = vmax.f32 %v3987, 0.0
        %v4177 = vmax.f32 %v3989, 0.0
        %v4178 = vmax.f32 %v4100, 0.0
        %v4179 = vmax.f32 %v4102, 0.0
        %v4180 = vmax.f32 %v3991, 0.0
        %v4181 = vmax.f32 %v3993, 0.0
        %v4182 = vmax.f32 %v4104, 0.0
        %v4183 = vmax.f32 %v4106, 0.0
        %v4184 = vmax.f32 %v3997, 0.0
        %v4185 = vmax.f32 %v3999, 0.0
        %v4186 = vmax.f32 %v4110, 0.0
        %v4187 = vmax.f32 %v4112, 0.0
        %v4188 = vmax.f32 %v4001, 0.0
        %v4189 = vmax.f32 %v4003, 0.0
        %v4190 = vmax.f32 %v4114, 0.0
        %v4191 = vmax.f32 %v4116, 0.0
        %v4192 = vmax.f32 %v4007, 0.0
        %v4193 = vmax.f32 %v4009, 0.0
        %v4194 = vmax.f32 %v4120, 0.0
        %v4195 = vmax.f32 %v4122, 0.0
        %v4196 = vmax.f32 %v4011, 0.0
        %v4197 = vmax.f32 %v4013, 0.0
        %v4198 = vmax.f32 %v4124, 0.0
        %v4199 = vmax.f32 %v4126, 0.0
        %v4200 = vmax.f32 %v4017, 0.0
        %v4201 = vmax.f32 %v4019, 0.0
        %v4202 = vmax.f32 %v4130, 0.0
        %v4203 = vmax.f32 %v4132, 0.0
        %v4204 = vmax.f32 %v4021, 0.0
        %v4205 = vmax.f32 %v4023, 0.0
        %v4206 = vmax.f32 %v4134, 0.0
        %v4207 = vmax.f32 %v4136, 0.0
        %v4208 = vmax.f32 %v4027, 0.0
        %v4209 = vmax.f32 %v4029, 0.0
        %v4210 = vmax.f32 %v4140, 0.0
        %v4211 = vmax.f32 %v4142, 0.0
        %v4212 = vmax.f32 %v4031, 0.0
        %v4213 = vmax.f32 %v4033, 0.0
        %v4214 = vmax.f32 %v4144, 0.0
        %v4215 = vmax.f32 %v4146, 0.0
        %v4216 = vmax.f32 %v4037, 0.0
        %v4217 = vmax.f32 %v4039, 0.0
        %v4218 = vmax.f32 %v4150, 0.0
        %v4219 = vmax.f32 %v4152, 0.0
        %v4220 = vmax.f32 %v4041, 0.0
        %v4221 = vmax.f32 %v4043, 0.0
        %v4222 = vmax.f32 %v4154, 0.0
        %v4223 = vmax.f32 %v4156, 0.0
        %v4224 = vmax.f32 %v4047, 0.0
        %v4225 = vmax.f32 %v4049, 0.0
        %v4226 = vmax.f32 %v4160, 0.0
        %v4227 = vmax.f32 %v4162, 0.0
        %v4228 = vmax.f32 %v4051, 0.0
        %v4229 = vmax.f32 %v4053, 0.0
        %v4230 = vmax.f32 %v4164, 0.0
        %v4231 = vmax.f32 %v4166, 0.0
        %v4232 = vpack.c.bf16 %v4172, %v4168
        %v4233 = vpack.c.bf16 %v4173, %v4169
        %v4234 = vpack.c.bf16 %v4174, %v4170
        %v4235 = vpack.c.bf16 %v4175, %v4171
        %v4236 = vpack.c.bf16 %v4180, %v4176
        %v4237 = vpack.c.bf16 %v4181, %v4177
        %v4238 = vpack.c.bf16 %v4182, %v4178
        %v4239 = vpack.c.bf16 %v4183, %v4179
        %v4240 = vpack.c.bf16 %v4188, %v4184
        %v4241 = vpack.c.bf16 %v4189, %v4185
        %v4242 = vpack.c.bf16 %v4190, %v4186
        %v4243 = vpack.c.bf16 %v4191, %v4187
        %v4244 = vpack.c.bf16 %v4196, %v4192
        %v4245 = vpack.c.bf16 %v4197, %v4193
        %v4246 = vpack.c.bf16 %v4198, %v4194
        %v4247 = vpack.c.bf16 %v4199, %v4195
        %v4248 = vpack.c.bf16 %v4204, %v4200
        %v4249 = vpack.c.bf16 %v4205, %v4201
        %v4250 = vpack.c.bf16 %v4206, %v4202
        %v4251 = vpack.c.bf16 %v4207, %v4203
        %v4252 = vpack.c.bf16 %v4212, %v4208
        %v4253 = vpack.c.bf16 %v4213, %v4209
        %v4254 = vpack.c.bf16 %v4214, %v4210
        %v4255 = vpack.c.bf16 %v4215, %v4211
        %v4256 = vpack.c.bf16 %v4220, %v4216
        %v4257 = vpack.c.bf16 %v4221, %v4217
        %v4258 = vpack.c.bf16 %v4222, %v4218
        %v4259 = vpack.c.bf16 %v4223, %v4219
        %v4260 = vpack.c.bf16 %v4228, %v4224
        %v4261 = vpack.c.bf16 %v4229, %v4225
        %v4262 = vpack.c.bf16 %v4230, %v4226
        %v4263 = vpack.c.bf16 %v4231, %v4227
        %v4264 = vld [vmem:[#allocation10] sm:$0xf]
        %v4265 = vld [vmem:[#allocation10 + $0x4] sm:$0xf]
        %v4266 = vld [vmem:[#allocation10 + $0x8] sm:$0xf]
        %v4267 = vld [vmem:[#allocation10 + $0xc] sm:$0xf]
        %v4268 = vld [vmem:[#allocation10 + $0x10] sm:$0xf]
        %v4269 = vld [vmem:[#allocation10 + $0x14] sm:$0xf]
        %v4270 = vld [vmem:[#allocation10 + $0x18] sm:$0xf]
        %v4271 = vld [vmem:[#allocation10 + $0x1c] sm:$0xf]
        %v4272 = vld [vmem:[#allocation10 + $0x20] sm:$0xf]
        %v4273 = vld [vmem:[#allocation10 + $0x24] sm:$0xf]
        %v4274 = vld [vmem:[#allocation10 + $0x28] sm:$0xf]
        %v4275 = vld [vmem:[#allocation10 + $0x2c] sm:$0xf]
        %v4276 = vld [vmem:[#allocation10 + $0x30] sm:$0xf]
        %v4277 = vld [vmem:[#allocation10 + $0x34] sm:$0xf]
        %v4278 = vld [vmem:[#allocation10 + $0x38] sm:$0xf]
        %v4279 = vld [vmem:[#allocation10 + $0x3c] sm:$0xf]
        %v4280 = vld [vmem:[#allocation10 + $0x40] sm:$0xf]
        %v4281 = vld [vmem:[#allocation10 + $0x44] sm:$0xf]
        %v4282 = vld [vmem:[#allocation10 + $0x48] sm:$0xf]
        %v4283 = vld [vmem:[#allocation10 + $0x4c] sm:$0xf]
        %v4284 = vld [vmem:[#allocation10 + $0x50] sm:$0xf]
        %v4285 = vld [vmem:[#allocation10 + $0x54] sm:$0xf]
        %v4286 = vld [vmem:[#allocation10 + $0x58] sm:$0xf]
        %v4287 = vld [vmem:[#allocation10 + $0x5c] sm:$0xf]
        %v4288 = vld [vmem:[#allocation10 + $0x60] sm:$0xf]
        %v4289 = vld [vmem:[#allocation10 + $0x64] sm:$0xf]
        %v4290 = vld [vmem:[#allocation10 + $0x68] sm:$0xf]
        %v4291 = vld [vmem:[#allocation10 + $0x6c] sm:$0xf]
        %v4292 = vld [vmem:[#allocation10 + $0x70] sm:$0xf]
        %v4293 = vld [vmem:[#allocation10 + $0x74] sm:$0xf]
        %v4294 = vld [vmem:[#allocation10 + $0x78] sm:$0xf]
        %v4295 = vld [vmem:[#allocation10 + $0x7c] sm:$0xf]
        %v4296 = vld [vmem:[#allocation10 + $0x80] sm:$0xf]
        %v4297 = vld [vmem:[#allocation10 + $0x84] sm:$0xf]
        %v4298 = vld [vmem:[#allocation10 + $0x88] sm:$0xf]
        %v4299 = vld [vmem:[#allocation10 + $0x8c] sm:$0xf]
        %v4300 = vld [vmem:[#allocation10 + $0x90] sm:$0xf]
        %v4301 = vld [vmem:[#allocation10 + $0x94] sm:$0xf]
        %v4302 = vld [vmem:[#allocation10 + $0x98] sm:$0xf]
        %v4303 = vld [vmem:[#allocation10 + $0x9c] sm:$0xf]
        %v4304 = vld [vmem:[#allocation10 + $0xa0] sm:$0xf]
        %v4305 = vld [vmem:[#allocation10 + $0xa4] sm:$0xf]
        %v4306 = vld [vmem:[#allocation10 + $0xa8] sm:$0xf]
        %v4307 = vld [vmem:[#allocation10 + $0xac] sm:$0xf]
        %v4308 = vld [vmem:[#allocation10 + $0xb0] sm:$0xf]
        %v4309 = vld [vmem:[#allocation10 + $0xb4] sm:$0xf]
        %v4310 = vld [vmem:[#allocation10 + $0xb8] sm:$0xf]
        %v4311 = vld [vmem:[#allocation10 + $0xbc] sm:$0xf]
        %v4312 = vld [vmem:[#allocation10 + $0xc0] sm:$0xf]
        %v4313 = vld [vmem:[#allocation10 + $0xc4] sm:$0xf]
        %v4314 = vld [vmem:[#allocation10 + $0xc8] sm:$0xf]
        %v4315 = vld [vmem:[#allocation10 + $0xcc] sm:$0xf]
        %v4316 = vld [vmem:[#allocation10 + $0xd0] sm:$0xf]
        %v4317 = vld [vmem:[#allocation10 + $0xd4] sm:$0xf]
        %v4318 = vld [vmem:[#allocation10 + $0xd8] sm:$0xf]
        %v4319 = vld [vmem:[#allocation10 + $0xdc] sm:$0xf]
        %v4320 = vld [vmem:[#allocation10 + $0xe0] sm:$0xf]
        %v4321 = vld [vmem:[#allocation10 + $0xe4] sm:$0xf]
        %v4322 = vld [vmem:[#allocation10 + $0xe8] sm:$0xf]
        %v4323 = vld [vmem:[#allocation10 + $0xec] sm:$0xf]
        %v4324 = vld [vmem:[#allocation10 + $0xf0] sm:$0xf]
        %v4325 = vld [vmem:[#allocation10 + $0xf4] sm:$0xf]
        %v4326 = vld [vmem:[#allocation10 + $0xf8] sm:$0xf]
        %v4327 = vld [vmem:[#allocation10 + $0xfc] sm:$0xf]
        %v4328 = vld [vmem:[%s11] sm:$0x1]
        %v4330 = vlaneseq
        %v4331 = vshrl.u32 %v4330, 7
        %v4332 = vsub.s32 0, %v4331
        %v4333 = vrot.slane %v4328, %v4332
        %v4399 = vunpack.c.l.b16 %v4264
        %v4400 = vunpack.c.l.b16 %v4265
        %v4401 = vunpack.c.l.b16 %v4266
        %v4402 = vunpack.c.l.b16 %v4267
        %v4403 = vunpack.c.l.b16 %v4268
        %v4404 = vunpack.c.l.b16 %v4269
        %v4405 = vunpack.c.l.b16 %v4270
        %v4406 = vunpack.c.l.b16 %v4271
        %v4407 = vunpack.c.l.b16 %v4272
        %v4408 = vunpack.c.l.b16 %v4273
        %v4409 = vunpack.c.l.b16 %v4274
        %v4410 = vunpack.c.l.b16 %v4275
        %v4411 = vunpack.c.l.b16 %v4276
        %v4412 = vunpack.c.l.b16 %v4277
        %v4413 = vunpack.c.l.b16 %v4278
        %v4414 = vunpack.c.l.b16 %v4279
        %v4415 = vunpack.c.l.b16 %v4280
        %v4416 = vunpack.c.l.b16 %v4281
        %v4417 = vunpack.c.l.b16 %v4282
        %v4418 = vunpack.c.l.b16 %v4283
        %v4419 = vunpack.c.l.b16 %v4284
        %v4420 = vunpack.c.l.b16 %v4285
        %v4421 = vunpack.c.l.b16 %v4286
        %v4422 = vunpack.c.l.b16 %v4287
        %v4423 = vunpack.c.l.b16 %v4288
        %v4424 = vunpack.c.l.b16 %v4289
        %v4425 = vunpack.c.l.b16 %v4290
        %v4426 = vunpack.c.l.b16 %v4291
        %v4427 = vunpack.c.l.b16 %v4292
        %v4428 = vunpack.c.l.b16 %v4293
        %v4429 = vunpack.c.l.b16 %v4294
        %v4430 = vunpack.c.l.b16 %v4295
        %v4431 = vunpack.c.l.b16 %v4296
        %v4432 = vunpack.c.l.b16 %v4297
        %v4433 = vunpack.c.l.b16 %v4298
        %v4434 = vunpack.c.l.b16 %v4299
        %v4435 = vunpack.c.l.b16 %v4300
        %v4436 = vunpack.c.l.b16 %v4301
        %v4437 = vunpack.c.l.b16 %v4302
        %v4438 = vunpack.c.l.b16 %v4303
        %v4439 = vunpack.c.l.b16 %v4304
        %v4440 = vunpack.c.l.b16 %v4305
        %v4441 = vunpack.c.l.b16 %v4306
        %v4442 = vunpack.c.l.b16 %v4307
        %v4443 = vunpack.c.l.b16 %v4308
        %v4444 = vunpack.c.l.b16 %v4309
        %v4445 = vunpack.c.l.b16 %v4310
        %v4446 = vunpack.c.l.b16 %v4311
        %v4447 = vunpack.c.l.b16 %v4312
        %v4448 = vunpack.c.l.b16 %v4313
        %v4449 = vunpack.c.l.b16 %v4314
        %v4450 = vunpack.c.l.b16 %v4315
        %v4451 = vunpack.c.l.b16 %v4316
        %v4452 = vunpack.c.l.b16 %v4317
        %v4453 = vunpack.c.l.b16 %v4318
        %v4454 = vunpack.c.l.b16 %v4319
        %v4455 = vunpack.c.l.b16 %v4320
        %v4456 = vunpack.c.l.b16 %v4321
        %v4457 = vunpack.c.l.b16 %v4322
        %v4458 = vunpack.c.l.b16 %v4323
        %v4459 = vunpack.c.l.b16 %v4324
        %v4460 = vunpack.c.l.b16 %v4325
        %v4461 = vunpack.c.l.b16 %v4326
        %v4462 = vunpack.c.l.b16 %v4327
        %v4463 = vpack.c.b16 %v4400, %v4399
        %v4464 = vpack.c.b16 %v4402, %v4401
        %v4465 = vpack.c.b16 %v4404, %v4403
        %v4466 = vpack.c.b16 %v4406, %v4405
        %v4467 = vpack.c.b16 %v4408, %v4407
        %v4468 = vpack.c.b16 %v4410, %v4409
        %v4469 = vpack.c.b16 %v4412, %v4411
        %v4470 = vpack.c.b16 %v4414, %v4413
        %v4471 = vpack.c.b16 %v4416, %v4415
        %v4472 = vpack.c.b16 %v4418, %v4417
        %v4473 = vpack.c.b16 %v4420, %v4419
        %v4474 = vpack.c.b16 %v4422, %v4421
        %v4475 = vpack.c.b16 %v4424, %v4423
        %v4476 = vpack.c.b16 %v4426, %v4425
        %v4477 = vpack.c.b16 %v4428, %v4427
        %v4478 = vpack.c.b16 %v4430, %v4429
        %v4479 = vpack.c.b16 %v4432, %v4431
        %v4480 = vpack.c.b16 %v4434, %v4433
        %v4481 = vpack.c.b16 %v4436, %v4435
        %v4482 = vpack.c.b16 %v4438, %v4437
        %v4483 = vpack.c.b16 %v4440, %v4439
        %v4484 = vpack.c.b16 %v4442, %v4441
        %v4485 = vpack.c.b16 %v4444, %v4443
        %v4486 = vpack.c.b16 %v4446, %v4445
        %v4487 = vpack.c.b16 %v4448, %v4447
        %v4488 = vpack.c.b16 %v4450, %v4449
        %v4489 = vpack.c.b16 %v4452, %v4451
        %v4490 = vpack.c.b16 %v4454, %v4453
        %v4491 = vpack.c.b16 %v4456, %v4455
        %v4492 = vpack.c.b16 %v4458, %v4457
        %v4493 = vpack.c.b16 %v4460, %v4459
        %v4494 = vpack.c.b16 %v4462, %v4461
        %4527 = vmatprep.subr.bf16.mxu0 0
        %4528 = vmatpush1.bf16.msra.mxu0 %v4463
        %4529 = vmatprep.subr.bf16.mxu0 0
        %4530 = vmatpush1.bf16.msra.mxu0 %v4464
        %4531 = vmatprep.subr.bf16.mxu0 0
        %4532 = vmatpush1.bf16.msra.mxu0 %v4465
        %4533 = vmatprep.subr.bf16.mxu0 0
        %4534 = vmatpush1.bf16.msra.mxu0 %v4466
        %4535 = vmatprep.subr.bf16.mxu0 0
        %4536 = vmatpush1.bf16.msra.mxu0 %v4467
        %4537 = vmatprep.subr.bf16.mxu0 0
        %4538 = vmatpush1.bf16.msra.mxu0 %v4468
        %4539 = vmatprep.subr.bf16.mxu0 0
        %4540 = vmatpush1.bf16.msra.mxu0 %v4469
        %4541 = vmatprep.subr.bf16.mxu0 0
        %4542 = vmatpush1.bf16.msra.mxu0 %v4470
        %4543 = vmatprep.subr.bf16.mxu0 0
        %4544 = vmatpush1.bf16.msra.mxu0 %v4471
        %4545 = vmatprep.subr.bf16.mxu0 0
        %4546 = vmatpush1.bf16.msra.mxu0 %v4472
        %4547 = vmatprep.subr.bf16.mxu0 0
        %4548 = vmatpush1.bf16.msra.mxu0 %v4473
        %4549 = vmatprep.subr.bf16.mxu0 0
        %4550 = vmatpush1.bf16.msra.mxu0 %v4474
        %4551 = vmatprep.subr.bf16.mxu0 0
        %4552 = vmatpush1.bf16.msra.mxu0 %v4475
        %4553 = vmatprep.subr.bf16.mxu0 0
        %4554 = vmatpush1.bf16.msra.mxu0 %v4476
        %4555 = vmatprep.subr.bf16.mxu0 0
        %4556 = vmatpush1.bf16.msra.mxu0 %v4477
        %4557 = vmatprep.subr.bf16.mxu0 0
        %4558 = vmatpush1.bf16.msra.mxu0 %v4478
        %4559 = vmatprep.mubr.bf16.mxu0 %v4233
        %4560 = vmatmul.mubr.bf16.gmra.mrb[0].mxu0 %v4232
        %v4561 = vpop.f32.mrb[0].mxu0
        %v4562 = vadd.f32 %v4333, %v4561
        %v4563 = vpop.f32.mrb[0].mxu0
        %v4564 = vpop.f32.mrb[0].mxu0
        %v4565 = vadd.f32 %v4333, %v4564
        %v4566 = vpop.f32.mrb[0].mxu0
        %4567 = vmatprep.mubr.bf16.mxu0 %v4237
        %4568 = vmatmul.mubr.bf16.gmra.mrb[0].mxu0 %v4236
        %v4569 = vpop.f32.mrb[0].mxu0
        %v4570 = vadd.f32 %v4333, %v4569
        %v4571 = vpop.f32.mrb[0].mxu0
        %v4572 = vpop.f32.mrb[0].mxu0
        %v4573 = vadd.f32 %v4333, %v4572
        %v4574 = vpop.f32.mrb[0].mxu0
        %4575 = vmatprep.mubr.bf16.mxu0 %v4241
        %4576 = vmatmul.mubr.bf16.gmra.mrb[0].mxu0 %v4240
        %v4577 = vpop.f32.mrb[0].mxu0
        %v4578 = vadd.f32 %v4333, %v4577
        %v4579 = vpop.f32.mrb[0].mxu0
        %v4580 = vpop.f32.mrb[0].mxu0
        %v4581 = vadd.f32 %v4333, %v4580
        %v4582 = vpop.f32.mrb[0].mxu0
        %4583 = vmatprep.mubr.bf16.mxu0 %v4245
        %4584 = vmatmul.mubr.bf16.gmra.mrb[0].mxu0 %v4244
        %v4585 = vpop.f32.mrb[0].mxu0
        %v4586 = vadd.f32 %v4333, %v4585
        %v4587 = vpop.f32.mrb[0].mxu0
        %v4588 = vpop.f32.mrb[0].mxu0
        %v4589 = vadd.f32 %v4333, %v4588
        %v4590 = vpop.f32.mrb[0].mxu0
        %4591 = vmatprep.mubr.bf16.mxu0 %v4249
        %4592 = vmatmul.mubr.bf16.gmra.mrb[0].mxu0 %v4248
        %v4593 = vpop.f32.mrb[0].mxu0
        %v4594 = vadd.f32 %v4333, %v4593
        %v4595 = vpop.f32.mrb[0].mxu0
        %v4596 = vpop.f32.mrb[0].mxu0
        %v4597 = vadd.f32 %v4333, %v4596
        %v4598 = vpop.f32.mrb[0].mxu0
        %4599 = vmatprep.mubr.bf16.mxu0 %v4253
        %4600 = vmatmul.mubr.bf16.gmra.mrb[0].mxu0 %v4252
        %v4601 = vpop.f32.mrb[0].mxu0
        %v4602 = vadd.f32 %v4333, %v4601
        %v4603 = vpop.f32.mrb[0].mxu0
        %v4604 = vpop.f32.mrb[0].mxu0
        %v4605 = vadd.f32 %v4333, %v4604
        %v4606 = vpop.f32.mrb[0].mxu0
        %4607 = vmatprep.mubr.bf16.mxu0 %v4257
        %4608 = vmatmul.mubr.bf16.gmra.mrb[0].mxu0 %v4256
        %v4609 = vpop.f32.mrb[0].mxu0
        %v4610 = vadd.f32 %v4333, %v4609
        %v4611 = vpop.f32.mrb[0].mxu0
        %v4612 = vpop.f32.mrb[0].mxu0
        %v4613 = vadd.f32 %v4333, %v4612
        %v4614 = vpop.f32.mrb[0].mxu0
        %4615 = vmatprep.mubr.bf16.mxu0 %v4261
        %4616 = vmatmul.mubr.bf16.gmra.mrb[0].mxu0 %v4260
        %v4617 = vpop.f32.mrb[0].mxu0
        %v4618 = vadd.f32 %v4333, %v4617
        %v4619 = vpop.f32.mrb[0].mxu0
        %v4620 = vpop.f32.mrb[0].mxu0
        %v4621 = vadd.f32 %v4333, %v4620
        %v4622 = vpop.f32.mrb[0].mxu0
        %4623 = vdwg.mxu0
        %4624 = vmatprep.subr.bf16.mxu0 0
        %4625 = vmatpush1.bf16.msra.mxu0 %v4479
        %4626 = vmatprep.subr.bf16.mxu0 0
        %4627 = vmatpush1.bf16.msra.mxu0 %v4480
        %4628 = vmatprep.subr.bf16.mxu0 0
        %4629 = vmatpush1.bf16.msra.mxu0 %v4481
        %4630 = vmatprep.subr.bf16.mxu0 0
        %4631 = vmatpush1.bf16.msra.mxu0 %v4482
        %4632 = vmatprep.subr.bf16.mxu0 0
        %4633 = vmatpush1.bf16.msra.mxu0 %v4483
        %4634 = vmatprep.subr.bf16.mxu0 0
        %4635 = vmatpush1.bf16.msra.mxu0 %v4484
        %4636 = vmatprep.subr.bf16.mxu0 0
        %4637 = vmatpush1.bf16.msra.mxu0 %v4485
        %4638 = vmatprep.subr.bf16.mxu0 0
        %4639 = vmatpush1.bf16.msra.mxu0 %v4486
        %4640 = vmatprep.subr.bf16.mxu0 0
        %4641 = vmatpush1.bf16.msra.mxu0 %v4487
        %4642 = vmatprep.subr.bf16.mxu0 0
        %4643 = vmatpush1.bf16.msra.mxu0 %v4488
        %4644 = vmatprep.subr.bf16.mxu0 0
        %4645 = vmatpush1.bf16.msra.mxu0 %v4489
        %4646 = vmatprep.subr.bf16.mxu0 0
        %4647 = vmatpush1.bf16.msra.mxu0 %v4490
        %4648 = vmatprep.subr.bf16.mxu0 0
        %4649 = vmatpush1.bf16.msra.mxu0 %v4491
        %4650 = vmatprep.subr.bf16.mxu0 0
        %4651 = vmatpush1.bf16.msra.mxu0 %v4492
        %4652 = vmatprep.subr.bf16.mxu0 0
        %4653 = vmatpush1.bf16.msra.mxu0 %v4493
        %4654 = vmatprep.subr.bf16.mxu0 0
        %4655 = vmatpush1.bf16.msra.mxu0 %v4494
        %4656 = vmatprep.mubr.bf16.mxu0 %v4235
        %4657 = vmatmul.mubr.bf16.gmra.mrb[0].mxu0 %v4234
        %v4658 = vpop.f32.mrb[0].mxu0
        %v4659 = vadd.f32 %v4562, %v4658
        %v4660 = vpop.f32.mrb[0].mxu0
        %v4661 = vpop.f32.mrb[0].mxu0
        %v4662 = vadd.f32 %v4565, %v4661
        %v4663 = vpop.f32.mrb[0].mxu0
        %4664 = vmatprep.mubr.bf16.mxu0 %v4239
        %4665 = vmatmul.mubr.bf16.gmra.mrb[0].mxu0 %v4238
        %v4666 = vpop.f32.mrb[0].mxu0
        %v4667 = vadd.f32 %v4570, %v4666
        %v4668 = vpop.f32.mrb[0].mxu0
        %v4669 = vpop.f32.mrb[0].mxu0
        %v4670 = vadd.f32 %v4573, %v4669
        %v4671 = vpop.f32.mrb[0].mxu0
        %4672 = vmatprep.mubr.bf16.mxu0 %v4243
        %4673 = vmatmul.mubr.bf16.gmra.mrb[0].mxu0 %v4242
        %v4674 = vpop.f32.mrb[0].mxu0
        %v4675 = vadd.f32 %v4578, %v4674
        %v4676 = vpop.f32.mrb[0].mxu0
        %v4677 = vpop.f32.mrb[0].mxu0
        %v4678 = vadd.f32 %v4581, %v4677
        %v4679 = vpop.f32.mrb[0].mxu0
        %4680 = vmatprep.mubr.bf16.mxu0 %v4247
        %4681 = vmatmul.mubr.bf16.gmra.mrb[0].mxu0 %v4246
        %v4682 = vpop.f32.mrb[0].mxu0
        %v4683 = vadd.f32 %v4586, %v4682
        %v4684 = vpop.f32.mrb[0].mxu0
        %v4685 = vpop.f32.mrb[0].mxu0
        %v4686 = vadd.f32 %v4589, %v4685
        %v4687 = vpop.f32.mrb[0].mxu0
        %4688 = vmatprep.mubr.bf16.mxu0 %v4251
        %4689 = vmatmul.mubr.bf16.gmra.mrb[0].mxu0 %v4250
        %v4690 = vpop.f32.mrb[0].mxu0
        %v4691 = vadd.f32 %v4594, %v4690
        %v4692 = vpop.f32.mrb[0].mxu0
        %v4693 = vpop.f32.mrb[0].mxu0
        %v4694 = vadd.f32 %v4597, %v4693
        %v4695 = vpop.f32.mrb[0].mxu0
        %4696 = vmatprep.mubr.bf16.mxu0 %v4255
        %4697 = vmatmul.mubr.bf16.gmra.mrb[0].mxu0 %v4254
        %v4698 = vpop.f32.mrb[0].mxu0
        %v4699 = vadd.f32 %v4602, %v4698
        %v4700 = vpop.f32.mrb[0].mxu0
        %v4701 = vpop.f32.mrb[0].mxu0
        %v4702 = vadd.f32 %v4605, %v4701
        %v4703 = vpop.f32.mrb[0].mxu0
        %4704 = vmatprep.mubr.bf16.mxu0 %v4259
        %4705 = vmatmul.mubr.bf16.gmra.mrb[0].mxu0 %v4258
        %v4706 = vpop.f32.mrb[0].mxu0
        %v4707 = vadd.f32 %v4610, %v4706
        %v4708 = vpop.f32.mrb[0].mxu0
        %v4709 = vpop.f32.mrb[0].mxu0
        %v4710 = vadd.f32 %v4613, %v4709
        %v4711 = vpop.f32.mrb[0].mxu0
        %4712 = vmatprep.mubr.bf16.mxu0 %v4263
        %4713 = vmatmul.mubr.bf16.gmra.mrb[0].mxu0 %v4262
        %v4714 = vpop.f32.mrb[0].mxu0
        %v4715 = vadd.f32 %v4618, %v4714
        %v4716 = vpop.f32.mrb[0].mxu0
        %v4717 = vpop.f32.mrb[0].mxu0
        %v4718 = vadd.f32 %v4621, %v4717
        %v4719 = vpop.f32.mrb[0].mxu0
        %4720 = vdwg.mxu0
        %v4721 = vadd.f32 %v3482, %v4659
        %v4722 = vadd.f32 %v3483, %v4662
        %v4723 = vadd.f32 %v3484, %v4667
        %v4724 = vadd.f32 %v3485, %v4670
        %v4725 = vadd.f32 %v3486, %v4675
        %v4726 = vadd.f32 %v3487, %v4678
        %v4727 = vadd.f32 %v3488, %v4683
        %v4728 = vadd.f32 %v3489, %v4686
        %v4729 = vadd.f32 %v3490, %v4691
        %v4730 = vadd.f32 %v3491, %v4694
        %v4731 = vadd.f32 %v3492, %v4699
        %v4732 = vadd.f32 %v3493, %v4702
        %v4733 = vadd.f32 %v3494, %v4707
        %v4734 = vadd.f32 %v3495, %v4710
        %v4735 = vadd.f32 %v3496, %v4715
        %v4736 = vadd.f32 %v3497, %v4718
        %4737 = vst [vmem:[%s489] sm:$0xff] %v4721
        %4738 = vst [vmem:[%s489 + $0x8] sm:$0xff] %v4722
        %4739 = vst [vmem:[%s489 + $0x10] sm:$0xff] %v4723
        %4740 = vst [vmem:[%s489 + $0x18] sm:$0xff] %v4724
        %4741 = vst [vmem:[%s489 + $0x20] sm:$0xff] %v4725
        %4742 = vst [vmem:[%s489 + $0x28] sm:$0xff] %v4726
        %4743 = vst [vmem:[%s489 + $0x30] sm:$0xff] %v4727
        %4744 = vst [vmem:[%s489 + $0x38] sm:$0xff] %v4728
        %4745 = vst [vmem:[%s489 + $0x40] sm:$0xff] %v4729
        %4746 = vst [vmem:[%s489 + $0x48] sm:$0xff] %v4730
        %4747 = vst [vmem:[%s489 + $0x50] sm:$0xff] %v4731
        %4748 = vst [vmem:[%s489 + $0x58] sm:$0xff] %v4732
        %4749 = vst [vmem:[%s489 + $0x60] sm:$0xff] %v4733
        %4750 = vst [vmem:[%s489 + $0x68] sm:$0xff] %v4734
        %4751 = vst [vmem:[%s489 + $0x70] sm:$0xff] %v4735
        %4752 = vst [vmem:[%s489 + $0x78] sm:$0xff] %v4736
        %s4753 = sand.u32 %s296, 1
        %s4754 = scalar_lea.sflag [#allocation4], %s4753
        %s4755 = sand.u32 %s296, 1
        %s4756 = smul.addr %s4755, 128
        %s4757 = scalar_lea.vmem [#allocation11], %s4756
        // Predicated region
        $region89: #{tpu_custom_call.1} parent=67 // pred_check
          %p4758 = pneg %p306
        $region90: #{tpu_custom_call.1} parent=67 // pred_check_branch
          %4760 = sbr.rel (%p4758) target = $region92
        $region91: #{tpu_custom_call.1} parent=67 // pred_region
          %s4762 = ssub.s32 2048, 2048
          %4763 = vsyncadd %s4754, %s4762
          %s4764 = smul.addr %s31, 16
          %s4765 = smul.addr %s4764, 128
          %s4766 = scalar_lea.hbm %s12, %s4765
          %s4767 = sshll.u32 %s4757, 4
          %s4768 = int_to_ptr.vmem [resolvable:$true] %s4767
          %4773 = dma.vmem_to_hbm [thread:$0]  %s4768, 2048, %s4766, %s4754, 128, 128, 8
        $region92: #{tpu_custom_call.1} parent=67 // pred_fallthru
          _
      $region68: #{tpu_custom_call.1} parent=5 // pred_fallthru
        _
      %p4774 = scmp.le.s32.totalorder 2, %s26
      // Predicated region
      $region93: #{tpu_custom_call.1} parent=5 // pred_check
        %p4775 = pneg %p4774
      $region94: #{tpu_custom_call.1} parent=5 // pred_check_branch
        %4777 = sbr.rel (%p4775) target = $region96
      $region95: #{tpu_custom_call.1} parent=5 // pred_region
        %s4778 = ssub.s32 %s26, 2
        // Predicated region
        $region97: #{tpu_custom_call.1} parent=95 // pred_check
          %p4779 = pneg %p312
        $region98: #{tpu_custom_call.1} parent=95 // pred_check_branch
          %4781 = sbr.rel (%p4779) target = $region100
        $region99: #{tpu_custom_call.1} parent=95 // pred_region
          %s4782 = sand.u32 %s297, 1
          %s4783 = scalar_lea.sflag [#allocation4], %s4782
          %s4784 = sand.u32 %s297, 1
          %s4785 = smul.addr %s4784, 128
          %s4786 = scalar_lea.vmem [#allocation11], %s4785
          %4787 = dma.done %s4783, 2048
        $region100: #{tpu_custom_call.1} parent=95 // pred_fallthru
          _
      $region96: #{tpu_custom_call.1} parent=5 // pred_fallthru
        _
    $region6: #{tpu_custom_call.1} parent=1 // loop_footer
      %s30 = sadd.s32 1, %s26
    $region7: #{tpu_custom_call.1} parent=1 // loop_footer_branch
      %25 = sbr.rel target = $region3
    $region8: #{tpu_custom_call.1} parent=1 // loop_exit
      _
    %4788 = vsyncpa [#allocation3], 1
    %s4789 = scalar_lea.sflag [#allocation3], 1
    %4790 = vsyncpa %s4789, 1
    %4791 = vsyncpa [#allocation6], 1
    %4792 = vsyncpa [#allocation9], 1
    %4793 = vsyncpa [#allocation4], 1
    %s4794 = scalar_lea.sflag [#allocation4], 1
    %4795 = vsyncpa %s4794, 1

</llo_original>
